<compile_context>
chip_gen: v6e
topology: v6e:2x2x1
jax: 0.10.0
libtpu: 0.0.40
codegen_flags: <defaults>
</compile_context>

<pallas_src>
import jax
import jax.numpy as jnp
from jax.experimental import pallas as pl
from jax.experimental.pallas import tpu as pltpu


# ----------------------------------------------------------------------------
# Fused Pallas kernel: 3x (conv-as-matmul + bias + LayerNorm + Sigmoid) + FC.
# ----------------------------------------------------------------------------
def _fused_lenet_kernel(x_ref,
                        a1_ref, a2_ref, a3_ref,
                        ep1_ref, ep23_ref,
                        wf_ref, bf_ref,
                        out_ref):
    """All activations stay in registers/VMEM; only (padded) logits are stored."""

    def conv_ln_sigmoid(h, a_ref, ep_ref, r):
        cb = ep_ref[r + 0:r + 1, :]          # conv bias row   (1, D)
        g = ep_ref[r + 1:r + 2, :]           # LN gamma row    (1, D)
        be = ep_ref[r + 2:r + 3, :]          # LN beta row     (1, D)
        # Conv lowered to a dense NHWC matmul (pad/stride baked into A at init).
        # bf16 operands, f32 accumulation on the MXU; bias epilogue.
        y = jnp.dot(h, a_ref[...], preferred_element_type=jnp.float32) + cb
        # LayerNorm over the full per-sample feature dim (== C*H*W), f32 math.
        mu = jnp.mean(y, axis=-1, keepdims=True)
        c = y - mu
        var = jnp.mean(c * c, axis=-1, keepdims=True)
        z = c * jax.lax.rsqrt(var + 1e-5) * g + be
        # Sigmoid as a single EUP transcendental.
        s = 0.5 + 0.5 * jnp.tanh(0.5 * z)
        # Inter-layer activation lives in bf16 (next matmul operand dtype).
        return s.astype(a_ref.dtype)

    h = conv_ln_sigmoid(x_ref[...], a1_ref, ep1_ref, 0)
    h = conv_ln_sigmoid(h, a2_ref, ep23_ref, 0)
    h = conv_ln_sigmoid(h, a3_ref, ep23_ref, 3)
    # Final Linear: Wf rows permuted to NHWC order and zero-padded to 128
    # output columns at init -> lane-dense, unmasked stores.
    out_ref[...] = jnp.dot(h, wf_ref[...],
                           preferred_element_type=jnp.float32) + bf_ref[...]


_FUSED_ORDER = ("A1", "A2", "A3", "ep1", "ep23", "Wf", "bf")


def _default_block_batch(n):
    """Per-chip batch tile: fill the MXU M rows; >=2 grid steps on v7x."""
    kind = ""
    try:
        kind = jax.devices()[0].device_kind.lower()
    except Exception:  # pragma: no cover - defensive, e.g. no devices yet
        pass
    bt = 128 if "v5" in kind else 256
    if "v7" in kind and n > 16:
        half = -(-n // 2)                 # cdiv(n, 2)
        half = -(-half // 16) * 16        # round up to multiple of 16
        bt = min(bt, half)                # ensure both TensorCores get work
    if n < 8:
        return n
    return max(8, min(bt, n))


def lenet_mnist_forward(fused_params, x_nchw, num_classes=10, block_batch=None):
    """x_nchw: (N, C, H, W) float32 -> (N, num_classes) float32 logits."""
    N, C, H, W = x_nchw.shape
    D0 = C * H * W
    ncls_pad = fused_params["bf"].shape[-1]          # 128-padded logits width
    # Free reshape (A1 consumes NCHW-flattened rows directly) + one bf16 cast
    # so the only recurring HBM stream is half as wide.
    x_rows = x_nchw.reshape(N, D0).astype(fused_params["A1"].dtype)

    Bt = _default_block_batch(N) if block_batch is None else min(block_batch, N)
    grid = (pl.cdiv(N, Bt),)

    def _full(a):
        nd = a.ndim
        return pl.BlockSpec(a.shape, lambda i, _nd=nd: (0,) * _nd)

    in_specs = [pl.BlockSpec((Bt, D0), lambda i: (i, 0))]
    in_specs += [_full(fused_params[k]) for k in _FUSED_ORDER]

    cp_kwargs = dict(dimension_semantics=("parallel",))  # batch shards across TCs
    if Bt >= 1024:
        # Large tiles overflow v5e's 16 MiB default scoped-VMEM limit.
        cp_kwargs["vmem_limit_bytes"] = 64 * 1024 * 1024

    out_pad = pl.pallas_call(
        _fused_lenet_kernel,
        out_shape=jax.ShapeDtypeStruct((N, ncls_pad), jnp.float32),
        grid=grid,
        in_specs=in_specs,
        out_specs=pl.BlockSpec((Bt, ncls_pad), lambda i: (i, 0)),
        compiler_params=pltpu.CompilerParams(**cp_kwargs),
    )(x_rows, *(fused_params[k] for k in _FUSED_ORDER))
    return out_pad[:, :num_classes]


# ----------------------------------------------------------------------------
# Parameters (PyTorch-native layouts) + one-time folding into kernel layout.
# ----------------------------------------------------------------------------
def conv_out_hw(h, w, k, s, p):
    return (h + 2 * p - k) // s + 1, (w + 2 * p - k) // s + 1


def init_torch_style_params(key, channel=3, num_classes=10, H=16, W=16):
    """Params in PyTorch-native layouts (OIHW conv, (C,H,W) LN, NCHW-flat fc)."""
    ks = jax.random.split(key, 14)
    H1, W1 = conv_out_hw(H, W, 5, 2, 2)
    H2, W2 = conv_out_hw(H1, W1, 5, 2, 2)
    H3, W3 = conv_out_hw(H2, W2, 5, 1, 2)
    p = {
        "w1": 0.1 * jax.random.normal(ks[0], (12, channel, 5, 5), jnp.float32),
        "b1": 0.1 * jax.random.normal(ks[1], (12,), jnp.float32),
        "w2": 0.1 * jax.random.normal(ks[2], (12, 12, 5, 5), jnp.float32),
        "b2": 0.1 * jax.random.normal(ks[3], (12,), jnp.float32),
        "w3": 0.1 * jax.random.normal(ks[4], (12, 12, 5, 5), jnp.float32),
        "b3": 0.1 * jax.random.normal(ks[5], (12,), jnp.float32),
        # Non-trivial LN affine so the NCHW->NHWC folding is actually exercised.
        "ln1_g": 1.0 + 0.1 * jax.random.normal(ks[6], (12, H1, W1), jnp.float32),
        "ln1_b": 0.1 * jax.random.normal(ks[7], (12, H1, W1), jnp.float32),
        "ln2_g": 1.0 + 0.1 * jax.random.normal(ks[8], (12, H2, W2), jnp.float32),
        "ln2_b": 0.1 * jax.random.normal(ks[9], (12, H2, W2), jnp.float32),
        "ln3_g": 1.0 + 0.1 * jax.random.normal(ks[10], (12, H3, W3), jnp.float32),
        "ln3_b": 0.1 * jax.random.normal(ks[11], (12, H3, W3), jnp.float32),
        "wf": 0.1 * jax.random.normal(ks[12], (12 * H3 * W3, num_classes), jnp.float32),
        "bf": 0.1 * jax.random.normal(ks[13], (num_classes,), jnp.float32),
    }
    dims = (channel, H, W, H1, W1, H2, W2, H3, W3, num_classes)
    return p, dims


def _conv_as_dense(w_oihw, in_chw, stride, pad, in_layout):
    """Dense matrix of the (linear) conv: rows = flattened input positions,
    cols = NHWC-flattened output positions.  Built once at init by pushing the
    identity basis through lax.conv, so padding/stride/layout are exact."""
    C, H, W = in_chw
    D = C * H * W
    eye = jnp.eye(D, dtype=jnp.float32)
    if in_layout == "CHW":        # rows indexed (c*H + h)*W + w (NCHW flatten)
        basis = eye.reshape(D, C, H, W)
    else:                         # rows indexed (h*W + w)*C + c (NHWC flatten)
        basis = eye.reshape(D, H, W, C).transpose(0, 3, 1, 2)
    y = jax.lax.conv_general_dilated(
        basis, w_oihw, (stride, stride), [(pad, pad), (pad, pad)],
        dimension_numbers=("NCHW", "OIHW", "NCHW"))
    # (D, O, OH, OW) -> (D, OH*OW*O): outputs in NHWC (channel-minor) order.
    return y.transpose(0, 2, 3, 1).reshape(D, -1)


def build_fused_params(p, dims, mxu_dtype=jnp.bfloat16, out_pad_to=128):
    """Fold convs into dense matrices, permute all tiny params into NHWC order,
    pack the epilogue vectors, and pad the FC output to a lane-dense width."""
    C, H, W, H1, W1, H2, W2, H3, W3, ncls = dims
    D2, D3 = 12 * H2 * W2, 12 * H3 * W3
    assert D2 == D3, "layer-2/3 epilogue packing assumes equal feature widths"

    def ln_row(a):                # (C,H,W) -> (1, H*W*C) in NHWC order
        return jnp.transpose(a, (1, 2, 0)).reshape(1, -1)

    def bias_row(b, hh, ww):      # per-channel bias broadcast over (h, w)
        return jnp.tile(b, hh * ww)[None]

    # FC rows reordered from NCHW-flatten (PyTorch .view) to NHWC-flatten,
    # then zero-padded to `out_pad_to` logits columns for unmasked stores.
    ncls_pad = max(out_pad_to, -(-ncls // out_pad_to) * out_pad_to)
    wf_nhwc = (p["wf"].reshape(12, H3, W3, ncls)
               .transpose(1, 2, 0, 3).reshape(D3, ncls))
    wf_pad = jnp.pad(wf_nhwc, ((0, 0), (0, ncls_pad - ncls)))
    bf_pad = jnp.pad(p["bf"], (0, ncls_pad - ncls))[None]

    # Packed epilogues: rows = [conv bias, LN gamma, LN beta] per layer (f32).
    ep1 = jnp.concatenate(
        [bias_row(p["b1"], H1, W1), ln_row(p["ln1_g"]), ln_row(p["ln1_b"])], 0)
    ep23 = jnp.concatenate(
        [bias_row(p["b2"], H2, W2), ln_row(p["ln2_g"]), ln_row(p["ln2_b"]),
         bias_row(p["b3"], H3, W3), ln_row(p["ln3_g"]), ln_row(p["ln3_b"])], 0)

    return {
        "A1": _conv_as_dense(p["w1"], (C, H, W), 2, 2, "CHW").astype(mxu_dtype),
        "A2": _conv_as_dense(p["w2"], (12, H1, W1), 2, 2, "HWC").astype(mxu_dtype),
        "A3": _conv_as_dense(p["w3"], (12, H2, W2), 1, 2, "HWC").astype(mxu_dtype),
        "ep1": ep1, "ep23": ep23,
        "Wf": wf_pad.astype(mxu_dtype),
        "bf": bf_pad,
    }


# ----------------------------------------------------------------------------
# Pure-JAX reference with PyTorch semantics (NCHW conv, LN over [C,H,W]).
# ----------------------------------------------------------------------------
def reference_forward(p, x):
    def conv(h, w, b, stride):
        y = jax.lax.conv_general_dilated(
            h, w, (stride, stride), [(2, 2), (2, 2)],
            dimension_numbers=("NCHW", "OIHW", "NCHW"))
        return y + b.reshape(1, -1, 1, 1)

    def ln_sigmoid(h, g, bt):
        n = h.shape[0]
        f = h.reshape(n, -1)
        mu = jnp.mean(f, axis=-1, keepdims=True)
        var = jnp.mean((f - mu) ** 2, axis=-1, keepdims=True)
        f = (f - mu) * jax.lax.rsqrt(var + 1e-5)
        return jax.nn.sigmoid(f.reshape(h.shape) * g[None] + bt[None])

    h = ln_sigmoid(conv(x, p["w1"], p["b1"], 2), p["ln1_g"], p["ln1_b"])
    h = ln_sigmoid(conv(h, p["w2"], p["b2"], 2), p["ln2_g"], p["ln2_b"])
    h = ln_sigmoid(conv(h, p["w3"], p["b3"], 1), p["ln3_g"], p["ln3_b"])
    flat = h.reshape(h.shape[0], -1)      # NCHW flatten, like .view()
    return flat @ p["wf"] + p["bf"][None]


if __name__ == "__main__":
    key = jax.random.PRNGKey(0)
    k_x, k_p = jax.random.split(key)
    # Small self-consistent instantiation of the module: NCHW input, 3 channels.
    x = jax.random.normal(k_x, (2, 3, 16, 16), jnp.float32)
    params, dims = init_torch_style_params(k_p, channel=3, num_classes=10,
                                           H=16, W=16)

    fused_params = build_fused_params(params, dims)   # one-time, init only
    fwd = jax.jit(lenet_mnist_forward,
                  static_argnames=("num_classes", "block_batch"))
    out = fwd(fused_params, x)
    jax.block_until_ready(out)

    ref = reference_forward(params, x)
    assert out.shape == (2, 10), out.shape
    # bf16 MXU operands (f32 accumulation) => bf16-appropriate tolerance vs.
    # the pure-f32 reference.
    err = float(jnp.max(jnp.abs(out - ref)))
    assert jnp.allclose(out, ref, atol=5e-2, rtol=5e-2), err

    print("KERNEL_OK")
</pallas_src>

<mosaic_0001>
module attributes {stable_mosaic.version = 11 : i64} {
  func.func @_fused_lenet_kernel(%arg0: i32, %arg1: memref<2x768xbf16, #tpu.memory_space<vmem>>, %arg2: memref<768x768xbf16, #tpu.memory_space<vmem>>, %arg3: memref<768x192xbf16, #tpu.memory_space<vmem>>, %arg4: memref<192x192xbf16, #tpu.memory_space<vmem>>, %arg5: memref<3x768xf32, #tpu.memory_space<vmem>>, %arg6: memref<6x192xf32, #tpu.memory_space<vmem>>, %arg7: memref<192x128xbf16, #tpu.memory_space<vmem>>, %arg8: memref<1x128xf32, #tpu.memory_space<vmem>>, %arg9: memref<2x128xf32, #tpu.memory_space<vmem>>) attributes {dimension_semantics = [#tpu.dimension_semantics<parallel>], iteration_bounds = array<i64: 1>, scalar_prefetch = 0 : i64, scratch_operands = 0 : i64, tpu.core_type = #tpu.core_type<tc>, window_params = [{transform_indices = @transform_0, window_bounds = array<i64: 2, 768>}, {pipeline_mode = #tpu.pipeline_mode<synchronous>, transform_indices = @transform_1, window_bounds = array<i64: 768, 768>}, {pipeline_mode = #tpu.pipeline_mode<synchronous>, transform_indices = @transform_2, window_bounds = array<i64: 768, 192>}, {pipeline_mode = #tpu.pipeline_mode<synchronous>, transform_indices = @transform_3, window_bounds = array<i64: 192, 192>}, {pipeline_mode = #tpu.pipeline_mode<synchronous>, transform_indices = @transform_4, window_bounds = array<i64: 3, 768>}, {pipeline_mode = #tpu.pipeline_mode<synchronous>, transform_indices = @transform_5, window_bounds = array<i64: 6, 192>}, {pipeline_mode = #tpu.pipeline_mode<synchronous>, transform_indices = @transform_6, window_bounds = array<i64: 192, 128>}, {pipeline_mode = #tpu.pipeline_mode<synchronous>, transform_indices = @transform_7, window_bounds = array<i64: 1, 128>}, {transform_indices = @transform_8, window_bounds = array<i64: 2, 128>}]} {
    %c0 = arith.constant 0 : index
    %c0_0 = arith.constant 0 : index
    %0 = vector.load %arg1[%c0, %c0_0] : memref<2x768xbf16, #tpu.memory_space<vmem>>, vector<2x768xbf16>
    %c0_1 = arith.constant 0 : index
    %c0_2 = arith.constant 0 : index
    %1 = vector.load %arg5[%c0_1, %c0_2] : memref<3x768xf32, #tpu.memory_space<vmem>>, vector<1x768xf32>
    %c1 = arith.constant 1 : index
    %c0_3 = arith.constant 0 : index
    %2 = vector.load %arg5[%c1, %c0_3] : memref<3x768xf32, #tpu.memory_space<vmem>>, vector<1x768xf32>
    %c2 = arith.constant 2 : index
    %c0_4 = arith.constant 0 : index
    %3 = vector.load %arg5[%c2, %c0_4] : memref<3x768xf32, #tpu.memory_space<vmem>>, vector<1x768xf32>
    %c0_5 = arith.constant 0 : index
    %c0_6 = arith.constant 0 : index
    %4 = vector.load %arg2[%c0_5, %c0_6] : memref<768x768xbf16, #tpu.memory_space<vmem>>, vector<768x768xbf16>
    %cst = arith.constant dense<0.000000e+00> : vector<2x768xf32>
    %5 = tpu.matmul %0, %4, %cst {dimension_numbers = #tpu.dot_dimension_numbers<[1], [0], [0], [1], [0, 0, 1, 1], [], []>} : vector<2x768xbf16>, vector<768x768xbf16>, vector<2x768xf32> -> vector<2x768xf32>
    %6 = vector.broadcast %1 : vector<1x768xf32> to vector<2x768xf32>
    %7 = arith.addf %5, %6 : vector<2x768xf32>
    %cst_7 = arith.constant dense<0.000000e+00> : vector<2xf32>
    %8 = vector.multi_reduction <add>, %7, %cst_7 [1] : vector<2x768xf32> to vector<2xf32>
    %9 = vector.shape_cast %8 : vector<2xf32> to vector<2x1xf32>
    %cst_8 = arith.constant 7.680000e+02 : f32
    %10 = vector.broadcast %cst_8 : f32 to vector<2x1xf32>
    %11 = arith.divf %9, %10 : vector<2x1xf32>
    %12 = vector.broadcast %11 : vector<2x1xf32> to vector<2x768xf32>
    %13 = arith.subf %7, %12 : vector<2x768xf32>
    %14 = arith.mulf %13, %13 : vector<2x768xf32>
    %cst_9 = arith.constant dense<0.000000e+00> : vector<2xf32>
    %15 = vector.multi_reduction <add>, %14, %cst_9 [1] : vector<2x768xf32> to vector<2xf32>
    %16 = vector.shape_cast %15 : vector<2xf32> to vector<2x1xf32>
    %cst_10 = arith.constant 7.680000e+02 : f32
    %17 = vector.broadcast %cst_10 : f32 to vector<2x1xf32>
    %18 = arith.divf %16, %17 : vector<2x1xf32>
    %cst_11 = arith.constant 9.99999974E-6 : f32
    %19 = vector.broadcast %cst_11 : f32 to vector<2x1xf32>
    %20 = arith.addf %18, %19 : vector<2x1xf32>
    %21 = math.rsqrt %20 : vector<2x1xf32>
    %22 = vector.broadcast %21 : vector<2x1xf32> to vector<2x768xf32>
    %23 = arith.mulf %13, %22 : vector<2x768xf32>
    %24 = vector.broadcast %2 : vector<1x768xf32> to vector<2x768xf32>
    %25 = arith.mulf %23, %24 : vector<2x768xf32>
    %26 = vector.broadcast %3 : vector<1x768xf32> to vector<2x768xf32>
    %27 = arith.addf %25, %26 : vector<2x768xf32>
    %cst_12 = arith.constant 5.000000e-01 : f32
    %28 = vector.broadcast %cst_12 : f32 to vector<2x768xf32>
    %29 = arith.mulf %28, %27 : vector<2x768xf32>
    %30 = math.tanh %29 : vector<2x768xf32>
    %cst_13 = arith.constant 5.000000e-01 : f32
    %31 = vector.broadcast %cst_13 : f32 to vector<2x768xf32>
    %32 = arith.mulf %31, %30 : vector<2x768xf32>
    %cst_14 = arith.constant 5.000000e-01 : f32
    %33 = vector.broadcast %cst_14 : f32 to vector<2x768xf32>
    %34 = arith.addf %33, %32 : vector<2x768xf32>
    %35 = arith.truncf %34 : vector<2x768xf32> to vector<2x768xbf16>
    %c0_15 = arith.constant 0 : index
    %c0_16 = arith.constant 0 : index
    %36 = vector.load %arg6[%c0_15, %c0_16] : memref<6x192xf32, #tpu.memory_space<vmem>>, vector<1x192xf32>
    %c1_17 = arith.constant 1 : index
    %c0_18 = arith.constant 0 : index
    %37 = vector.load %arg6[%c1_17, %c0_18] : memref<6x192xf32, #tpu.memory_space<vmem>>, vector<1x192xf32>
    %c2_19 = arith.constant 2 : index
    %c0_20 = arith.constant 0 : index
    %38 = vector.load %arg6[%c2_19, %c0_20] : memref<6x192xf32, #tpu.memory_space<vmem>>, vector<1x192xf32>
    %c0_21 = arith.constant 0 : index
    %c0_22 = arith.constant 0 : index
    %39 = vector.load %arg3[%c0_21, %c0_22] : memref<768x192xbf16, #tpu.memory_space<vmem>>, vector<768x192xbf16>
    %cst_23 = arith.constant dense<0.000000e+00> : vector<2x192xf32>
    %40 = tpu.matmul %35, %39, %cst_23 {dimension_numbers = #tpu.dot_dimension_numbers<[1], [0], [0], [1], [0, 0, 1, 1], [], []>} : vector<2x768xbf16>, vector<768x192xbf16>, vector<2x192xf32> -> vector<2x192xf32>
    %41 = vector.broadcast %36 : vector<1x192xf32> to vector<2x192xf32>
    %42 = arith.addf %40, %41 : vector<2x192xf32>
    %cst_24 = arith.constant dense<0.000000e+00> : vector<2xf32>
    %43 = vector.multi_reduction <add>, %42, %cst_24 [1] : vector<2x192xf32> to vector<2xf32>
    %44 = vector.shape_cast %43 : vector<2xf32> to vector<2x1xf32>
    %cst_25 = arith.constant 1.920000e+02 : f32
    %45 = vector.broadcast %cst_25 : f32 to vector<2x1xf32>
    %46 = arith.divf %44, %45 : vector<2x1xf32>
    %47 = vector.broadcast %46 : vector<2x1xf32> to vector<2x192xf32>
    %48 = arith.subf %42, %47 : vector<2x192xf32>
    %49 = arith.mulf %48, %48 : vector<2x192xf32>
    %cst_26 = arith.constant dense<0.000000e+00> : vector<2xf32>
    %50 = vector.multi_reduction <add>, %49, %cst_26 [1] : vector<2x192xf32> to vector<2xf32>
    %51 = vector.shape_cast %50 : vector<2xf32> to vector<2x1xf32>
    %cst_27 = arith.constant 1.920000e+02 : f32
    %52 = vector.broadcast %cst_27 : f32 to vector<2x1xf32>
    %53 = arith.divf %51, %52 : vector<2x1xf32>
    %cst_28 = arith.constant 9.99999974E-6 : f32
    %54 = vector.broadcast %cst_28 : f32 to vector<2x1xf32>
    %55 = arith.addf %53, %54 : vector<2x1xf32>
    %56 = math.rsqrt %55 : vector<2x1xf32>
    %57 = vector.broadcast %56 : vector<2x1xf32> to vector<2x192xf32>
    %58 = arith.mulf %48, %57 : vector<2x192xf32>
    %59 = vector.broadcast %37 : vector<1x192xf32> to vector<2x192xf32>
    %60 = arith.mulf %58, %59 : vector<2x192xf32>
    %61 = vector.broadcast %38 : vector<1x192xf32> to vector<2x192xf32>
    %62 = arith.addf %60, %61 : vector<2x192xf32>
    %cst_29 = arith.constant 5.000000e-01 : f32
    %63 = vector.broadcast %cst_29 : f32 to vector<2x192xf32>
    %64 = arith.mulf %63, %62 : vector<2x192xf32>
    %65 = math.tanh %64 : vector<2x192xf32>
    %cst_30 = arith.constant 5.000000e-01 : f32
    %66 = vector.broadcast %cst_30 : f32 to vector<2x192xf32>
    %67 = arith.mulf %66, %65 : vector<2x192xf32>
    %cst_31 = arith.constant 5.000000e-01 : f32
    %68 = vector.broadcast %cst_31 : f32 to vector<2x192xf32>
    %69 = arith.addf %68, %67 : vector<2x192xf32>
    %70 = arith.truncf %69 : vector<2x192xf32> to vector<2x192xbf16>
    %c3 = arith.constant 3 : index
    %c0_32 = arith.constant 0 : index
    %71 = vector.load %arg6[%c3, %c0_32] : memref<6x192xf32, #tpu.memory_space<vmem>>, vector<1x192xf32>
    %c4 = arith.constant 4 : index
    %c0_33 = arith.constant 0 : index
    %72 = vector.load %arg6[%c4, %c0_33] : memref<6x192xf32, #tpu.memory_space<vmem>>, vector<1x192xf32>
    %c5 = arith.constant 5 : index
    %c0_34 = arith.constant 0 : index
    %73 = vector.load %arg6[%c5, %c0_34] : memref<6x192xf32, #tpu.memory_space<vmem>>, vector<1x192xf32>
    %c0_35 = arith.constant 0 : index
    %c0_36 = arith.constant 0 : index
    %74 = vector.load %arg4[%c0_35, %c0_36] : memref<192x192xbf16, #tpu.memory_space<vmem>>, vector<192x192xbf16>
    %cst_37 = arith.constant dense<0.000000e+00> : vector<2x192xf32>
    %75 = tpu.matmul %70, %74, %cst_37 {dimension_numbers = #tpu.dot_dimension_numbers<[1], [0], [0], [1], [0, 0, 1, 1], [], []>} : vector<2x192xbf16>, vector<192x192xbf16>, vector<2x192xf32> -> vector<2x192xf32>
    %76 = vector.broadcast %71 : vector<1x192xf32> to vector<2x192xf32>
    %77 = arith.addf %75, %76 : vector<2x192xf32>
    %cst_38 = arith.constant dense<0.000000e+00> : vector<2xf32>
    %78 = vector.multi_reduction <add>, %77, %cst_38 [1] : vector<2x192xf32> to vector<2xf32>
    %79 = vector.shape_cast %78 : vector<2xf32> to vector<2x1xf32>
    %cst_39 = arith.constant 1.920000e+02 : f32
    %80 = vector.broadcast %cst_39 : f32 to vector<2x1xf32>
    %81 = arith.divf %79, %80 : vector<2x1xf32>
    %82 = vector.broadcast %81 : vector<2x1xf32> to vector<2x192xf32>
    %83 = arith.subf %77, %82 : vector<2x192xf32>
    %84 = arith.mulf %83, %83 : vector<2x192xf32>
    %cst_40 = arith.constant dense<0.000000e+00> : vector<2xf32>
    %85 = vector.multi_reduction <add>, %84, %cst_40 [1] : vector<2x192xf32> to vector<2xf32>
    %86 = vector.shape_cast %85 : vector<2xf32> to vector<2x1xf32>
    %cst_41 = arith.constant 1.920000e+02 : f32
    %87 = vector.broadcast %cst_41 : f32 to vector<2x1xf32>
    %88 = arith.divf %86, %87 : vector<2x1xf32>
    %cst_42 = arith.constant 9.99999974E-6 : f32
    %89 = vector.broadcast %cst_42 : f32 to vector<2x1xf32>
    %90 = arith.addf %88, %89 : vector<2x1xf32>
    %91 = math.rsqrt %90 : vector<2x1xf32>
    %92 = vector.broadcast %91 : vector<2x1xf32> to vector<2x192xf32>
    %93 = arith.mulf %83, %92 : vector<2x192xf32>
    %94 = vector.broadcast %72 : vector<1x192xf32> to vector<2x192xf32>
    %95 = arith.mulf %93, %94 : vector<2x192xf32>
    %96 = vector.broadcast %73 : vector<1x192xf32> to vector<2x192xf32>
    %97 = arith.addf %95, %96 : vector<2x192xf32>
    %cst_43 = arith.constant 5.000000e-01 : f32
    %98 = vector.broadcast %cst_43 : f32 to vector<2x192xf32>
    %99 = arith.mulf %98, %97 : vector<2x192xf32>
    %100 = math.tanh %99 : vector<2x192xf32>
    %cst_44 = arith.constant 5.000000e-01 : f32
    %101 = vector.broadcast %cst_44 : f32 to vector<2x192xf32>
    %102 = arith.mulf %101, %100 : vector<2x192xf32>
    %cst_45 = arith.constant 5.000000e-01 : f32
    %103 = vector.broadcast %cst_45 : f32 to vector<2x192xf32>
    %104 = arith.addf %103, %102 : vector<2x192xf32>
    %105 = arith.truncf %104 : vector<2x192xf32> to vector<2x192xbf16>
    %c0_46 = arith.constant 0 : index
    %c0_47 = arith.constant 0 : index
    %106 = vector.load %arg7[%c0_46, %c0_47] : memref<192x128xbf16, #tpu.memory_space<vmem>>, vector<192x128xbf16>
    %cst_48 = arith.constant dense<0.000000e+00> : vector<2x128xf32>
    %107 = tpu.matmul %105, %106, %cst_48 {dimension_numbers = #tpu.dot_dimension_numbers<[1], [0], [0], [1], [0, 0, 1, 1], [], []>} : vector<2x192xbf16>, vector<192x128xbf16>, vector<2x128xf32> -> vector<2x128xf32>
    %c0_49 = arith.constant 0 : index
    %c0_50 = arith.constant 0 : index
    %108 = vector.load %arg8[%c0_49, %c0_50] : memref<1x128xf32, #tpu.memory_space<vmem>>, vector<1x128xf32>
    %109 = vector.broadcast %108 : vector<1x128xf32> to vector<2x128xf32>
    %110 = arith.addf %107, %109 : vector<2x128xf32>
    %c0_51 = arith.constant 0 : index
    %c0_52 = arith.constant 0 : index
    %111 = vector.load %arg9[%c0_51, %c0_52] : memref<2x128xf32, #tpu.memory_space<vmem>>, vector<2x128xf32>
    tpu.vector_store %arg9[%c0_51, %c0_52], %110 {strides = array<i32>} : memref<2x128xf32, #tpu.memory_space<vmem>>, vector<2x128xf32>,
    return
  }
  func.func @transform_0(%arg0: i32) -> (i32, i32) {
    %c0_i32 = arith.constant 0 : i32
    %c0_i32_0 = arith.constant 0 : i32
    return %arg0, %c0_i32 : i32, i32
  }
  func.func @transform_1(%arg0: i32) -> (i32, i32) {
    %c0_i32 = arith.constant 0 : i32
    %c0_i32_0 = arith.constant 0 : i32
    %c0_i32_1 = arith.constant 0 : i32
    return %c0_i32, %c0_i32_0 : i32, i32
  }
  func.func @transform_2(%arg0: i32) -> (i32, i32) {
    %c0_i32 = arith.constant 0 : i32
    %c0_i32_0 = arith.constant 0 : i32
    %c0_i32_1 = arith.constant 0 : i32
    return %c0_i32, %c0_i32_0 : i32, i32
  }
  func.func @transform_3(%arg0: i32) -> (i32, i32) {
    %c0_i32 = arith.constant 0 : i32
    %c0_i32_0 = arith.constant 0 : i32
    %c0_i32_1 = arith.constant 0 : i32
    return %c0_i32, %c0_i32_0 : i32, i32
  }
  func.func @transform_4(%arg0: i32) -> (i32, i32) {
    %c0_i32 = arith.constant 0 : i32
    %c0_i32_0 = arith.constant 0 : i32
    %c0_i32_1 = arith.constant 0 : i32
    return %c0_i32, %c0_i32_0 : i32, i32
  }
  func.func @transform_5(%arg0: i32) -> (i32, i32) {
    %c0_i32 = arith.constant 0 : i32
    %c0_i32_0 = arith.constant 0 : i32
    %c0_i32_1 = arith.constant 0 : i32
    return %c0_i32, %c0_i32_0 : i32, i32
  }
  func.func @transform_6(%arg0: i32) -> (i32, i32) {
    %c0_i32 = arith.constant 0 : i32
    %c0_i32_0 = arith.constant 0 : i32
    %c0_i32_1 = arith.constant 0 : i32
    return %c0_i32, %c0_i32_0 : i32, i32
  }
  func.func @transform_7(%arg0: i32) -> (i32, i32) {
    %c0_i32 = arith.constant 0 : i32
    %c0_i32_0 = arith.constant 0 : i32
    %c0_i32_1 = arith.constant 0 : i32
    return %c0_i32, %c0_i32_0 : i32, i32
  }
  func.func @transform_8(%arg0: i32) -> (i32, i32) {
    %c0_i32 = arith.constant 0 : i32
    %c0_i32_0 = arith.constant 0 : i32
    return %arg0, %c0_i32 : i32, i32
  }
}

</mosaic_0001>

<llo_original>
// kernel: lenet_mnist_forward.1
$region0: #{lenet_mnist_forward.1}
  #allocation0 [shape = 'u32[]', space=smem, size = 0x4, offset = 0x4, fixed_abs, tag = 'smem constant byte address 0x4 - core index']
  #allocation1 [shape = 'u32[144,128]{1,0:T(1,128)}', space=vmem, size = 0x12000, scoped, tag = 'internal scratch']
  %s0 = inlined_call_operand.vmem [shape: bf16[2,768], index: 0, kind: input, shape index: {}]
  %s1 = inlined_call_operand.hbm [shape: bf16[768,768], index: 1, kind: input, shape index: {}]
  %s2 = inlined_call_operand.vmem [shape: bf16[768,192], index: 2, kind: input, shape index: {}]
  %s3 = inlined_call_operand.hbm [shape: bf16[192,192], index: 3, kind: input, shape index: {}]
  %s4 = inlined_call_operand.hbm [shape: f32[3,768], index: 4, kind: input, shape index: {}]
  %s5 = inlined_call_operand.hbm [shape: f32[6,192], index: 5, kind: input, shape index: {}]
  %s6 = inlined_call_operand.hbm [shape: bf16[192,128], index: 6, kind: input, shape index: {}]
  %s7 = inlined_call_operand.hbm [shape: f32[1,128], index: 7, kind: input, shape index: {}]
  %s8 = inlined_call_operand.hbm [shape: f32[2,128], index: 8, kind: output, shape index: {}]
  %s9 = sld [smem:[#allocation0]]
  $region66: #{lenet_mnist_forward.1} parent=0
    _
  %s11 = ssub.s32 1, %s9
  %s12 = scalar_select 0, %s11, %s9
  $region1: #{lenet_mnist_forward.1} parent=0
    #allocation2 [shape = 'u8[1179648]{0}', space=vmem, size = 0x120000, scoped, tag = 'input window, operand 1, single buffered']
    #allocation3 [shape = 's32[1]{0}', space=sflag, size = 0x4, scoped, tag = 'scoped memory for lenet_mnist_forward.1']
    #allocation4 [shape = 's32[1]{0}', space=sflag, size = 0x4, scoped, tag = 'scoped memory for lenet_mnist_forward.1']
    #allocation5 [shape = 'u8[98304]{0}', space=vmem, size = 0x18000, scoped, tag = 'input window, operand 3, single buffered']
    #allocation6 [shape = 's32[1]{0}', space=sflag, size = 0x4, scoped, tag = 'scoped memory for lenet_mnist_forward.1']
    #allocation7 [shape = 'u8[12288]{0}', space=vmem, size = 0x3000, scoped, tag = 'input window, operand 4, single buffered']
    #allocation8 [shape = 'u8[8192]{0}', space=vmem, size = 0x2000, scoped, tag = 'input window, operand 5, single buffered']
    #allocation9 [shape = 's32[1]{0}', space=sflag, size = 0x4, scoped, tag = 'scoped memory for lenet_mnist_forward.1']
    #allocation10 [shape = 'u8[49152]{0}', space=vmem, size = 0xc000, scoped, tag = 'input window, operand 6, single buffered']
    #allocation11 [shape = 'u8[512]{0}', space=vmem, size = 0x400, scoped, tag = 'input window, operand 7, single buffered']
    #allocation12 [shape = 's32[1]{0}', space=sflag, size = 0x4, scoped, tag = 'scoped memory for lenet_mnist_forward.1']
    #allocation13 [shape = 'u8[1024]{0}', space=vmem, size = 0x400, scoped, tag = 'output window, operand 0, single buffered']
    %13 = vsyncpa [#allocation3], 0
    %14 = vsyncpa [#allocation6], 0
    %15 = vsyncpa [#allocation9], 0
    %16 = vsyncpa [#allocation12], 0
    %17 = vsyncpa [#allocation4], 0
    // Predicated region
    $region2: #{lenet_mnist_forward.1} parent=1 // pred_check
      _
    $region3: #{lenet_mnist_forward.1} parent=1 // pred_check_branch
      %19 = sbr.rel (0) target = $region5
    $region4: #{lenet_mnist_forward.1} parent=1 // pred_region
      _
    $region5: #{lenet_mnist_forward.1} parent=1 // pred_fallthru
      _
    // Predicated region
    $region6: #{lenet_mnist_forward.1} parent=1 // pred_check
      _
    $region7: #{lenet_mnist_forward.1} parent=1 // pred_check_branch
      %21 = sbr.rel (0) target = $region9
    $region8: #{lenet_mnist_forward.1} parent=1 // pred_region
      %s23 = ssub.s32 36864, 36864
      %24 = vsyncadd [#allocation3], %s23
      %s25 = sshll.u32 [#allocation2], 4
      %s26 = int_to_ptr.vmem [resolvable:$true] %s25
      %31 = dma.hbm_to_vmem [thread:$0]  %s1, 36864, %s26, [#allocation3], 384, 384, 24
    $region9: #{lenet_mnist_forward.1} parent=1 // pred_fallthru
      _
    // Predicated region
    $region10: #{lenet_mnist_forward.1} parent=1 // pred_check
      _
    $region11: #{lenet_mnist_forward.1} parent=1 // pred_check_branch
      %33 = sbr.rel (0) target = $region13
    $region12: #{lenet_mnist_forward.1} parent=1 // pred_region
      _
    $region13: #{lenet_mnist_forward.1} parent=1 // pred_fallthru
      _
    // Predicated region
    $region14: #{lenet_mnist_forward.1} parent=1 // pred_check
      _
    $region15: #{lenet_mnist_forward.1} parent=1 // pred_check_branch
      %35 = sbr.rel (0) target = $region17
    $region16: #{lenet_mnist_forward.1} parent=1 // pred_region
      %s37 = ssub.s32 3072, 3072
      %38 = vsyncadd [#allocation6], %s37
      %s39 = sshll.u32 [#allocation5], 4
      %s40 = int_to_ptr.vmem [resolvable:$true] %s39
      %45 = dma.hbm_to_vmem [thread:$0]  %s3, 3072, %s40, [#allocation6], 128, 128, 8
    $region17: #{lenet_mnist_forward.1} parent=1 // pred_fallthru
      _
    // Predicated region
    $region18: #{lenet_mnist_forward.1} parent=1 // pred_check
      _
    $region19: #{lenet_mnist_forward.1} parent=1 // pred_check_branch
      %47 = sbr.rel (0) target = $region21
    $region20: #{lenet_mnist_forward.1} parent=1 // pred_region
      %s49 = ssub.s32 384, 384
      %50 = vsyncadd [#allocation6], %s49
      %s52 = sshll.u32 [#allocation7], 4
      %s53 = int_to_ptr.vmem [resolvable:$true] %s52
      %55 = dma.hbm_to_vmem [thread:$0]  %s4, 384, %s53, [#allocation6]
    $region21: #{lenet_mnist_forward.1} parent=1 // pred_fallthru
      _
    // Predicated region
    $region22: #{lenet_mnist_forward.1} parent=1 // pred_check
      _
    $region23: #{lenet_mnist_forward.1} parent=1 // pred_check_branch
      %57 = sbr.rel (0) target = $region25
    $region24: #{lenet_mnist_forward.1} parent=1 // pred_region
      %s59 = ssub.s32 256, 256
      %60 = vsyncadd [#allocation9], %s59
      %s62 = sshll.u32 [#allocation8], 4
      %s63 = int_to_ptr.vmem [resolvable:$true] %s62
      %65 = dma.hbm_to_vmem [thread:$0]  %s5, 256, %s63, [#allocation9]
    $region25: #{lenet_mnist_forward.1} parent=1 // pred_fallthru
      _
    // Predicated region
    $region26: #{lenet_mnist_forward.1} parent=1 // pred_check
      _
    $region27: #{lenet_mnist_forward.1} parent=1 // pred_check_branch
      %67 = sbr.rel (0) target = $region29
    $region28: #{lenet_mnist_forward.1} parent=1 // pred_region
      %s69 = ssub.s32 1536, 1536
      %70 = vsyncadd [#allocation9], %s69
      %s71 = sshll.u32 [#allocation10], 4
      %s72 = int_to_ptr.vmem [resolvable:$true] %s71
      %77 = dma.hbm_to_vmem [thread:$0]  %s6, 1536, %s72, [#allocation9], 64, 64, 4
    $region29: #{lenet_mnist_forward.1} parent=1 // pred_fallthru
      _
    // Predicated region
    $region30: #{lenet_mnist_forward.1} parent=1 // pred_check
      _
    $region31: #{lenet_mnist_forward.1} parent=1 // pred_check_branch
      %79 = sbr.rel (0) target = $region33
    $region32: #{lenet_mnist_forward.1} parent=1 // pred_region
      %s81 = ssub.s32 16, 16
      %82 = vsyncadd [#allocation12], %s81
      %s84 = sshll.u32 [#allocation11], 4
      %s85 = int_to_ptr.vmem [resolvable:$true] %s84
      %87 = dma.hbm_to_vmem [thread:$0]  %s7, 16, %s85, [#allocation12]
    $region33: #{lenet_mnist_forward.1} parent=1 // pred_fallthru
      _
    // Predicated region
    $region34: #{lenet_mnist_forward.1} parent=1 // pred_check
      _
    $region35: #{lenet_mnist_forward.1} parent=1 // pred_check_branch
      %89 = sbr.rel (0) target = $region37
    $region36: #{lenet_mnist_forward.1} parent=1 // pred_region
      %90 = dma.done [#allocation3], 36864
    $region37: #{lenet_mnist_forward.1} parent=1 // pred_fallthru
      _
    // Predicated region
    $region38: #{lenet_mnist_forward.1} parent=1 // pred_check
      _
    $region39: #{lenet_mnist_forward.1} parent=1 // pred_check_branch
      %92 = sbr.rel (0) target = $region41
    $region40: #{lenet_mnist_forward.1} parent=1 // pred_region
      %93 = dma.done [#allocation6], 3072
    $region41: #{lenet_mnist_forward.1} parent=1 // pred_fallthru
      _
    // Predicated region
    $region42: #{lenet_mnist_forward.1} parent=1 // pred_check
      _
    $region43: #{lenet_mnist_forward.1} parent=1 // pred_check_branch
      %95 = sbr.rel (0) target = $region45
    $region44: #{lenet_mnist_forward.1} parent=1 // pred_region
      %96 = dma.done [#allocation6], 384
    $region45: #{lenet_mnist_forward.1} parent=1 // pred_fallthru
      _
    // Predicated region
    $region46: #{lenet_mnist_forward.1} parent=1 // pred_check
      _
    $region47: #{lenet_mnist_forward.1} parent=1 // pred_check_branch
      %98 = sbr.rel (0) target = $region49
    $region48: #{lenet_mnist_forward.1} parent=1 // pred_region
      %99 = dma.done [#allocation9], 256
    $region49: #{lenet_mnist_forward.1} parent=1 // pred_fallthru
      _
    // Predicated region
    $region50: #{lenet_mnist_forward.1} parent=1 // pred_check
      _
    $region51: #{lenet_mnist_forward.1} parent=1 // pred_check_branch
      %101 = sbr.rel (0) target = $region53
    $region52: #{lenet_mnist_forward.1} parent=1 // pred_region
      %102 = dma.done [#allocation9], 1536
    $region53: #{lenet_mnist_forward.1} parent=1 // pred_fallthru
      _
    // Predicated region
    $region54: #{lenet_mnist_forward.1} parent=1 // pred_check
      _
    $region55: #{lenet_mnist_forward.1} parent=1 // pred_check_branch
      %104 = sbr.rel (0) target = $region57
    $region56: #{lenet_mnist_forward.1} parent=1 // pred_region
      %105 = dma.done [#allocation12], 16
    $region57: #{lenet_mnist_forward.1} parent=1 // pred_fallthru
      _
    %v107 = vld [vmem:[%s0] sm:$0x3f]
    %v108 = vld [vmem:[#allocation7] ss:$4 sm:$0x3f]
    %s109 = scalar_lea.vmem [#allocation7], 1
    %v110 = vld [vmem:[%s109] ss:$4 sm:$0x3f]
    %s111 = scalar_lea.vmem [#allocation7], 2
    %v112 = vld [vmem:[%s111] ss:$4 sm:$0x3f]
    %v113 = vld [vmem:[#allocation2] sm:$0xff]
    %v114 = vld [vmem:[#allocation2 + $0x8] sm:$0xff]
    %v115 = vld [vmem:[#allocation2 + $0x10] sm:$0xff]
    %v116 = vld [vmem:[#allocation2 + $0x18] sm:$0xff]
    %v117 = vld [vmem:[#allocation2 + $0x20] sm:$0xff]
    %v118 = vld [vmem:[#allocation2 + $0x28] sm:$0xff]
    %v119 = vld [vmem:[#allocation2 + $0x30] sm:$0xff]
    %v120 = vld [vmem:[#allocation2 + $0x38] sm:$0xff]
    %v121 = vld [vmem:[#allocation2 + $0x40] sm:$0xff]
    %v122 = vld [vmem:[#allocation2 + $0x48] sm:$0xff]
    %v123 = vld [vmem:[#allocation2 + $0x50] sm:$0xff]
    %v124 = vld [vmem:[#allocation2 + $0x58] sm:$0xff]
    %v125 = vld [vmem:[#allocation2 + $0x60] sm:$0xff]
    %v126 = vld [vmem:[#allocation2 + $0x68] sm:$0xff]
    %v127 = vld [vmem:[#allocation2 + $0x70] sm:$0xff]
    %v128 = vld [vmem:[#allocation2 + $0x78] sm:$0xff]
    %v129 = vld [vmem:[#allocation2 + $0x80] sm:$0xff]
    %v130 = vld [vmem:[#allocation2 + $0x88] sm:$0xff]
    %v131 = vld [vmem:[#allocation2 + $0x90] sm:$0xff]
    %v132 = vld [vmem:[#allocation2 + $0x98] sm:$0xff]
    %v133 = vld [vmem:[#allocation2 + $0xa0] sm:$0xff]
    %v134 = vld [vmem:[#allocation2 + $0xa8] sm:$0xff]
    %v135 = vld [vmem:[#allocation2 + $0xb0] sm:$0xff]
    %v136 = vld [vmem:[#allocation2 + $0xb8] sm:$0xff]
    %v137 = vld [vmem:[#allocation2 + $0xc0] sm:$0xff]
    %v138 = vld [vmem:[#allocation2 + $0xc8] sm:$0xff]
    %v139 = vld [vmem:[#allocation2 + $0xd0] sm:$0xff]
    %v140 = vld [vmem:[#allocation2 + $0xd8] sm:$0xff]
    %v141 = vld [vmem:[#allocation2 + $0xe0] sm:$0xff]
    %v142 = vld [vmem:[#allocation2 + $0xe8] sm:$0xff]
    %v143 = vld [vmem:[#allocation2 + $0xf0] sm:$0xff]
    %v144 = vld [vmem:[#allocation2 + $0xf8] sm:$0xff]
    %v145 = vld [vmem:[#allocation2 + $0x100] sm:$0xff]
    %v146 = vld [vmem:[#allocation2 + $0x108] sm:$0xff]
    %v147 = vld [vmem:[#allocation2 + $0x110] sm:$0xff]
    %v148 = vld [vmem:[#allocation2 + $0x118] sm:$0xff]
    %v149 = vld [vmem:[#allocation2 + $0x120] sm:$0xff]
    %v150 = vld [vmem:[#allocation2 + $0x128] sm:$0xff]
    %v151 = vld [vmem:[#allocation2 + $0x130] sm:$0xff]
    %v152 = vld [vmem:[#allocation2 + $0x138] sm:$0xff]
    %v153 = vld [vmem:[#allocation2 + $0x140] sm:$0xff]
    %v154 = vld [vmem:[#allocation2 + $0x148] sm:$0xff]
    %v155 = vld [vmem:[#allocation2 + $0x150] sm:$0xff]
    %v156 = vld [vmem:[#allocation2 + $0x158] sm:$0xff]
    %v157 = vld [vmem:[#allocation2 + $0x160] sm:$0xff]
    %v158 = vld [vmem:[#allocation2 + $0x168] sm:$0xff]
    %v159 = vld [vmem:[#allocation2 + $0x170] sm:$0xff]
    %v160 = vld [vmem:[#allocation2 + $0x178] sm:$0xff]
    %v161 = vld [vmem:[#allocation2 + $0x180] sm:$0xff]
    %v162 = vld [vmem:[#allocation2 + $0x188] sm:$0xff]
    %v163 = vld [vmem:[#allocation2 + $0x190] sm:$0xff]
    %v164 = vld [vmem:[#allocation2 + $0x198] sm:$0xff]
    %v165 = vld [vmem:[#allocation2 + $0x1a0] sm:$0xff]
    %v166 = vld [vmem:[#allocation2 + $0x1a8] sm:$0xff]
    %v167 = vld [vmem:[#allocation2 + $0x1b0] sm:$0xff]
    %v168 = vld [vmem:[#allocation2 + $0x1b8] sm:$0xff]
    %v169 = vld [vmem:[#allocation2 + $0x1c0] sm:$0xff]
    %v170 = vld [vmem:[#allocation2 + $0x1c8] sm:$0xff]
    %v171 = vld [vmem:[#allocation2 + $0x1d0] sm:$0xff]
    %v172 = vld [vmem:[#allocation2 + $0x1d8] sm:$0xff]
    %v173 = vld [vmem:[#allocation2 + $0x1e0] sm:$0xff]
    %v174 = vld [vmem:[#allocation2 + $0x1e8] sm:$0xff]
    %v175 = vld [vmem:[#allocation2 + $0x1f0] sm:$0xff]
    %v176 = vld [vmem:[#allocation2 + $0x1f8] sm:$0xff]
    %v177 = vld [vmem:[#allocation2 + $0x200] sm:$0xff]
    %v178 = vld [vmem:[#allocation2 + $0x208] sm:$0xff]
    %v179 = vld [vmem:[#allocation2 + $0x210] sm:$0xff]
    %v180 = vld [vmem:[#allocation2 + $0x218] sm:$0xff]
    %v181 = vld [vmem:[#allocation2 + $0x220] sm:$0xff]
    %v182 = vld [vmem:[#allocation2 + $0x228] sm:$0xff]
    %v183 = vld [vmem:[#allocation2 + $0x230] sm:$0xff]
    %v184 = vld [vmem:[#allocation2 + $0x238] sm:$0xff]
    %v185 = vld [vmem:[#allocation2 + $0x240] sm:$0xff]
    %v186 = vld [vmem:[#allocation2 + $0x248] sm:$0xff]
    %v187 = vld [vmem:[#allocation2 + $0x250] sm:$0xff]
    %v188 = vld [vmem:[#allocation2 + $0x258] sm:$0xff]
    %v189 = vld [vmem:[#allocation2 + $0x260] sm:$0xff]
    %v190 = vld [vmem:[#allocation2 + $0x268] sm:$0xff]
    %v191 = vld [vmem:[#allocation2 + $0x270] sm:$0xff]
    %v192 = vld [vmem:[#allocation2 + $0x278] sm:$0xff]
    %v193 = vld [vmem:[#allocation2 + $0x280] sm:$0xff]
    %v194 = vld [vmem:[#allocation2 + $0x288] sm:$0xff]
    %v195 = vld [vmem:[#allocation2 + $0x290] sm:$0xff]
    %v196 = vld [vmem:[#allocation2 + $0x298] sm:$0xff]
    %v197 = vld [vmem:[#allocation2 + $0x2a0] sm:$0xff]
    %v198 = vld [vmem:[#allocation2 + $0x2a8] sm:$0xff]
    %v199 = vld [vmem:[#allocation2 + $0x2b0] sm:$0xff]
    %v200 = vld [vmem:[#allocation2 + $0x2b8] sm:$0xff]
    %v201 = vld [vmem:[#allocation2 + $0x2c0] sm:$0xff]
    %v202 = vld [vmem:[#allocation2 + $0x2c8] sm:$0xff]
    %v203 = vld [vmem:[#allocation2 + $0x2d0] sm:$0xff]
    %v204 = vld [vmem:[#allocation2 + $0x2d8] sm:$0xff]
    %v205 = vld [vmem:[#allocation2 + $0x2e0] sm:$0xff]
    %v206 = vld [vmem:[#allocation2 + $0x2e8] sm:$0xff]
    %v207 = vld [vmem:[#allocation2 + $0x2f0] sm:$0xff]
    %v208 = vld [vmem:[#allocation2 + $0x2f8] sm:$0xff]
    %v209 = vld [vmem:[#allocation2 + $0x300] sm:$0xff]
    %v210 = vld [vmem:[#allocation2 + $0x308] sm:$0xff]
    %v211 = vld [vmem:[#allocation2 + $0x310] sm:$0xff]
    %v212 = vld [vmem:[#allocation2 + $0x318] sm:$0xff]
    %v213 = vld [vmem:[#allocation2 + $0x320] sm:$0xff]
    %v214 = vld [vmem:[#allocation2 + $0x328] sm:$0xff]
    %v215 = vld [vmem:[#allocation2 + $0x330] sm:$0xff]
    %v216 = vld [vmem:[#allocation2 + $0x338] sm:$0xff]
    %v217 = vld [vmem:[#allocation2 + $0x340] sm:$0xff]
    %v218 = vld [vmem:[#allocation2 + $0x348] sm:$0xff]
    %v219 = vld [vmem:[#allocation2 + $0x350] sm:$0xff]
    %v220 = vld [vmem:[#allocation2 + $0x358] sm:$0xff]
    %v221 = vld [vmem:[#allocation2 + $0x360] sm:$0xff]
    %v222 = vld [vmem:[#allocation2 + $0x368] sm:$0xff]
    %v223 = vld [vmem:[#allocation2 + $0x370] sm:$0xff]
    %v224 = vld [vmem:[#allocation2 + $0x378] sm:$0xff]
    %v225 = vld [vmem:[#allocation2 + $0x380] sm:$0xff]
    %v226 = vld [vmem:[#allocation2 + $0x388] sm:$0xff]
    %v227 = vld [vmem:[#allocation2 + $0x390] sm:$0xff]
    %v228 = vld [vmem:[#allocation2 + $0x398] sm:$0xff]
    %v229 = vld [vmem:[#allocation2 + $0x3a0] sm:$0xff]
    %v230 = vld [vmem:[#allocation2 + $0x3a8] sm:$0xff]
    %v231 = vld [vmem:[#allocation2 + $0x3b0] sm:$0xff]
    %v232 = vld [vmem:[#allocation2 + $0x3b8] sm:$0xff]
    %v233 = vld [vmem:[#allocation2 + $0x3c0] sm:$0xff]
    %v234 = vld [vmem:[#allocation2 + $0x3c8] sm:$0xff]
    %v235 = vld [vmem:[#allocation2 + $0x3d0] sm:$0xff]
    %v236 = vld [vmem:[#allocation2 + $0x3d8] sm:$0xff]
    %v237 = vld [vmem:[#allocation2 + $0x3e0] sm:$0xff]
    %v238 = vld [vmem:[#allocation2 + $0x3e8] sm:$0xff]
    %v239 = vld [vmem:[#allocation2 + $0x3f0] sm:$0xff]
    %v240 = vld [vmem:[#allocation2 + $0x3f8] sm:$0xff]
    %v241 = vld [vmem:[#allocation2 + $0x400] sm:$0xff]
    %v242 = vld [vmem:[#allocation2 + $0x408] sm:$0xff]
    %v243 = vld [vmem:[#allocation2 + $0x410] sm:$0xff]
    %v244 = vld [vmem:[#allocation2 + $0x418] sm:$0xff]
    %v245 = vld [vmem:[#allocation2 + $0x420] sm:$0xff]
    %v246 = vld [vmem:[#allocation2 + $0x428] sm:$0xff]
    %v247 = vld [vmem:[#allocation2 + $0x430] sm:$0xff]
    %v248 = vld [vmem:[#allocation2 + $0x438] sm:$0xff]
    %v249 = vld [vmem:[#allocation2 + $0x440] sm:$0xff]
    %v250 = vld [vmem:[#allocation2 + $0x448] sm:$0xff]
    %v251 = vld [vmem:[#allocation2 + $0x450] sm:$0xff]
    %v252 = vld [vmem:[#allocation2 + $0x458] sm:$0xff]
    %v253 = vld [vmem:[#allocation2 + $0x460] sm:$0xff]
    %v254 = vld [vmem:[#allocation2 + $0x468] sm:$0xff]
    %v255 = vld [vmem:[#allocation2 + $0x470] sm:$0xff]
    %v256 = vld [vmem:[#allocation2 + $0x478] sm:$0xff]
    %v257 = vld [vmem:[#allocation2 + $0x480] sm:$0xff]
    %v258 = vld [vmem:[#allocation2 + $0x488] sm:$0xff]
    %v259 = vld [vmem:[#allocation2 + $0x490] sm:$0xff]
    %v260 = vld [vmem:[#allocation2 + $0x498] sm:$0xff]
    %v261 = vld [vmem:[#allocation2 + $0x4a0] sm:$0xff]
    %v262 = vld [vmem:[#allocation2 + $0x4a8] sm:$0xff]
    %v263 = vld [vmem:[#allocation2 + $0x4b0] sm:$0xff]
    %v264 = vld [vmem:[#allocation2 + $0x4b8] sm:$0xff]
    %v265 = vld [vmem:[#allocation2 + $0x4c0] sm:$0xff]
    %v266 = vld [vmem:[#allocation2 + $0x4c8] sm:$0xff]
    %v267 = vld [vmem:[#allocation2 + $0x4d0] sm:$0xff]
    %v268 = vld [vmem:[#allocation2 + $0x4d8] sm:$0xff]
    %v269 = vld [vmem:[#allocation2 + $0x4e0] sm:$0xff]
    %v270 = vld [vmem:[#allocation2 + $0x4e8] sm:$0xff]
    %v271 = vld [vmem:[#allocation2 + $0x4f0] sm:$0xff]
    %v272 = vld [vmem:[#allocation2 + $0x4f8] sm:$0xff]
    %v273 = vld [vmem:[#allocation2 + $0x500] sm:$0xff]
    %v274 = vld [vmem:[#allocation2 + $0x508] sm:$0xff]
    %v275 = vld [vmem:[#allocation2 + $0x510] sm:$0xff]
    %v276 = vld [vmem:[#allocation2 + $0x518] sm:$0xff]
    %v277 = vld [vmem:[#allocation2 + $0x520] sm:$0xff]
    %v278 = vld [vmem:[#allocation2 + $0x528] sm:$0xff]
    %v279 = vld [vmem:[#allocation2 + $0x530] sm:$0xff]
    %v280 = vld [vmem:[#allocation2 + $0x538] sm:$0xff]
    %v281 = vld [vmem:[#allocation2 + $0x540] sm:$0xff]
    %v282 = vld [vmem:[#allocation2 + $0x548] sm:$0xff]
    %v283 = vld [vmem:[#allocation2 + $0x550] sm:$0xff]
    %v284 = vld [vmem:[#allocation2 + $0x558] sm:$0xff]
    %v285 = vld [vmem:[#allocation2 + $0x560] sm:$0xff]
    %v286 = vld [vmem:[#allocation2 + $0x568] sm:$0xff]
    %v287 = vld [vmem:[#allocation2 + $0x570] sm:$0xff]
    %v288 = vld [vmem:[#allocation2 + $0x578] sm:$0xff]
    %v289 = vld [vmem:[#allocation2 + $0x580] sm:$0xff]
    %v290 = vld [vmem:[#allocation2 + $0x588] sm:$0xff]
    %v291 = vld [vmem:[#allocation2 + $0x590] sm:$0xff]
    %v292 = vld [vmem:[#allocation2 + $0x598] sm:$0xff]
    %v293 = vld [vmem:[#allocation2 + $0x5a0] sm:$0xff]
    %v294 = vld [vmem:[#allocation2 + $0x5a8] sm:$0xff]
    %v295 = vld [vmem:[#allocation2 + $0x5b0] sm:$0xff]
    %v296 = vld [vmem:[#allocation2 + $0x5b8] sm:$0xff]
    %v297 = vld [vmem:[#allocation2 + $0x5c0] sm:$0xff]
    %v298 = vld [vmem:[#allocation2 + $0x5c8] sm:$0xff]
    %v299 = vld [vmem:[#allocation2 + $0x5d0] sm:$0xff]
    %v300 = vld [vmem:[#allocation2 + $0x5d8] sm:$0xff]
    %v301 = vld [vmem:[#allocation2 + $0x5e0] sm:$0xff]
    %v302 = vld [vmem:[#allocation2 + $0x5e8] sm:$0xff]
    %v303 = vld [vmem:[#allocation2 + $0x5f0] sm:$0xff]
    %v304 = vld [vmem:[#allocation2 + $0x5f8] sm:$0xff]
    %v305 = vld [vmem:[#allocation2 + $0x600] sm:$0xff]
    %v306 = vld [vmem:[#allocation2 + $0x608] sm:$0xff]
    %v307 = vld [vmem:[#allocation2 + $0x610] sm:$0xff]
    %v308 = vld [vmem:[#allocation2 + $0x618] sm:$0xff]
    %v309 = vld [vmem:[#allocation2 + $0x620] sm:$0xff]
    %v310 = vld [vmem:[#allocation2 + $0x628] sm:$0xff]
    %v311 = vld [vmem:[#allocation2 + $0x630] sm:$0xff]
    %v312 = vld [vmem:[#allocation2 + $0x638] sm:$0xff]
    %v313 = vld [vmem:[#allocation2 + $0x640] sm:$0xff]
    %v314 = vld [vmem:[#allocation2 + $0x648] sm:$0xff]
    %v315 = vld [vmem:[#allocation2 + $0x650] sm:$0xff]
    %v316 = vld [vmem:[#allocation2 + $0x658] sm:$0xff]
    %v317 = vld [vmem:[#allocation2 + $0x660] sm:$0xff]
    %v318 = vld [vmem:[#allocation2 + $0x668] sm:$0xff]
    %v319 = vld [vmem:[#allocation2 + $0x670] sm:$0xff]
    %v320 = vld [vmem:[#allocation2 + $0x678] sm:$0xff]
    %v321 = vld [vmem:[#allocation2 + $0x680] sm:$0xff]
    %v322 = vld [vmem:[#allocation2 + $0x688] sm:$0xff]
    %v323 = vld [vmem:[#allocation2 + $0x690] sm:$0xff]
    %v324 = vld [vmem:[#allocation2 + $0x698] sm:$0xff]
    %v325 = vld [vmem:[#allocation2 + $0x6a0] sm:$0xff]
    %v326 = vld [vmem:[#allocation2 + $0x6a8] sm:$0xff]
    %v327 = vld [vmem:[#allocation2 + $0x6b0] sm:$0xff]
    %v328 = vld [vmem:[#allocation2 + $0x6b8] sm:$0xff]
    %v329 = vld [vmem:[#allocation2 + $0x6c0] sm:$0xff]
    %v330 = vld [vmem:[#allocation2 + $0x6c8] sm:$0xff]
    %v331 = vld [vmem:[#allocation2 + $0x6d0] sm:$0xff]
    %v332 = vld [vmem:[#allocation2 + $0x6d8] sm:$0xff]
    %v333 = vld [vmem:[#allocation2 + $0x6e0] sm:$0xff]
    %v334 = vld [vmem:[#allocation2 + $0x6e8] sm:$0xff]
    %v335 = vld [vmem:[#allocation2 + $0x6f0] sm:$0xff]
    %v336 = vld [vmem:[#allocation2 + $0x6f8] sm:$0xff]
    %v337 = vld [vmem:[#allocation2 + $0x700] sm:$0xff]
    %v338 = vld [vmem:[#allocation2 + $0x708] sm:$0xff]
    %v339 = vld [vmem:[#allocation2 + $0x710] sm:$0xff]
    %v340 = vld [vmem:[#allocation2 + $0x718] sm:$0xff]
    %v341 = vld [vmem:[#allocation2 + $0x720] sm:$0xff]
    %v342 = vld [vmem:[#allocation2 + $0x728] sm:$0xff]
    %v343 = vld [vmem:[#allocation2 + $0x730] sm:$0xff]
    %v344 = vld [vmem:[#allocation2 + $0x738] sm:$0xff]
    %v345 = vld [vmem:[#allocation2 + $0x740] sm:$0xff]
    %v346 = vld [vmem:[#allocation2 + $0x748] sm:$0xff]
    %v347 = vld [vmem:[#allocation2 + $0x750] sm:$0xff]
    %v348 = vld [vmem:[#allocation2 + $0x758] sm:$0xff]
    %v349 = vld [vmem:[#allocation2 + $0x760] sm:$0xff]
    %v350 = vld [vmem:[#allocation2 + $0x768] sm:$0xff]
    %v351 = vld [vmem:[#allocation2 + $0x770] sm:$0xff]
    %v352 = vld [vmem:[#allocation2 + $0x778] sm:$0xff]
    %v353 = vld [vmem:[#allocation2 + $0x780] sm:$0xff]
    %v354 = vld [vmem:[#allocation2 + $0x788] sm:$0xff]
    %v355 = vld [vmem:[#allocation2 + $0x790] sm:$0xff]
    %v356 = vld [vmem:[#allocation2 + $0x798] sm:$0xff]
    %v357 = vld [vmem:[#allocation2 + $0x7a0] sm:$0xff]
    %v358 = vld [vmem:[#allocation2 + $0x7a8] sm:$0xff]
    %v359 = vld [vmem:[#allocation2 + $0x7b0] sm:$0xff]
    %v360 = vld [vmem:[#allocation2 + $0x7b8] sm:$0xff]
    %v361 = vld [vmem:[#allocation2 + $0x7c0] sm:$0xff]
    %v362 = vld [vmem:[#allocation2 + $0x7c8] sm:$0xff]
    %v363 = vld [vmem:[#allocation2 + $0x7d0] sm:$0xff]
    %v364 = vld [vmem:[#allocation2 + $0x7d8] sm:$0xff]
    %v365 = vld [vmem:[#allocation2 + $0x7e0] sm:$0xff]
    %v366 = vld [vmem:[#allocation2 + $0x7e8] sm:$0xff]
    %v367 = vld [vmem:[#allocation2 + $0x7f0] sm:$0xff]
    %v368 = vld [vmem:[#allocation2 + $0x7f8] sm:$0xff]
    %v369 = vld [vmem:[#allocation2 + $0x800] sm:$0xff]
    %v370 = vld [vmem:[#allocation2 + $0x808] sm:$0xff]
    %v371 = vld [vmem:[#allocation2 + $0x810] sm:$0xff]
    %v372 = vld [vmem:[#allocation2 + $0x818] sm:$0xff]
    %v373 = vld [vmem:[#allocation2 + $0x820] sm:$0xff]
    %v374 = vld [vmem:[#allocation2 + $0x828] sm:$0xff]
    %v375 = vld [vmem:[#allocation2 + $0x830] sm:$0xff]
    %v376 = vld [vmem:[#allocation2 + $0x838] sm:$0xff]
    %v377 = vld [vmem:[#allocation2 + $0x840] sm:$0xff]
    %v378 = vld [vmem:[#allocation2 + $0x848] sm:$0xff]
    %v379 = vld [vmem:[#allocation2 + $0x850] sm:$0xff]
    %v380 = vld [vmem:[#allocation2 + $0x858] sm:$0xff]
    %v381 = vld [vmem:[#allocation2 + $0x860] sm:$0xff]
    %v382 = vld [vmem:[#allocation2 + $0x868] sm:$0xff]
    %v383 = vld [vmem:[#allocation2 + $0x870] sm:$0xff]
    %v384 = vld [vmem:[#allocation2 + $0x878] sm:$0xff]
    %v385 = vld [vmem:[#allocation2 + $0x880] sm:$0xff]
    %v386 = vld [vmem:[#allocation2 + $0x888] sm:$0xff]
    %v387 = vld [vmem:[#allocation2 + $0x890] sm:$0xff]
    %v388 = vld [vmem:[#allocation2 + $0x898] sm:$0xff]
    %v389 = vld [vmem:[#allocation2 + $0x8a0] sm:$0xff]
    %v390 = vld [vmem:[#allocation2 + $0x8a8] sm:$0xff]
    %v391 = vld [vmem:[#allocation2 + $0x8b0] sm:$0xff]
    %v392 = vld [vmem:[#allocation2 + $0x8b8] sm:$0xff]
    %v393 = vld [vmem:[#allocation2 + $0x8c0] sm:$0xff]
    %v394 = vld [vmem:[#allocation2 + $0x8c8] sm:$0xff]
    %v395 = vld [vmem:[#allocation2 + $0x8d0] sm:$0xff]
    %v396 = vld [vmem:[#allocation2 + $0x8d8] sm:$0xff]
    %v397 = vld [vmem:[#allocation2 + $0x8e0] sm:$0xff]
    %v398 = vld [vmem:[#allocation2 + $0x8e8] sm:$0xff]
    %v399 = vld [vmem:[#allocation2 + $0x8f0] sm:$0xff]
    %v400 = vld [vmem:[#allocation2 + $0x8f8] sm:$0xff]
    %v402 = vlaneseq
    %v403 = vshrl.u32 %v402, 7
    %v404 = vsub.s32 0, %v403
    %v405 = vrot.slane %v108, %v404
    %v406 = vlaneseq
    %v407 = vshrl.u32 %v406, 7
    %v408 = vsub.s32 1, %v407
    %v409 = vrot.slane %v108, %v408
    %v410 = vlaneseq
    %v411 = vshrl.u32 %v410, 7
    %v412 = vsub.s32 2, %v411
    %v413 = vrot.slane %v108, %v412
    %v414 = vlaneseq
    %v415 = vshrl.u32 %v414, 7
    %v416 = vsub.s32 3, %v415
    %v417 = vrot.slane %v108, %v416
    %v418 = vlaneseq
    %v419 = vshrl.u32 %v418, 7
    %v420 = vsub.s32 4, %v419
    %v421 = vrot.slane %v108, %v420
    %v422 = vlaneseq
    %v423 = vshrl.u32 %v422, 7
    %v424 = vsub.s32 5, %v423
    %v425 = vrot.slane %v108, %v424
    %v433 = vcombine.high %v107, %v107
    %v435 = vunpack.c.l.s4 1966171168
    %v436 = vunpack.c.0.s8 %v435
    %v437 = vlaneseq
    %v438 = vshrl.u32 %v437, 7
    %v439 = vsub.s32 %v436, %v438
    %v440 = vrot.slane %v107, %v439
    %v442 = vunpack.c.l.s4 1966171168
    %v443 = vunpack.c.0.s8 %v442
    %v444 = vlaneseq
    %v445 = vshrl.u32 %v444, 7
    %v446 = vsub.s32 %v443, %v445
    %v447 = vrot.slane %v433, %v446
    %v448 = vcombine.high %v440, %v440
    %v449 = vcombine.high %v447, %v447
    %v451 = vunpack.c.l.s4 1966171168
    %v452 = vunpack.c.0.s8 %v451
    %v453 = vlaneseq
    %v454 = vshrl.u32 %v453, 7
    %v455 = vsub.s32 %v452, %v454
    %v456 = vrot.slane %v440, %v455
    %v458 = vunpack.c.l.s4 1966171168
    %v459 = vunpack.c.0.s8 %v458
    %v460 = vlaneseq
    %v461 = vshrl.u32 %v460, 7
    %v462 = vsub.s32 %v459, %v461
    %v463 = vrot.slane %v447, %v462
    %v465 = vunpack.c.l.s4 1966171168
    %v466 = vunpack.c.0.s8 %v465
    %v467 = vlaneseq
    %v468 = vshrl.u32 %v467, 7
    %v469 = vsub.s32 %v466, %v468
    %v470 = vrot.slane %v448, %v469
    %v472 = vunpack.c.l.s4 1966171168
    %v473 = vunpack.c.0.s8 %v472
    %v474 = vlaneseq
    %v475 = vshrl.u32 %v474, 7
    %v476 = vsub.s32 %v473, %v475
    %v477 = vrot.slane %v449, %v476
    %v478 = vcombine.high %v456, %v456
    %v479 = vcombine.high %v470, %v470
    %v774 = vunpack.c.l.b16 %v113
    %v775 = vunpack.c.h.b16 %v113
    %v776 = vunpack.c.l.b16 %v114
    %v777 = vunpack.c.h.b16 %v114
    %v778 = vunpack.c.l.b16 %v115
    %v779 = vunpack.c.h.b16 %v115
    %v780 = vunpack.c.l.b16 %v116
    %v781 = vunpack.c.h.b16 %v116
    %v782 = vunpack.c.l.b16 %v117
    %v783 = vunpack.c.h.b16 %v117
    %v784 = vunpack.c.l.b16 %v118
    %v785 = vunpack.c.h.b16 %v118
    %v786 = vunpack.c.l.b16 %v119
    %v787 = vunpack.c.h.b16 %v119
    %v788 = vunpack.c.l.b16 %v120
    %v789 = vunpack.c.h.b16 %v120
    %v790 = vunpack.c.l.b16 %v121
    %v791 = vunpack.c.h.b16 %v121
    %v792 = vunpack.c.l.b16 %v122
    %v793 = vunpack.c.h.b16 %v122
    %v794 = vunpack.c.l.b16 %v123
    %v795 = vunpack.c.h.b16 %v123
    %v796 = vunpack.c.l.b16 %v124
    %v797 = vunpack.c.h.b16 %v124
    %v798 = vunpack.c.l.b16 %v125
    %v799 = vunpack.c.h.b16 %v125
    %v800 = vunpack.c.l.b16 %v126
    %v801 = vunpack.c.h.b16 %v126
    %v802 = vunpack.c.l.b16 %v127
    %v803 = vunpack.c.h.b16 %v127
    %v804 = vunpack.c.l.b16 %v128
    %v805 = vunpack.c.h.b16 %v128
    %v806 = vunpack.c.l.b16 %v129
    %v807 = vunpack.c.h.b16 %v129
    %v808 = vunpack.c.l.b16 %v130
    %v809 = vunpack.c.h.b16 %v130
    %v810 = vunpack.c.l.b16 %v131
    %v811 = vunpack.c.h.b16 %v131
    %v812 = vunpack.c.l.b16 %v132
    %v813 = vunpack.c.h.b16 %v132
    %v814 = vunpack.c.l.b16 %v133
    %v815 = vunpack.c.h.b16 %v133
    %v816 = vunpack.c.l.b16 %v134
    %v817 = vunpack.c.h.b16 %v134
    %v818 = vunpack.c.l.b16 %v135
    %v819 = vunpack.c.h.b16 %v135
    %v820 = vunpack.c.l.b16 %v136
    %v821 = vunpack.c.h.b16 %v136
    %v822 = vunpack.c.l.b16 %v137
    %v823 = vunpack.c.h.b16 %v137
    %v824 = vunpack.c.l.b16 %v138
    %v825 = vunpack.c.h.b16 %v138
    %v826 = vunpack.c.l.b16 %v139
    %v827 = vunpack.c.h.b16 %v139
    %v828 = vunpack.c.l.b16 %v140
    %v829 = vunpack.c.h.b16 %v140
    %v830 = vunpack.c.l.b16 %v141
    %v831 = vunpack.c.h.b16 %v141
    %v832 = vunpack.c.l.b16 %v142
    %v833 = vunpack.c.h.b16 %v142
    %v834 = vunpack.c.l.b16 %v143
    %v835 = vunpack.c.h.b16 %v143
    %v836 = vunpack.c.l.b16 %v144
    %v837 = vunpack.c.h.b16 %v144
    %v838 = vunpack.c.l.b16 %v145
    %v839 = vunpack.c.h.b16 %v145
    %v840 = vunpack.c.l.b16 %v146
    %v841 = vunpack.c.h.b16 %v146
    %v842 = vunpack.c.l.b16 %v147
    %v843 = vunpack.c.h.b16 %v147
    %v844 = vunpack.c.l.b16 %v148
    %v845 = vunpack.c.h.b16 %v148
    %v846 = vunpack.c.l.b16 %v149
    %v847 = vunpack.c.h.b16 %v149
    %v848 = vunpack.c.l.b16 %v150
    %v849 = vunpack.c.h.b16 %v150
    %v850 = vunpack.c.l.b16 %v151
    %v851 = vunpack.c.h.b16 %v151
    %v852 = vunpack.c.l.b16 %v152
    %v853 = vunpack.c.h.b16 %v152
    %v854 = vunpack.c.l.b16 %v153
    %v855 = vunpack.c.h.b16 %v153
    %v856 = vunpack.c.l.b16 %v154
    %v857 = vunpack.c.h.b16 %v154
    %v858 = vunpack.c.l.b16 %v155
    %v859 = vunpack.c.h.b16 %v155
    %v860 = vunpack.c.l.b16 %v156
    %v861 = vunpack.c.h.b16 %v156
    %v862 = vunpack.c.l.b16 %v157
    %v863 = vunpack.c.h.b16 %v157
    %v864 = vunpack.c.l.b16 %v158
    %v865 = vunpack.c.h.b16 %v158
    %v866 = vunpack.c.l.b16 %v159
    %v867 = vunpack.c.h.b16 %v159
    %v868 = vunpack.c.l.b16 %v160
    %v869 = vunpack.c.h.b16 %v160
    %v870 = vunpack.c.l.b16 %v161
    %v871 = vunpack.c.h.b16 %v161
    %v872 = vunpack.c.l.b16 %v162
    %v873 = vunpack.c.h.b16 %v162
    %v874 = vunpack.c.l.b16 %v163
    %v875 = vunpack.c.h.b16 %v163
    %v876 = vunpack.c.l.b16 %v164
    %v877 = vunpack.c.h.b16 %v164
    %v878 = vunpack.c.l.b16 %v165
    %v879 = vunpack.c.h.b16 %v165
    %v880 = vunpack.c.l.b16 %v166
    %v881 = vunpack.c.h.b16 %v166
    %v882 = vunpack.c.l.b16 %v167
    %v883 = vunpack.c.h.b16 %v167
    %v884 = vunpack.c.l.b16 %v168
    %v885 = vunpack.c.h.b16 %v168
    %v886 = vunpack.c.l.b16 %v169
    %v887 = vunpack.c.h.b16 %v169
    %v888 = vunpack.c.l.b16 %v170
    %v889 = vunpack.c.h.b16 %v170
    %v890 = vunpack.c.l.b16 %v171
    %v891 = vunpack.c.h.b16 %v171
    %v892 = vunpack.c.l.b16 %v172
    %v893 = vunpack.c.h.b16 %v172
    %v894 = vunpack.c.l.b16 %v173
    %v895 = vunpack.c.h.b16 %v173
    %v896 = vunpack.c.l.b16 %v174
    %v897 = vunpack.c.h.b16 %v174
    %v898 = vunpack.c.l.b16 %v175
    %v899 = vunpack.c.h.b16 %v175
    %v900 = vunpack.c.l.b16 %v176
    %v901 = vunpack.c.h.b16 %v176
    %v902 = vunpack.c.l.b16 %v177
    %v903 = vunpack.c.h.b16 %v177
    %v904 = vunpack.c.l.b16 %v178
    %v905 = vunpack.c.h.b16 %v178
    %v906 = vunpack.c.l.b16 %v179
    %v907 = vunpack.c.h.b16 %v179
    %v908 = vunpack.c.l.b16 %v180
    %v909 = vunpack.c.h.b16 %v180
    %v910 = vunpack.c.l.b16 %v181
    %v911 = vunpack.c.h.b16 %v181
    %v912 = vunpack.c.l.b16 %v182
    %v913 = vunpack.c.h.b16 %v182
    %v914 = vunpack.c.l.b16 %v183
    %v915 = vunpack.c.h.b16 %v183
    %v916 = vunpack.c.l.b16 %v184
    %v917 = vunpack.c.h.b16 %v184
    %v918 = vunpack.c.l.b16 %v185
    %v919 = vunpack.c.h.b16 %v185
    %v920 = vunpack.c.l.b16 %v186
    %v921 = vunpack.c.h.b16 %v186
    %v922 = vunpack.c.l.b16 %v187
    %v923 = vunpack.c.h.b16 %v187
    %v924 = vunpack.c.l.b16 %v188
    %v925 = vunpack.c.h.b16 %v188
    %v926 = vunpack.c.l.b16 %v189
    %v927 = vunpack.c.h.b16 %v189
    %v928 = vunpack.c.l.b16 %v190
    %v929 = vunpack.c.h.b16 %v190
    %v930 = vunpack.c.l.b16 %v191
    %v931 = vunpack.c.h.b16 %v191
    %v932 = vunpack.c.l.b16 %v192
    %v933 = vunpack.c.h.b16 %v192
    %v934 = vunpack.c.l.b16 %v193
    %v935 = vunpack.c.h.b16 %v193
    %v936 = vunpack.c.l.b16 %v194
    %v937 = vunpack.c.h.b16 %v194
    %v938 = vunpack.c.l.b16 %v195
    %v939 = vunpack.c.h.b16 %v195
    %v940 = vunpack.c.l.b16 %v196
    %v941 = vunpack.c.h.b16 %v196
    %v942 = vunpack.c.l.b16 %v197
    %v943 = vunpack.c.h.b16 %v197
    %v944 = vunpack.c.l.b16 %v198
    %v945 = vunpack.c.h.b16 %v198
    %v946 = vunpack.c.l.b16 %v199
    %v947 = vunpack.c.h.b16 %v199
    %v948 = vunpack.c.l.b16 %v200
    %v949 = vunpack.c.h.b16 %v200
    %v950 = vunpack.c.l.b16 %v201
    %v951 = vunpack.c.h.b16 %v201
    %v952 = vunpack.c.l.b16 %v202
    %v953 = vunpack.c.h.b16 %v202
    %v954 = vunpack.c.l.b16 %v203
    %v955 = vunpack.c.h.b16 %v203
    %v956 = vunpack.c.l.b16 %v204
    %v957 = vunpack.c.h.b16 %v204
    %v958 = vunpack.c.l.b16 %v205
    %v959 = vunpack.c.h.b16 %v205
    %v960 = vunpack.c.l.b16 %v206
    %v961 = vunpack.c.h.b16 %v206
    %v962 = vunpack.c.l.b16 %v207
    %v963 = vunpack.c.h.b16 %v207
    %v964 = vunpack.c.l.b16 %v208
    %v965 = vunpack.c.h.b16 %v208
    %v966 = vunpack.c.l.b16 %v209
    %v967 = vunpack.c.h.b16 %v209
    %v968 = vunpack.c.l.b16 %v210
    %v969 = vunpack.c.h.b16 %v210
    %v970 = vunpack.c.l.b16 %v211
    %v971 = vunpack.c.h.b16 %v211
    %v972 = vunpack.c.l.b16 %v212
    %v973 = vunpack.c.h.b16 %v212
    %v974 = vunpack.c.l.b16 %v213
    %v975 = vunpack.c.h.b16 %v213
    %v976 = vunpack.c.l.b16 %v214
    %v977 = vunpack.c.h.b16 %v214
    %v978 = vunpack.c.l.b16 %v215
    %v979 = vunpack.c.h.b16 %v215
    %v980 = vunpack.c.l.b16 %v216
    %v981 = vunpack.c.h.b16 %v216
    %v982 = vunpack.c.l.b16 %v217
    %v983 = vunpack.c.h.b16 %v217
    %v984 = vunpack.c.l.b16 %v218
    %v985 = vunpack.c.h.b16 %v218
    %v986 = vunpack.c.l.b16 %v219
    %v987 = vunpack.c.h.b16 %v219
    %v988 = vunpack.c.l.b16 %v220
    %v989 = vunpack.c.h.b16 %v220
    %v990 = vunpack.c.l.b16 %v221
    %v991 = vunpack.c.h.b16 %v221
    %v992 = vunpack.c.l.b16 %v222
    %v993 = vunpack.c.h.b16 %v222
    %v994 = vunpack.c.l.b16 %v223
    %v995 = vunpack.c.h.b16 %v223
    %v996 = vunpack.c.l.b16 %v224
    %v997 = vunpack.c.h.b16 %v224
    %v998 = vunpack.c.l.b16 %v225
    %v999 = vunpack.c.h.b16 %v225
    %v1000 = vunpack.c.l.b16 %v226
    %v1001 = vunpack.c.h.b16 %v226
    %v1002 = vunpack.c.l.b16 %v227
    %v1003 = vunpack.c.h.b16 %v227
    %v1004 = vunpack.c.l.b16 %v228
    %v1005 = vunpack.c.h.b16 %v228
    %v1006 = vunpack.c.l.b16 %v229
    %v1007 = vunpack.c.h.b16 %v229
    %v1008 = vunpack.c.l.b16 %v230
    %v1009 = vunpack.c.h.b16 %v230
    %v1010 = vunpack.c.l.b16 %v231
    %v1011 = vunpack.c.h.b16 %v231
    %v1012 = vunpack.c.l.b16 %v232
    %v1013 = vunpack.c.h.b16 %v232
    %v1014 = vunpack.c.l.b16 %v233
    %v1015 = vunpack.c.h.b16 %v233
    %v1016 = vunpack.c.l.b16 %v234
    %v1017 = vunpack.c.h.b16 %v234
    %v1018 = vunpack.c.l.b16 %v235
    %v1019 = vunpack.c.h.b16 %v235
    %v1020 = vunpack.c.l.b16 %v236
    %v1021 = vunpack.c.h.b16 %v236
    %v1022 = vunpack.c.l.b16 %v237
    %v1023 = vunpack.c.h.b16 %v237
    %v1024 = vunpack.c.l.b16 %v238
    %v1025 = vunpack.c.h.b16 %v238
    %v1026 = vunpack.c.l.b16 %v239
    %v1027 = vunpack.c.h.b16 %v239
    %v1028 = vunpack.c.l.b16 %v240
    %v1029 = vunpack.c.h.b16 %v240
    %v1030 = vunpack.c.l.b16 %v241
    %v1031 = vunpack.c.h.b16 %v241
    %v1032 = vunpack.c.l.b16 %v242
    %v1033 = vunpack.c.h.b16 %v242
    %v1034 = vunpack.c.l.b16 %v243
    %v1035 = vunpack.c.h.b16 %v243
    %v1036 = vunpack.c.l.b16 %v244
    %v1037 = vunpack.c.h.b16 %v244
    %v1038 = vunpack.c.l.b16 %v245
    %v1039 = vunpack.c.h.b16 %v245
    %v1040 = vunpack.c.l.b16 %v246
    %v1041 = vunpack.c.h.b16 %v246
    %v1042 = vunpack.c.l.b16 %v247
    %v1043 = vunpack.c.h.b16 %v247
    %v1044 = vunpack.c.l.b16 %v248
    %v1045 = vunpack.c.h.b16 %v248
    %v1046 = vunpack.c.l.b16 %v249
    %v1047 = vunpack.c.h.b16 %v249
    %v1048 = vunpack.c.l.b16 %v250
    %v1049 = vunpack.c.h.b16 %v250
    %v1050 = vunpack.c.l.b16 %v251
    %v1051 = vunpack.c.h.b16 %v251
    %v1052 = vunpack.c.l.b16 %v252
    %v1053 = vunpack.c.h.b16 %v252
    %v1054 = vunpack.c.l.b16 %v253
    %v1055 = vunpack.c.h.b16 %v253
    %v1056 = vunpack.c.l.b16 %v254
    %v1057 = vunpack.c.h.b16 %v254
    %v1058 = vunpack.c.l.b16 %v255
    %v1059 = vunpack.c.h.b16 %v255
    %v1060 = vunpack.c.l.b16 %v256
    %v1061 = vunpack.c.h.b16 %v256
    %v1062 = vunpack.c.l.b16 %v257
    %v1063 = vunpack.c.h.b16 %v257
    %v1064 = vunpack.c.l.b16 %v258
    %v1065 = vunpack.c.h.b16 %v258
    %v1066 = vunpack.c.l.b16 %v259
    %v1067 = vunpack.c.h.b16 %v259
    %v1068 = vunpack.c.l.b16 %v260
    %v1069 = vunpack.c.h.b16 %v260
    %v1070 = vunpack.c.l.b16 %v261
    %v1071 = vunpack.c.h.b16 %v261
    %v1072 = vunpack.c.l.b16 %v262
    %v1073 = vunpack.c.h.b16 %v262
    %v1074 = vunpack.c.l.b16 %v263
    %v1075 = vunpack.c.h.b16 %v263
    %v1076 = vunpack.c.l.b16 %v264
    %v1077 = vunpack.c.h.b16 %v264
    %v1078 = vunpack.c.l.b16 %v265
    %v1079 = vunpack.c.h.b16 %v265
    %v1080 = vunpack.c.l.b16 %v266
    %v1081 = vunpack.c.h.b16 %v266
    %v1082 = vunpack.c.l.b16 %v267
    %v1083 = vunpack.c.h.b16 %v267
    %v1084 = vunpack.c.l.b16 %v268
    %v1085 = vunpack.c.h.b16 %v268
    %v1086 = vunpack.c.l.b16 %v269
    %v1087 = vunpack.c.h.b16 %v269
    %v1088 = vunpack.c.l.b16 %v270
    %v1089 = vunpack.c.h.b16 %v270
    %v1090 = vunpack.c.l.b16 %v271
    %v1091 = vunpack.c.h.b16 %v271
    %v1092 = vunpack.c.l.b16 %v272
    %v1093 = vunpack.c.h.b16 %v272
    %v1094 = vunpack.c.l.b16 %v273
    %v1095 = vunpack.c.h.b16 %v273
    %v1096 = vunpack.c.l.b16 %v274
    %v1097 = vunpack.c.h.b16 %v274
    %v1098 = vunpack.c.l.b16 %v275
    %v1099 = vunpack.c.h.b16 %v275
    %v1100 = vunpack.c.l.b16 %v276
    %v1101 = vunpack.c.h.b16 %v276
    %v1102 = vunpack.c.l.b16 %v277
    %v1103 = vunpack.c.h.b16 %v277
    %v1104 = vunpack.c.l.b16 %v278
    %v1105 = vunpack.c.h.b16 %v278
    %v1106 = vunpack.c.l.b16 %v279
    %v1107 = vunpack.c.h.b16 %v279
    %v1108 = vunpack.c.l.b16 %v280
    %v1109 = vunpack.c.h.b16 %v280
    %v1110 = vunpack.c.l.b16 %v281
    %v1111 = vunpack.c.h.b16 %v281
    %v1112 = vunpack.c.l.b16 %v282
    %v1113 = vunpack.c.h.b16 %v282
    %v1114 = vunpack.c.l.b16 %v283
    %v1115 = vunpack.c.h.b16 %v283
    %v1116 = vunpack.c.l.b16 %v284
    %v1117 = vunpack.c.h.b16 %v284
    %v1118 = vunpack.c.l.b16 %v285
    %v1119 = vunpack.c.h.b16 %v285
    %v1120 = vunpack.c.l.b16 %v286
    %v1121 = vunpack.c.h.b16 %v286
    %v1122 = vunpack.c.l.b16 %v287
    %v1123 = vunpack.c.h.b16 %v287
    %v1124 = vunpack.c.l.b16 %v288
    %v1125 = vunpack.c.h.b16 %v288
    %v1126 = vunpack.c.l.b16 %v289
    %v1127 = vunpack.c.h.b16 %v289
    %v1128 = vunpack.c.l.b16 %v290
    %v1129 = vunpack.c.h.b16 %v290
    %v1130 = vunpack.c.l.b16 %v291
    %v1131 = vunpack.c.h.b16 %v291
    %v1132 = vunpack.c.l.b16 %v292
    %v1133 = vunpack.c.h.b16 %v292
    %v1134 = vunpack.c.l.b16 %v293
    %v1135 = vunpack.c.h.b16 %v293
    %v1136 = vunpack.c.l.b16 %v294
    %v1137 = vunpack.c.h.b16 %v294
    %v1138 = vunpack.c.l.b16 %v295
    %v1139 = vunpack.c.h.b16 %v295
    %v1140 = vunpack.c.l.b16 %v296
    %v1141 = vunpack.c.h.b16 %v296
    %v1142 = vunpack.c.l.b16 %v297
    %v1143 = vunpack.c.h.b16 %v297
    %v1144 = vunpack.c.l.b16 %v298
    %v1145 = vunpack.c.h.b16 %v298
    %v1146 = vunpack.c.l.b16 %v299
    %v1147 = vunpack.c.h.b16 %v299
    %v1148 = vunpack.c.l.b16 %v300
    %v1149 = vunpack.c.h.b16 %v300
    %v1150 = vunpack.c.l.b16 %v301
    %v1151 = vunpack.c.h.b16 %v301
    %v1152 = vunpack.c.l.b16 %v302
    %v1153 = vunpack.c.h.b16 %v302
    %v1154 = vunpack.c.l.b16 %v303
    %v1155 = vunpack.c.h.b16 %v303
    %v1156 = vunpack.c.l.b16 %v304
    %v1157 = vunpack.c.h.b16 %v304
    %v1158 = vunpack.c.l.b16 %v305
    %v1159 = vunpack.c.h.b16 %v305
    %v1160 = vunpack.c.l.b16 %v306
    %v1161 = vunpack.c.h.b16 %v306
    %v1162 = vunpack.c.l.b16 %v307
    %v1163 = vunpack.c.h.b16 %v307
    %v1164 = vunpack.c.l.b16 %v308
    %v1165 = vunpack.c.h.b16 %v308
    %v1166 = vunpack.c.l.b16 %v309
    %v1167 = vunpack.c.h.b16 %v309
    %v1168 = vunpack.c.l.b16 %v310
    %v1169 = vunpack.c.h.b16 %v310
    %v1170 = vunpack.c.l.b16 %v311
    %v1171 = vunpack.c.h.b16 %v311
    %v1172 = vunpack.c.l.b16 %v312
    %v1173 = vunpack.c.h.b16 %v312
    %v1174 = vunpack.c.l.b16 %v313
    %v1175 = vunpack.c.h.b16 %v313
    %v1176 = vunpack.c.l.b16 %v314
    %v1177 = vunpack.c.h.b16 %v314
    %v1178 = vunpack.c.l.b16 %v315
    %v1179 = vunpack.c.h.b16 %v315
    %v1180 = vunpack.c.l.b16 %v316
    %v1181 = vunpack.c.h.b16 %v316
    %v1182 = vunpack.c.l.b16 %v317
    %v1183 = vunpack.c.h.b16 %v317
    %v1184 = vunpack.c.l.b16 %v318
    %v1185 = vunpack.c.h.b16 %v318
    %v1186 = vunpack.c.l.b16 %v319
    %v1187 = vunpack.c.h.b16 %v319
    %v1188 = vunpack.c.l.b16 %v320
    %v1189 = vunpack.c.h.b16 %v320
    %v1190 = vunpack.c.l.b16 %v321
    %v1191 = vunpack.c.h.b16 %v321
    %v1192 = vunpack.c.l.b16 %v322
    %v1193 = vunpack.c.h.b16 %v322
    %v1194 = vunpack.c.l.b16 %v323
    %v1195 = vunpack.c.h.b16 %v323
    %v1196 = vunpack.c.l.b16 %v324
    %v1197 = vunpack.c.h.b16 %v324
    %v1198 = vunpack.c.l.b16 %v325
    %v1199 = vunpack.c.h.b16 %v325
    %v1200 = vunpack.c.l.b16 %v326
    %v1201 = vunpack.c.h.b16 %v326
    %v1202 = vunpack.c.l.b16 %v327
    %v1203 = vunpack.c.h.b16 %v327
    %v1204 = vunpack.c.l.b16 %v328
    %v1205 = vunpack.c.h.b16 %v328
    %v1206 = vunpack.c.l.b16 %v329
    %v1207 = vunpack.c.h.b16 %v329
    %v1208 = vunpack.c.l.b16 %v330
    %v1209 = vunpack.c.h.b16 %v330
    %v1210 = vunpack.c.l.b16 %v331
    %v1211 = vunpack.c.h.b16 %v331
    %v1212 = vunpack.c.l.b16 %v332
    %v1213 = vunpack.c.h.b16 %v332
    %v1214 = vunpack.c.l.b16 %v333
    %v1215 = vunpack.c.h.b16 %v333
    %v1216 = vunpack.c.l.b16 %v334
    %v1217 = vunpack.c.h.b16 %v334
    %v1218 = vunpack.c.l.b16 %v335
    %v1219 = vunpack.c.h.b16 %v335
    %v1220 = vunpack.c.l.b16 %v336
    %v1221 = vunpack.c.h.b16 %v336
    %v1222 = vunpack.c.l.b16 %v337
    %v1223 = vunpack.c.h.b16 %v337
    %v1224 = vunpack.c.l.b16 %v338
    %v1225 = vunpack.c.h.b16 %v338
    %v1226 = vunpack.c.l.b16 %v339
    %v1227 = vunpack.c.h.b16 %v339
    %v1228 = vunpack.c.l.b16 %v340
    %v1229 = vunpack.c.h.b16 %v340
    %v1230 = vunpack.c.l.b16 %v341
    %v1231 = vunpack.c.h.b16 %v341
    %v1232 = vunpack.c.l.b16 %v342
    %v1233 = vunpack.c.h.b16 %v342
    %v1234 = vunpack.c.l.b16 %v343
    %v1235 = vunpack.c.h.b16 %v343
    %v1236 = vunpack.c.l.b16 %v344
    %v1237 = vunpack.c.h.b16 %v344
    %v1238 = vunpack.c.l.b16 %v345
    %v1239 = vunpack.c.h.b16 %v345
    %v1240 = vunpack.c.l.b16 %v346
    %v1241 = vunpack.c.h.b16 %v346
    %v1242 = vunpack.c.l.b16 %v347
    %v1243 = vunpack.c.h.b16 %v347
    %v1244 = vunpack.c.l.b16 %v348
    %v1245 = vunpack.c.h.b16 %v348
    %v1246 = vunpack.c.l.b16 %v349
    %v1247 = vunpack.c.h.b16 %v349
    %v1248 = vunpack.c.l.b16 %v350
    %v1249 = vunpack.c.h.b16 %v350
    %v1250 = vunpack.c.l.b16 %v351
    %v1251 = vunpack.c.h.b16 %v351
    %v1252 = vunpack.c.l.b16 %v352
    %v1253 = vunpack.c.h.b16 %v352
    %v1254 = vunpack.c.l.b16 %v353
    %v1255 = vunpack.c.h.b16 %v353
    %v1256 = vunpack.c.l.b16 %v354
    %v1257 = vunpack.c.h.b16 %v354
    %v1258 = vunpack.c.l.b16 %v355
    %v1259 = vunpack.c.h.b16 %v355
    %v1260 = vunpack.c.l.b16 %v356
    %v1261 = vunpack.c.h.b16 %v356
    %v1262 = vunpack.c.l.b16 %v357
    %v1263 = vunpack.c.h.b16 %v357
    %v1264 = vunpack.c.l.b16 %v358
    %v1265 = vunpack.c.h.b16 %v358
    %v1266 = vunpack.c.l.b16 %v359
    %v1267 = vunpack.c.h.b16 %v359
    %v1268 = vunpack.c.l.b16 %v360
    %v1269 = vunpack.c.h.b16 %v360
    %v1270 = vunpack.c.l.b16 %v361
    %v1271 = vunpack.c.h.b16 %v361
    %v1272 = vunpack.c.l.b16 %v362
    %v1273 = vunpack.c.h.b16 %v362
    %v1274 = vunpack.c.l.b16 %v363
    %v1275 = vunpack.c.h.b16 %v363
    %v1276 = vunpack.c.l.b16 %v364
    %v1277 = vunpack.c.h.b16 %v364
    %v1278 = vunpack.c.l.b16 %v365
    %v1279 = vunpack.c.h.b16 %v365
    %v1280 = vunpack.c.l.b16 %v366
    %v1281 = vunpack.c.h.b16 %v366
    %v1282 = vunpack.c.l.b16 %v367
    %v1283 = vunpack.c.h.b16 %v367
    %v1284 = vunpack.c.l.b16 %v368
    %v1285 = vunpack.c.h.b16 %v368
    %v1286 = vunpack.c.l.b16 %v369
    %v1287 = vunpack.c.h.b16 %v369
    %v1288 = vunpack.c.l.b16 %v370
    %v1289 = vunpack.c.h.b16 %v370
    %v1290 = vunpack.c.l.b16 %v371
    %v1291 = vunpack.c.h.b16 %v371
    %v1292 = vunpack.c.l.b16 %v372
    %v1293 = vunpack.c.h.b16 %v372
    %v1294 = vunpack.c.l.b16 %v373
    %v1295 = vunpack.c.h.b16 %v373
    %v1296 = vunpack.c.l.b16 %v374
    %v1297 = vunpack.c.h.b16 %v374
    %v1298 = vunpack.c.l.b16 %v375
    %v1299 = vunpack.c.h.b16 %v375
    %v1300 = vunpack.c.l.b16 %v376
    %v1301 = vunpack.c.h.b16 %v376
    %v1302 = vunpack.c.l.b16 %v377
    %v1303 = vunpack.c.h.b16 %v377
    %v1304 = vunpack.c.l.b16 %v378
    %v1305 = vunpack.c.h.b16 %v378
    %v1306 = vunpack.c.l.b16 %v379
    %v1307 = vunpack.c.h.b16 %v379
    %v1308 = vunpack.c.l.b16 %v380
    %v1309 = vunpack.c.h.b16 %v380
    %v1310 = vunpack.c.l.b16 %v381
    %v1311 = vunpack.c.h.b16 %v381
    %v1312 = vunpack.c.l.b16 %v382
    %v1313 = vunpack.c.h.b16 %v382
    %v1314 = vunpack.c.l.b16 %v383
    %v1315 = vunpack.c.h.b16 %v383
    %v1316 = vunpack.c.l.b16 %v384
    %v1317 = vunpack.c.h.b16 %v384
    %v1318 = vunpack.c.l.b16 %v385
    %v1319 = vunpack.c.h.b16 %v385
    %v1320 = vunpack.c.l.b16 %v386
    %v1321 = vunpack.c.h.b16 %v386
    %v1322 = vunpack.c.l.b16 %v387
    %v1323 = vunpack.c.h.b16 %v387
    %v1324 = vunpack.c.l.b16 %v388
    %v1325 = vunpack.c.h.b16 %v388
    %v1326 = vunpack.c.l.b16 %v389
    %v1327 = vunpack.c.h.b16 %v389
    %v1328 = vunpack.c.l.b16 %v390
    %v1329 = vunpack.c.h.b16 %v390
    %v1330 = vunpack.c.l.b16 %v391
    %v1331 = vunpack.c.h.b16 %v391
    %v1332 = vunpack.c.l.b16 %v392
    %v1333 = vunpack.c.h.b16 %v392
    %v1334 = vunpack.c.l.b16 %v393
    %v1335 = vunpack.c.h.b16 %v393
    %v1336 = vunpack.c.l.b16 %v394
    %v1337 = vunpack.c.h.b16 %v394
    %v1338 = vunpack.c.l.b16 %v395
    %v1339 = vunpack.c.h.b16 %v395
    %v1340 = vunpack.c.l.b16 %v396
    %v1341 = vunpack.c.h.b16 %v396
    %v1342 = vunpack.c.l.b16 %v397
    %v1343 = vunpack.c.h.b16 %v397
    %v1344 = vunpack.c.l.b16 %v398
    %v1345 = vunpack.c.h.b16 %v398
    %v1346 = vunpack.c.l.b16 %v399
    %v1347 = vunpack.c.h.b16 %v399
    %v1348 = vunpack.c.l.b16 %v400
    %v1349 = vunpack.c.h.b16 %v400
    %v1350 = vpack.c.b16 %v780, %v774
    %v1351 = vpack.c.b16 %v781, %v775
    %v1352 = vpack.c.b16 %v782, %v776
    %v1353 = vpack.c.b16 %v783, %v777
    %v1354 = vpack.c.b16 %v784, %v778
    %v1355 = vpack.c.b16 %v785, %v779
    %v1356 = vpack.c.b16 %v792, %v786
    %v1357 = vpack.c.b16 %v793, %v787
    %v1358 = vpack.c.b16 %v794, %v788
    %v1359 = vpack.c.b16 %v795, %v789
    %v1360 = vpack.c.b16 %v796, %v790
    %v1361 = vpack.c.b16 %v797, %v791
    %v1362 = vpack.c.b16 %v804, %v798
    %v1363 = vpack.c.b16 %v805, %v799
    %v1364 = vpack.c.b16 %v806, %v800
    %v1365 = vpack.c.b16 %v807, %v801
    %v1366 = vpack.c.b16 %v808, %v802
    %v1367 = vpack.c.b16 %v809, %v803
    %v1368 = vpack.c.b16 %v816, %v810
    %v1369 = vpack.c.b16 %v817, %v811
    %v1370 = vpack.c.b16 %v818, %v812
    %v1371 = vpack.c.b16 %v819, %v813
    %v1372 = vpack.c.b16 %v820, %v814
    %v1373 = vpack.c.b16 %v821, %v815
    %v1374 = vpack.c.b16 %v828, %v822
    %v1375 = vpack.c.b16 %v829, %v823
    %v1376 = vpack.c.b16 %v830, %v824
    %v1377 = vpack.c.b16 %v831, %v825
    %v1378 = vpack.c.b16 %v832, %v826
    %v1379 = vpack.c.b16 %v833, %v827
    %v1380 = vpack.c.b16 %v840, %v834
    %v1381 = vpack.c.b16 %v841, %v835
    %v1382 = vpack.c.b16 %v842, %v836
    %v1383 = vpack.c.b16 %v843, %v837
    %v1384 = vpack.c.b16 %v844, %v838
    %v1385 = vpack.c.b16 %v845, %v839
    %v1386 = vpack.c.b16 %v852, %v846
    %v1387 = vpack.c.b16 %v853, %v847
    %v1388 = vpack.c.b16 %v854, %v848
    %v1389 = vpack.c.b16 %v855, %v849
    %v1390 = vpack.c.b16 %v856, %v850
    %v1391 = vpack.c.b16 %v857, %v851
    %v1392 = vpack.c.b16 %v864, %v858
    %v1393 = vpack.c.b16 %v865, %v859
    %v1394 = vpack.c.b16 %v866, %v860
    %v1395 = vpack.c.b16 %v867, %v861
    %v1396 = vpack.c.b16 %v868, %v862
    %v1397 = vpack.c.b16 %v869, %v863
    %v1398 = vpack.c.b16 %v876, %v870
    %v1399 = vpack.c.b16 %v877, %v871
    %v1400 = vpack.c.b16 %v878, %v872
    %v1401 = vpack.c.b16 %v879, %v873
    %v1402 = vpack.c.b16 %v880, %v874
    %v1403 = vpack.c.b16 %v881, %v875
    %v1404 = vpack.c.b16 %v888, %v882
    %v1405 = vpack.c.b16 %v889, %v883
    %v1406 = vpack.c.b16 %v890, %v884
    %v1407 = vpack.c.b16 %v891, %v885
    %v1408 = vpack.c.b16 %v892, %v886
    %v1409 = vpack.c.b16 %v893, %v887
    %v1410 = vpack.c.b16 %v900, %v894
    %v1411 = vpack.c.b16 %v901, %v895
    %v1412 = vpack.c.b16 %v902, %v896
    %v1413 = vpack.c.b16 %v903, %v897
    %v1414 = vpack.c.b16 %v904, %v898
    %v1415 = vpack.c.b16 %v905, %v899
    %v1416 = vpack.c.b16 %v912, %v906
    %v1417 = vpack.c.b16 %v913, %v907
    %v1418 = vpack.c.b16 %v914, %v908
    %v1419 = vpack.c.b16 %v915, %v909
    %v1420 = vpack.c.b16 %v916, %v910
    %v1421 = vpack.c.b16 %v917, %v911
    %v1422 = vpack.c.b16 %v924, %v918
    %v1423 = vpack.c.b16 %v925, %v919
    %v1424 = vpack.c.b16 %v926, %v920
    %v1425 = vpack.c.b16 %v927, %v921
    %v1426 = vpack.c.b16 %v928, %v922
    %v1427 = vpack.c.b16 %v929, %v923
    %v1428 = vpack.c.b16 %v936, %v930
    %v1429 = vpack.c.b16 %v937, %v931
    %v1430 = vpack.c.b16 %v938, %v932
    %v1431 = vpack.c.b16 %v939, %v933
    %v1432 = vpack.c.b16 %v940, %v934
    %v1433 = vpack.c.b16 %v941, %v935
    %v1434 = vpack.c.b16 %v948, %v942
    %v1435 = vpack.c.b16 %v949, %v943
    %v1436 = vpack.c.b16 %v950, %v944
    %v1437 = vpack.c.b16 %v951, %v945
    %v1438 = vpack.c.b16 %v952, %v946
    %v1439 = vpack.c.b16 %v953, %v947
    %v1440 = vpack.c.b16 %v960, %v954
    %v1441 = vpack.c.b16 %v961, %v955
    %v1442 = vpack.c.b16 %v962, %v956
    %v1443 = vpack.c.b16 %v963, %v957
    %v1444 = vpack.c.b16 %v964, %v958
    %v1445 = vpack.c.b16 %v965, %v959
    %v1446 = vpack.c.b16 %v972, %v966
    %v1447 = vpack.c.b16 %v973, %v967
    %v1448 = vpack.c.b16 %v974, %v968
    %v1449 = vpack.c.b16 %v975, %v969
    %v1450 = vpack.c.b16 %v976, %v970
    %v1451 = vpack.c.b16 %v977, %v971
    %v1452 = vpack.c.b16 %v984, %v978
    %v1453 = vpack.c.b16 %v985, %v979
    %v1454 = vpack.c.b16 %v986, %v980
    %v1455 = vpack.c.b16 %v987, %v981
    %v1456 = vpack.c.b16 %v988, %v982
    %v1457 = vpack.c.b16 %v989, %v983
    %v1458 = vpack.c.b16 %v996, %v990
    %v1459 = vpack.c.b16 %v997, %v991
    %v1460 = vpack.c.b16 %v998, %v992
    %v1461 = vpack.c.b16 %v999, %v993
    %v1462 = vpack.c.b16 %v1000, %v994
    %v1463 = vpack.c.b16 %v1001, %v995
    %v1464 = vpack.c.b16 %v1008, %v1002
    %v1465 = vpack.c.b16 %v1009, %v1003
    %v1466 = vpack.c.b16 %v1010, %v1004
    %v1467 = vpack.c.b16 %v1011, %v1005
    %v1468 = vpack.c.b16 %v1012, %v1006
    %v1469 = vpack.c.b16 %v1013, %v1007
    %v1470 = vpack.c.b16 %v1020, %v1014
    %v1471 = vpack.c.b16 %v1021, %v1015
    %v1472 = vpack.c.b16 %v1022, %v1016
    %v1473 = vpack.c.b16 %v1023, %v1017
    %v1474 = vpack.c.b16 %v1024, %v1018
    %v1475 = vpack.c.b16 %v1025, %v1019
    %v1476 = vpack.c.b16 %v1032, %v1026
    %v1477 = vpack.c.b16 %v1033, %v1027
    %v1478 = vpack.c.b16 %v1034, %v1028
    %v1479 = vpack.c.b16 %v1035, %v1029
    %v1480 = vpack.c.b16 %v1036, %v1030
    %v1481 = vpack.c.b16 %v1037, %v1031
    %v1482 = vpack.c.b16 %v1044, %v1038
    %v1483 = vpack.c.b16 %v1045, %v1039
    %v1484 = vpack.c.b16 %v1046, %v1040
    %v1485 = vpack.c.b16 %v1047, %v1041
    %v1486 = vpack.c.b16 %v1048, %v1042
    %v1487 = vpack.c.b16 %v1049, %v1043
    %v1488 = vpack.c.b16 %v1056, %v1050
    %v1489 = vpack.c.b16 %v1057, %v1051
    %v1490 = vpack.c.b16 %v1058, %v1052
    %v1491 = vpack.c.b16 %v1059, %v1053
    %v1492 = vpack.c.b16 %v1060, %v1054
    %v1493 = vpack.c.b16 %v1061, %v1055
    %v1494 = vpack.c.b16 %v1068, %v1062
    %v1495 = vpack.c.b16 %v1069, %v1063
    %v1496 = vpack.c.b16 %v1070, %v1064
    %v1497 = vpack.c.b16 %v1071, %v1065
    %v1498 = vpack.c.b16 %v1072, %v1066
    %v1499 = vpack.c.b16 %v1073, %v1067
    %v1500 = vpack.c.b16 %v1080, %v1074
    %v1501 = vpack.c.b16 %v1081, %v1075
    %v1502 = vpack.c.b16 %v1082, %v1076
    %v1503 = vpack.c.b16 %v1083, %v1077
    %v1504 = vpack.c.b16 %v1084, %v1078
    %v1505 = vpack.c.b16 %v1085, %v1079
    %v1506 = vpack.c.b16 %v1092, %v1086
    %v1507 = vpack.c.b16 %v1093, %v1087
    %v1508 = vpack.c.b16 %v1094, %v1088
    %v1509 = vpack.c.b16 %v1095, %v1089
    %v1510 = vpack.c.b16 %v1096, %v1090
    %v1511 = vpack.c.b16 %v1097, %v1091
    %v1512 = vpack.c.b16 %v1104, %v1098
    %v1513 = vpack.c.b16 %v1105, %v1099
    %v1514 = vpack.c.b16 %v1106, %v1100
    %v1515 = vpack.c.b16 %v1107, %v1101
    %v1516 = vpack.c.b16 %v1108, %v1102
    %v1517 = vpack.c.b16 %v1109, %v1103
    %v1518 = vpack.c.b16 %v1116, %v1110
    %v1519 = vpack.c.b16 %v1117, %v1111
    %v1520 = vpack.c.b16 %v1118, %v1112
    %v1521 = vpack.c.b16 %v1119, %v1113
    %v1522 = vpack.c.b16 %v1120, %v1114
    %v1523 = vpack.c.b16 %v1121, %v1115
    %v1524 = vpack.c.b16 %v1128, %v1122
    %v1525 = vpack.c.b16 %v1129, %v1123
    %v1526 = vpack.c.b16 %v1130, %v1124
    %v1527 = vpack.c.b16 %v1131, %v1125
    %v1528 = vpack.c.b16 %v1132, %v1126
    %v1529 = vpack.c.b16 %v1133, %v1127
    %v1530 = vpack.c.b16 %v1140, %v1134
    %v1531 = vpack.c.b16 %v1141, %v1135
    %v1532 = vpack.c.b16 %v1142, %v1136
    %v1533 = vpack.c.b16 %v1143, %v1137
    %v1534 = vpack.c.b16 %v1144, %v1138
    %v1535 = vpack.c.b16 %v1145, %v1139
    %v1536 = vpack.c.b16 %v1152, %v1146
    %v1537 = vpack.c.b16 %v1153, %v1147
    %v1538 = vpack.c.b16 %v1154, %v1148
    %v1539 = vpack.c.b16 %v1155, %v1149
    %v1540 = vpack.c.b16 %v1156, %v1150
    %v1541 = vpack.c.b16 %v1157, %v1151
    %v1542 = vpack.c.b16 %v1164, %v1158
    %v1543 = vpack.c.b16 %v1165, %v1159
    %v1544 = vpack.c.b16 %v1166, %v1160
    %v1545 = vpack.c.b16 %v1167, %v1161
    %v1546 = vpack.c.b16 %v1168, %v1162
    %v1547 = vpack.c.b16 %v1169, %v1163
    %v1548 = vpack.c.b16 %v1176, %v1170
    %v1549 = vpack.c.b16 %v1177, %v1171
    %v1550 = vpack.c.b16 %v1178, %v1172
    %v1551 = vpack.c.b16 %v1179, %v1173
    %v1552 = vpack.c.b16 %v1180, %v1174
    %v1553 = vpack.c.b16 %v1181, %v1175
    %v1554 = vpack.c.b16 %v1188, %v1182
    %v1555 = vpack.c.b16 %v1189, %v1183
    %v1556 = vpack.c.b16 %v1190, %v1184
    %v1557 = vpack.c.b16 %v1191, %v1185
    %v1558 = vpack.c.b16 %v1192, %v1186
    %v1559 = vpack.c.b16 %v1193, %v1187
    %v1560 = vpack.c.b16 %v1200, %v1194
    %v1561 = vpack.c.b16 %v1201, %v1195
    %v1562 = vpack.c.b16 %v1202, %v1196
    %v1563 = vpack.c.b16 %v1203, %v1197
    %v1564 = vpack.c.b16 %v1204, %v1198
    %v1565 = vpack.c.b16 %v1205, %v1199
    %v1566 = vpack.c.b16 %v1212, %v1206
    %v1567 = vpack.c.b16 %v1213, %v1207
    %v1568 = vpack.c.b16 %v1214, %v1208
    %v1569 = vpack.c.b16 %v1215, %v1209
    %v1570 = vpack.c.b16 %v1216, %v1210
    %v1571 = vpack.c.b16 %v1217, %v1211
    %v1572 = vpack.c.b16 %v1224, %v1218
    %v1573 = vpack.c.b16 %v1225, %v1219
    %v1574 = vpack.c.b16 %v1226, %v1220
    %v1575 = vpack.c.b16 %v1227, %v1221
    %v1576 = vpack.c.b16 %v1228, %v1222
    %v1577 = vpack.c.b16 %v1229, %v1223
    %v1578 = vpack.c.b16 %v1236, %v1230
    %v1579 = vpack.c.b16 %v1237, %v1231
    %v1580 = vpack.c.b16 %v1238, %v1232
    %v1581 = vpack.c.b16 %v1239, %v1233
    %v1582 = vpack.c.b16 %v1240, %v1234
    %v1583 = vpack.c.b16 %v1241, %v1235
    %v1584 = vpack.c.b16 %v1248, %v1242
    %v1585 = vpack.c.b16 %v1249, %v1243
    %v1586 = vpack.c.b16 %v1250, %v1244
    %v1587 = vpack.c.b16 %v1251, %v1245
    %v1588 = vpack.c.b16 %v1252, %v1246
    %v1589 = vpack.c.b16 %v1253, %v1247
    %v1590 = vpack.c.b16 %v1260, %v1254
    %v1591 = vpack.c.b16 %v1261, %v1255
    %v1592 = vpack.c.b16 %v1262, %v1256
    %v1593 = vpack.c.b16 %v1263, %v1257
    %v1594 = vpack.c.b16 %v1264, %v1258
    %v1595 = vpack.c.b16 %v1265, %v1259
    %v1596 = vpack.c.b16 %v1272, %v1266
    %v1597 = vpack.c.b16 %v1273, %v1267
    %v1598 = vpack.c.b16 %v1274, %v1268
    %v1599 = vpack.c.b16 %v1275, %v1269
    %v1600 = vpack.c.b16 %v1276, %v1270
    %v1601 = vpack.c.b16 %v1277, %v1271
    %v1602 = vpack.c.b16 %v1284, %v1278
    %v1603 = vpack.c.b16 %v1285, %v1279
    %v1604 = vpack.c.b16 %v1286, %v1280
    %v1605 = vpack.c.b16 %v1287, %v1281
    %v1606 = vpack.c.b16 %v1288, %v1282
    %v1607 = vpack.c.b16 %v1289, %v1283
    %v1608 = vpack.c.b16 %v1296, %v1290
    %v1609 = vpack.c.b16 %v1297, %v1291
    %v1610 = vpack.c.b16 %v1298, %v1292
    %v1611 = vpack.c.b16 %v1299, %v1293
    %v1612 = vpack.c.b16 %v1300, %v1294
    %v1613 = vpack.c.b16 %v1301, %v1295
    %v1614 = vpack.c.b16 %v1308, %v1302
    %v1615 = vpack.c.b16 %v1309, %v1303
    %v1616 = vpack.c.b16 %v1310, %v1304
    %v1617 = vpack.c.b16 %v1311, %v1305
    %v1618 = vpack.c.b16 %v1312, %v1306
    %v1619 = vpack.c.b16 %v1313, %v1307
    %v1620 = vpack.c.b16 %v1320, %v1314
    %v1621 = vpack.c.b16 %v1321, %v1315
    %v1622 = vpack.c.b16 %v1322, %v1316
    %v1623 = vpack.c.b16 %v1323, %v1317
    %v1624 = vpack.c.b16 %v1324, %v1318
    %v1625 = vpack.c.b16 %v1325, %v1319
    %v1626 = vpack.c.b16 %v1332, %v1326
    %v1627 = vpack.c.b16 %v1333, %v1327
    %v1628 = vpack.c.b16 %v1334, %v1328
    %v1629 = vpack.c.b16 %v1335, %v1329
    %v1630 = vpack.c.b16 %v1336, %v1330
    %v1631 = vpack.c.b16 %v1337, %v1331
    %v1632 = vpack.c.b16 %v1344, %v1338
    %v1633 = vpack.c.b16 %v1345, %v1339
    %v1634 = vpack.c.b16 %v1346, %v1340
    %v1635 = vpack.c.b16 %v1347, %v1341
    %v1636 = vpack.c.b16 %v1348, %v1342
    %v1637 = vpack.c.b16 %v1349, %v1343
    %1926 = vmatprep.subr.bf16.mxu0 %v1393
    %1927 = vmatpush1.bf16.msra.mxu0 %v1392
    %1928 = vmatprep.subr.bf16.mxu0 %v1387
    %1929 = vmatpush1.bf16.msra.mxu0 %v1386
    %1930 = vmatprep.subr.bf16.mxu0 %v1381
    %1931 = vmatpush1.bf16.msra.mxu0 %v1380
    %1932 = vmatprep.subr.bf16.mxu0 %v1375
    %1933 = vmatpush1.bf16.msra.mxu0 %v1374
    %1934 = vmatprep.subr.bf16.mxu0 %v1369
    %1935 = vmatpush1.bf16.msra.mxu0 %v1368
    %1936 = vmatprep.subr.bf16.mxu0 %v1363
    %1937 = vmatpush1.bf16.msra.mxu0 %v1362
    %1938 = vmatprep.subr.bf16.mxu0 %v1357
    %1939 = vmatpush1.bf16.msra.mxu0 %v1356
    %1940 = vmatprep.subr.bf16.mxu0 %v1351
    %1941 = vmatpush1.bf16.msra.mxu0 %v1350
    %1942 = vmatprep.subr.bf16.mxu0 %v1441
    %1943 = vmatpush2.bf16.msra.mxu0 %v1440
    %1944 = vmatprep.subr.bf16.mxu0 %v1435
    %1945 = vmatpush2.bf16.msra.mxu0 %v1434
    %1946 = vmatprep.subr.bf16.mxu0 %v1429
    %1947 = vmatpush2.bf16.msra.mxu0 %v1428
    %1948 = vmatprep.subr.bf16.mxu0 %v1423
    %1949 = vmatpush2.bf16.msra.mxu0 %v1422
    %1950 = vmatprep.subr.bf16.mxu0 %v1417
    %1951 = vmatpush2.bf16.msra.mxu0 %v1416
    %1952 = vmatprep.subr.bf16.mxu0 %v1411
    %1953 = vmatpush2.bf16.msra.mxu0 %v1410
    %1954 = vmatprep.subr.bf16.mxu0 %v1405
    %1955 = vmatpush2.bf16.msra.mxu0 %v1404
    %1956 = vmatprep.subr.bf16.mxu0 %v1399
    %1957 = vmatpush2.bf16.msra.mxu0 %v1398
    %1958 = vmatprep.mubr.bf16.mxu0 %v470
    %1959 = vmatmul.mubr.bf16.gmra.mxu0 %v456
    %v1960 = vpop.f32.mrf.mxu0
    %v1961 = vadd.f32 %v405, %v1960
    %v1962 = vpop.f32.mrf.mxu0
    %v1963 = vadd.f32 %v409, %v1962
    %v1964 = vpop.f32.mrf.mxu0
    %v1965 = vpop.f32.mrf.mxu0
    %1966 = vdwg.mxu0
    %1967 = vmatprep.subr.bf16.mxu0 %v1489
    %1968 = vmatpush1.bf16.msra.mxu0 %v1488
    %1969 = vmatprep.subr.bf16.mxu0 %v1483
    %1970 = vmatpush1.bf16.msra.mxu0 %v1482
    %1971 = vmatprep.subr.bf16.mxu0 %v1477
    %1972 = vmatpush1.bf16.msra.mxu0 %v1476
    %1973 = vmatprep.subr.bf16.mxu0 %v1471
    %1974 = vmatpush1.bf16.msra.mxu0 %v1470
    %1975 = vmatprep.subr.bf16.mxu0 %v1465
    %1976 = vmatpush1.bf16.msra.mxu0 %v1464
    %1977 = vmatprep.subr.bf16.mxu0 %v1459
    %1978 = vmatpush1.bf16.msra.mxu0 %v1458
    %1979 = vmatprep.subr.bf16.mxu0 %v1453
    %1980 = vmatpush1.bf16.msra.mxu0 %v1452
    %1981 = vmatprep.subr.bf16.mxu0 %v1447
    %1982 = vmatpush1.bf16.msra.mxu0 %v1446
    %1983 = vmatprep.subr.bf16.mxu0 %v1537
    %1984 = vmatpush2.bf16.msra.mxu0 %v1536
    %1985 = vmatprep.subr.bf16.mxu0 %v1531
    %1986 = vmatpush2.bf16.msra.mxu0 %v1530
    %1987 = vmatprep.subr.bf16.mxu0 %v1525
    %1988 = vmatpush2.bf16.msra.mxu0 %v1524
    %1989 = vmatprep.subr.bf16.mxu0 %v1519
    %1990 = vmatpush2.bf16.msra.mxu0 %v1518
    %1991 = vmatprep.subr.bf16.mxu0 %v1513
    %1992 = vmatpush2.bf16.msra.mxu0 %v1512
    %1993 = vmatprep.subr.bf16.mxu0 %v1507
    %1994 = vmatpush2.bf16.msra.mxu0 %v1506
    %1995 = vmatprep.subr.bf16.mxu0 %v1501
    %1996 = vmatpush2.bf16.msra.mxu0 %v1500
    %1997 = vmatprep.subr.bf16.mxu0 %v1495
    %1998 = vmatpush2.bf16.msra.mxu0 %v1494
    %1999 = vmatprep.mubr.bf16.mxu0 %v479
    %2000 = vmatmul.mubr.bf16.gmra.mxu0 %v478
    %v2001 = vpop.f32.mrf.mxu0
    %v2002 = vadd.f32 %v1961, %v2001
    %v2003 = vpop.f32.mrf.mxu0
    %v2004 = vadd.f32 %v1963, %v2003
    %v2005 = vpop.f32.mrf.mxu0
    %v2006 = vpop.f32.mrf.mxu0
    %2007 = vdwg.mxu0
    %2008 = vmatprep.subr.bf16.mxu0 %v1585
    %2009 = vmatpush1.bf16.msra.mxu0 %v1584
    %2010 = vmatprep.subr.bf16.mxu0 %v1579
    %2011 = vmatpush1.bf16.msra.mxu0 %v1578
    %2012 = vmatprep.subr.bf16.mxu0 %v1573
    %2013 = vmatpush1.bf16.msra.mxu0 %v1572
    %2014 = vmatprep.subr.bf16.mxu0 %v1567
    %2015 = vmatpush1.bf16.msra.mxu0 %v1566
    %2016 = vmatprep.subr.bf16.mxu0 %v1561
    %2017 = vmatpush1.bf16.msra.mxu0 %v1560
    %2018 = vmatprep.subr.bf16.mxu0 %v1555
    %2019 = vmatpush1.bf16.msra.mxu0 %v1554
    %2020 = vmatprep.subr.bf16.mxu0 %v1549
    %2021 = vmatpush1.bf16.msra.mxu0 %v1548
    %2022 = vmatprep.subr.bf16.mxu0 %v1543
    %2023 = vmatpush1.bf16.msra.mxu0 %v1542
    %2024 = vmatprep.subr.bf16.mxu0 %v1633
    %2025 = vmatpush2.bf16.msra.mxu0 %v1632
    %2026 = vmatprep.subr.bf16.mxu0 %v1627
    %2027 = vmatpush2.bf16.msra.mxu0 %v1626
    %2028 = vmatprep.subr.bf16.mxu0 %v1621
    %2029 = vmatpush2.bf16.msra.mxu0 %v1620
    %2030 = vmatprep.subr.bf16.mxu0 %v1615
    %2031 = vmatpush2.bf16.msra.mxu0 %v1614
    %2032 = vmatprep.subr.bf16.mxu0 %v1609
    %2033 = vmatpush2.bf16.msra.mxu0 %v1608
    %2034 = vmatprep.subr.bf16.mxu0 %v1603
    %2035 = vmatpush2.bf16.msra.mxu0 %v1602
    %2036 = vmatprep.subr.bf16.mxu0 %v1597
    %2037 = vmatpush2.bf16.msra.mxu0 %v1596
    %2038 = vmatprep.subr.bf16.mxu0 %v1591
    %2039 = vmatpush2.bf16.msra.mxu0 %v1590
    %2040 = vmatprep.mubr.bf16.mxu0 %v477
    %2041 = vmatmul.mubr.bf16.gmra.mxu0 %v463
    %v2042 = vpop.f32.mrf.mxu0
    %v2043 = vadd.f32 %v2002, %v2042
    %v2044 = vpop.f32.mrf.mxu0
    %v2045 = vadd.f32 %v2004, %v2044
    %v2046 = vpop.f32.mrf.mxu0
    %v2047 = vpop.f32.mrf.mxu0
    %2048 = vdwg.mxu0
    %2049 = vmatprep.subr.bf16.mxu0 %v1395
    %2050 = vmatpush1.bf16.msra.mxu0 %v1394
    %2051 = vmatprep.subr.bf16.mxu0 %v1389
    %2052 = vmatpush1.bf16.msra.mxu0 %v1388
    %2053 = vmatprep.subr.bf16.mxu0 %v1383
    %2054 = vmatpush1.bf16.msra.mxu0 %v1382
    %2055 = vmatprep.subr.bf16.mxu0 %v1377
    %2056 = vmatpush1.bf16.msra.mxu0 %v1376
    %2057 = vmatprep.subr.bf16.mxu0 %v1371
    %2058 = vmatpush1.bf16.msra.mxu0 %v1370
    %2059 = vmatprep.subr.bf16.mxu0 %v1365
    %2060 = vmatpush1.bf16.msra.mxu0 %v1364
    %2061 = vmatprep.subr.bf16.mxu0 %v1359
    %2062 = vmatpush1.bf16.msra.mxu0 %v1358
    %2063 = vmatprep.subr.bf16.mxu0 %v1353
    %2064 = vmatpush1.bf16.msra.mxu0 %v1352
    %2065 = vmatprep.subr.bf16.mxu0 %v1443
    %2066 = vmatpush2.bf16.msra.mxu0 %v1442
    %2067 = vmatprep.subr.bf16.mxu0 %v1437
    %2068 = vmatpush2.bf16.msra.mxu0 %v1436
    %2069 = vmatprep.subr.bf16.mxu0 %v1431
    %2070 = vmatpush2.bf16.msra.mxu0 %v1430
    %2071 = vmatprep.subr.bf16.mxu0 %v1425
    %2072 = vmatpush2.bf16.msra.mxu0 %v1424
    %2073 = vmatprep.subr.bf16.mxu0 %v1419
    %2074 = vmatpush2.bf16.msra.mxu0 %v1418
    %2075 = vmatprep.subr.bf16.mxu0 %v1413
    %2076 = vmatpush2.bf16.msra.mxu0 %v1412
    %2077 = vmatprep.subr.bf16.mxu0 %v1407
    %2078 = vmatpush2.bf16.msra.mxu0 %v1406
    %2079 = vmatprep.subr.bf16.mxu0 %v1401
    %2080 = vmatpush2.bf16.msra.mxu0 %v1400
    %2081 = vmatprep.mubr.bf16.mxu0 %v470
    %2082 = vmatmul.mubr.bf16.gmra.mxu0 %v456
    %v2083 = vpop.f32.mrf.mxu0
    %v2084 = vadd.f32 %v413, %v2083
    %v2085 = vpop.f32.mrf.mxu0
    %v2086 = vadd.f32 %v417, %v2085
    %v2087 = vpop.f32.mrf.mxu0
    %v2088 = vpop.f32.mrf.mxu0
    %2089 = vdwg.mxu0
    %2090 = vmatprep.subr.bf16.mxu0 %v1491
    %2091 = vmatpush1.bf16.msra.mxu0 %v1490
    %2092 = vmatprep.subr.bf16.mxu0 %v1485
    %2093 = vmatpush1.bf16.msra.mxu0 %v1484
    %2094 = vmatprep.subr.bf16.mxu0 %v1479
    %2095 = vmatpush1.bf16.msra.mxu0 %v1478
    %2096 = vmatprep.subr.bf16.mxu0 %v1473
    %2097 = vmatpush1.bf16.msra.mxu0 %v1472
    %2098 = vmatprep.subr.bf16.mxu0 %v1467
    %2099 = vmatpush1.bf16.msra.mxu0 %v1466
    %2100 = vmatprep.subr.bf16.mxu0 %v1461
    %2101 = vmatpush1.bf16.msra.mxu0 %v1460
    %2102 = vmatprep.subr.bf16.mxu0 %v1455
    %2103 = vmatpush1.bf16.msra.mxu0 %v1454
    %2104 = vmatprep.subr.bf16.mxu0 %v1449
    %2105 = vmatpush1.bf16.msra.mxu0 %v1448
    %2106 = vmatprep.subr.bf16.mxu0 %v1539
    %2107 = vmatpush2.bf16.msra.mxu0 %v1538
    %2108 = vmatprep.subr.bf16.mxu0 %v1533
    %2109 = vmatpush2.bf16.msra.mxu0 %v1532
    %2110 = vmatprep.subr.bf16.mxu0 %v1527
    %2111 = vmatpush2.bf16.msra.mxu0 %v1526
    %2112 = vmatprep.subr.bf16.mxu0 %v1521
    %2113 = vmatpush2.bf16.msra.mxu0 %v1520
    %2114 = vmatprep.subr.bf16.mxu0 %v1515
    %2115 = vmatpush2.bf16.msra.mxu0 %v1514
    %2116 = vmatprep.subr.bf16.mxu0 %v1509
    %2117 = vmatpush2.bf16.msra.mxu0 %v1508
    %2118 = vmatprep.subr.bf16.mxu0 %v1503
    %2119 = vmatpush2.bf16.msra.mxu0 %v1502
    %2120 = vmatprep.subr.bf16.mxu0 %v1497
    %2121 = vmatpush2.bf16.msra.mxu0 %v1496
    %2122 = vmatprep.mubr.bf16.mxu0 %v479
    %2123 = vmatmul.mubr.bf16.gmra.mxu0 %v478
    %v2124 = vpop.f32.mrf.mxu0
    %v2125 = vadd.f32 %v2084, %v2124
    %v2126 = vpop.f32.mrf.mxu0
    %v2127 = vadd.f32 %v2086, %v2126
    %v2128 = vpop.f32.mrf.mxu0
    %v2129 = vpop.f32.mrf.mxu0
    %2130 = vdwg.mxu0
    %2131 = vmatprep.subr.bf16.mxu0 %v1587
    %2132 = vmatpush1.bf16.msra.mxu0 %v1586
    %2133 = vmatprep.subr.bf16.mxu0 %v1581
    %2134 = vmatpush1.bf16.msra.mxu0 %v1580
    %2135 = vmatprep.subr.bf16.mxu0 %v1575
    %2136 = vmatpush1.bf16.msra.mxu0 %v1574
    %2137 = vmatprep.subr.bf16.mxu0 %v1569
    %2138 = vmatpush1.bf16.msra.mxu0 %v1568
    %2139 = vmatprep.subr.bf16.mxu0 %v1563
    %2140 = vmatpush1.bf16.msra.mxu0 %v1562
    %2141 = vmatprep.subr.bf16.mxu0 %v1557
    %2142 = vmatpush1.bf16.msra.mxu0 %v1556
    %2143 = vmatprep.subr.bf16.mxu0 %v1551
    %2144 = vmatpush1.bf16.msra.mxu0 %v1550
    %2145 = vmatprep.subr.bf16.mxu0 %v1545
    %2146 = vmatpush1.bf16.msra.mxu0 %v1544
    %2147 = vmatprep.subr.bf16.mxu0 %v1635
    %2148 = vmatpush2.bf16.msra.mxu0 %v1634
    %2149 = vmatprep.subr.bf16.mxu0 %v1629
    %2150 = vmatpush2.bf16.msra.mxu0 %v1628
    %2151 = vmatprep.subr.bf16.mxu0 %v1623
    %2152 = vmatpush2.bf16.msra.mxu0 %v1622
    %2153 = vmatprep.subr.bf16.mxu0 %v1617
    %2154 = vmatpush2.bf16.msra.mxu0 %v1616
    %2155 = vmatprep.subr.bf16.mxu0 %v1611
    %2156 = vmatpush2.bf16.msra.mxu0 %v1610
    %2157 = vmatprep.subr.bf16.mxu0 %v1605
    %2158 = vmatpush2.bf16.msra.mxu0 %v1604
    %2159 = vmatprep.subr.bf16.mxu0 %v1599
    %2160 = vmatpush2.bf16.msra.mxu0 %v1598
    %2161 = vmatprep.subr.bf16.mxu0 %v1593
    %2162 = vmatpush2.bf16.msra.mxu0 %v1592
    %2163 = vmatprep.mubr.bf16.mxu0 %v477
    %2164 = vmatmul.mubr.bf16.gmra.mxu0 %v463
    %v2165 = vpop.f32.mrf.mxu0
    %v2166 = vadd.f32 %v2125, %v2165
    %v2167 = vpop.f32.mrf.mxu0
    %v2168 = vadd.f32 %v2127, %v2167
    %v2169 = vpop.f32.mrf.mxu0
    %v2170 = vpop.f32.mrf.mxu0
    %2171 = vdwg.mxu0
    %2172 = vmatprep.subr.bf16.mxu0 %v1397
    %2173 = vmatpush1.bf16.msra.mxu0 %v1396
    %2174 = vmatprep.subr.bf16.mxu0 %v1391
    %2175 = vmatpush1.bf16.msra.mxu0 %v1390
    %2176 = vmatprep.subr.bf16.mxu0 %v1385
    %2177 = vmatpush1.bf16.msra.mxu0 %v1384
    %2178 = vmatprep.subr.bf16.mxu0 %v1379
    %2179 = vmatpush1.bf16.msra.mxu0 %v1378
    %2180 = vmatprep.subr.bf16.mxu0 %v1373
    %2181 = vmatpush1.bf16.msra.mxu0 %v1372
    %2182 = vmatprep.subr.bf16.mxu0 %v1367
    %2183 = vmatpush1.bf16.msra.mxu0 %v1366
    %2184 = vmatprep.subr.bf16.mxu0 %v1361
    %2185 = vmatpush1.bf16.msra.mxu0 %v1360
    %2186 = vmatprep.subr.bf16.mxu0 %v1355
    %2187 = vmatpush1.bf16.msra.mxu0 %v1354
    %2188 = vmatprep.subr.bf16.mxu0 %v1445
    %2189 = vmatpush2.bf16.msra.mxu0 %v1444
    %2190 = vmatprep.subr.bf16.mxu0 %v1439
    %2191 = vmatpush2.bf16.msra.mxu0 %v1438
    %2192 = vmatprep.subr.bf16.mxu0 %v1433
    %2193 = vmatpush2.bf16.msra.mxu0 %v1432
    %2194 = vmatprep.subr.bf16.mxu0 %v1427
    %2195 = vmatpush2.bf16.msra.mxu0 %v1426
    %2196 = vmatprep.subr.bf16.mxu0 %v1421
    %2197 = vmatpush2.bf16.msra.mxu0 %v1420
    %2198 = vmatprep.subr.bf16.mxu0 %v1415
    %2199 = vmatpush2.bf16.msra.mxu0 %v1414
    %2200 = vmatprep.subr.bf16.mxu0 %v1409
    %2201 = vmatpush2.bf16.msra.mxu0 %v1408
    %2202 = vmatprep.subr.bf16.mxu0 %v1403
    %2203 = vmatpush2.bf16.msra.mxu0 %v1402
    %2204 = vmatprep.mubr.bf16.mxu0 %v470
    %2205 = vmatmul.mubr.bf16.gmra.mxu0 %v456
    %v2206 = vpop.f32.mrf.mxu0
    %v2207 = vadd.f32 %v421, %v2206
    %v2208 = vpop.f32.mrf.mxu0
    %v2209 = vadd.f32 %v425, %v2208
    %v2210 = vpop.f32.mrf.mxu0
    %v2211 = vpop.f32.mrf.mxu0
    %2212 = vdwg.mxu0
    %2213 = vmatprep.subr.bf16.mxu0 %v1493
    %2214 = vmatpush1.bf16.msra.mxu0 %v1492
    %2215 = vmatprep.subr.bf16.mxu0 %v1487
    %2216 = vmatpush1.bf16.msra.mxu0 %v1486
    %2217 = vmatprep.subr.bf16.mxu0 %v1481
    %2218 = vmatpush1.bf16.msra.mxu0 %v1480
    %2219 = vmatprep.subr.bf16.mxu0 %v1475
    %2220 = vmatpush1.bf16.msra.mxu0 %v1474
    %2221 = vmatprep.subr.bf16.mxu0 %v1469
    %2222 = vmatpush1.bf16.msra.mxu0 %v1468
    %2223 = vmatprep.subr.bf16.mxu0 %v1463
    %2224 = vmatpush1.bf16.msra.mxu0 %v1462
    %2225 = vmatprep.subr.bf16.mxu0 %v1457
    %2226 = vmatpush1.bf16.msra.mxu0 %v1456
    %2227 = vmatprep.subr.bf16.mxu0 %v1451
    %2228 = vmatpush1.bf16.msra.mxu0 %v1450
    %2229 = vmatprep.subr.bf16.mxu0 %v1541
    %2230 = vmatpush2.bf16.msra.mxu0 %v1540
    %2231 = vmatprep.subr.bf16.mxu0 %v1535
    %2232 = vmatpush2.bf16.msra.mxu0 %v1534
    %2233 = vmatprep.subr.bf16.mxu0 %v1529
    %2234 = vmatpush2.bf16.msra.mxu0 %v1528
    %2235 = vmatprep.subr.bf16.mxu0 %v1523
    %2236 = vmatpush2.bf16.msra.mxu0 %v1522
    %2237 = vmatprep.subr.bf16.mxu0 %v1517
    %2238 = vmatpush2.bf16.msra.mxu0 %v1516
    %2239 = vmatprep.subr.bf16.mxu0 %v1511
    %2240 = vmatpush2.bf16.msra.mxu0 %v1510
    %2241 = vmatprep.subr.bf16.mxu0 %v1505
    %2242 = vmatpush2.bf16.msra.mxu0 %v1504
    %2243 = vmatprep.subr.bf16.mxu0 %v1499
    %2244 = vmatpush2.bf16.msra.mxu0 %v1498
    %2245 = vmatprep.mubr.bf16.mxu0 %v479
    %2246 = vmatmul.mubr.bf16.gmra.mxu0 %v478
    %v2247 = vpop.f32.mrf.mxu0
    %v2248 = vadd.f32 %v2207, %v2247
    %v2249 = vpop.f32.mrf.mxu0
    %v2250 = vadd.f32 %v2209, %v2249
    %v2251 = vpop.f32.mrf.mxu0
    %v2252 = vpop.f32.mrf.mxu0
    %2253 = vdwg.mxu0
    %2254 = vmatprep.subr.bf16.mxu0 %v1589
    %2255 = vmatpush1.bf16.msra.mxu0 %v1588
    %2256 = vmatprep.subr.bf16.mxu0 %v1583
    %2257 = vmatpush1.bf16.msra.mxu0 %v1582
    %2258 = vmatprep.subr.bf16.mxu0 %v1577
    %2259 = vmatpush1.bf16.msra.mxu0 %v1576
    %2260 = vmatprep.subr.bf16.mxu0 %v1571
    %2261 = vmatpush1.bf16.msra.mxu0 %v1570
    %2262 = vmatprep.subr.bf16.mxu0 %v1565
    %2263 = vmatpush1.bf16.msra.mxu0 %v1564
    %2264 = vmatprep.subr.bf16.mxu0 %v1559
    %2265 = vmatpush1.bf16.msra.mxu0 %v1558
    %2266 = vmatprep.subr.bf16.mxu0 %v1553
    %2267 = vmatpush1.bf16.msra.mxu0 %v1552
    %2268 = vmatprep.subr.bf16.mxu0 %v1547
    %2269 = vmatpush1.bf16.msra.mxu0 %v1546
    %2270 = vmatprep.subr.bf16.mxu0 %v1637
    %2271 = vmatpush2.bf16.msra.mxu0 %v1636
    %2272 = vmatprep.subr.bf16.mxu0 %v1631
    %2273 = vmatpush2.bf16.msra.mxu0 %v1630
    %2274 = vmatprep.subr.bf16.mxu0 %v1625
    %2275 = vmatpush2.bf16.msra.mxu0 %v1624
    %2276 = vmatprep.subr.bf16.mxu0 %v1619
    %2277 = vmatpush2.bf16.msra.mxu0 %v1618
    %2278 = vmatprep.subr.bf16.mxu0 %v1613
    %2279 = vmatpush2.bf16.msra.mxu0 %v1612
    %2280 = vmatprep.subr.bf16.mxu0 %v1607
    %2281 = vmatpush2.bf16.msra.mxu0 %v1606
    %2282 = vmatprep.subr.bf16.mxu0 %v1601
    %2283 = vmatpush2.bf16.msra.mxu0 %v1600
    %2284 = vmatprep.subr.bf16.mxu0 %v1595
    %2285 = vmatpush2.bf16.msra.mxu0 %v1594
    %2286 = vmatprep.mubr.bf16.mxu0 %v477
    %2287 = vmatmul.mubr.bf16.gmra.mxu0 %v463
    %v2288 = vpop.f32.mrf.mxu0
    %v2289 = vadd.f32 %v2248, %v2288
    %v2290 = vpop.f32.mrf.mxu0
    %v2291 = vadd.f32 %v2250, %v2290
    %v2292 = vpop.f32.mrf.mxu0
    %v2293 = vpop.f32.mrf.mxu0
    %2294 = vdwg.mxu0
    %vm2295 = vcmask 1041408
    %v2296 = vsel %vm2295, %v2043, 0.0
    %v2297 = vsel %vm2295, %v2045, 0.0
    %v2298 = vadd.f32 %v2296, %v2297
    %v2299 = vsel %vm2295, %v2166, 0.0
    %v2300 = vadd.f32 %v2298, %v2299
    %v2301 = vsel %vm2295, %v2168, 0.0
    %v2302 = vadd.f32 %v2300, %v2301
    %v2303 = vsel %vm2295, %v2289, 0.0
    %v2304 = vadd.f32 %v2302, %v2303
    %v2305 = vsel %vm2295, %v2291, 0.0
    %v2306 = vadd.f32 %v2304, %v2305
    %2307 = vadd.xlane.f32.xlu0 %v2306
    %v2308 = vpop.xlane.xlu0 %2307
    %v2309 = vrcp.pop 768.0
    %v2310 = vmul.f32 %v2308, %v2309
    %v2311 = vsub.f32 %v2043, %v2310
    %v2312 = vsub.f32 %v2045, %v2310
    %v2313 = vsub.f32 %v2166, %v2310
    %v2314 = vsub.f32 %v2168, %v2310
    %v2315 = vsub.f32 %v2289, %v2310
    %v2316 = vsub.f32 %v2291, %v2310
    %v2317 = vmul.f32 %v2311, %v2311
    %v2318 = vmul.f32 %v2312, %v2312
    %v2319 = vmul.f32 %v2313, %v2313
    %v2320 = vmul.f32 %v2314, %v2314
    %v2321 = vmul.f32 %v2315, %v2315
    %v2322 = vmul.f32 %v2316, %v2316
    %v2323 = vsel %vm2295, %v2317, 0.0
    %v2324 = vsel %vm2295, %v2318, 0.0
    %v2325 = vadd.f32 %v2323, %v2324
    %v2326 = vsel %vm2295, %v2319, 0.0
    %v2327 = vadd.f32 %v2325, %v2326
    %v2328 = vsel %vm2295, %v2320, 0.0
    %v2329 = vadd.f32 %v2327, %v2328
    %v2330 = vsel %vm2295, %v2321, 0.0
    %v2331 = vadd.f32 %v2329, %v2330
    %v2332 = vsel %vm2295, %v2322, 0.0
    %v2333 = vadd.f32 %v2331, %v2332
    %2334 = vadd.xlane.f32.xlu0 %v2333
    %v2335 = vpop.xlane.xlu0 %2334
    %v2336 = vmul.f32 %v2335, %v2309
    %v2337 = vadd.f32 %v2336, 1e-05
    %v2338 = vrsqrt.pop %v2337
    %v2339 = vmul.f32 %v2311, %v2338
    %v2340 = vmul.f32 %v2312, %v2338
    %v2341 = vmul.f32 %v2313, %v2338
    %v2342 = vmul.f32 %v2314, %v2338
    %v2343 = vmul.f32 %v2315, %v2338
    %v2344 = vmul.f32 %v2316, %v2338
    %v2346 = vlaneseq
    %v2347 = vshrl.u32 %v2346, 7
    %v2348 = vsub.s32 0, %v2347
    %v2349 = vrot.slane %v110, %v2348
    %v2350 = vlaneseq
    %v2351 = vshrl.u32 %v2350, 7
    %v2352 = vsub.s32 1, %v2351
    %v2353 = vrot.slane %v110, %v2352
    %v2354 = vlaneseq
    %v2355 = vshrl.u32 %v2354, 7
    %v2356 = vsub.s32 2, %v2355
    %v2357 = vrot.slane %v110, %v2356
    %v2358 = vlaneseq
    %v2359 = vshrl.u32 %v2358, 7
    %v2360 = vsub.s32 3, %v2359
    %v2361 = vrot.slane %v110, %v2360
    %v2362 = vlaneseq
    %v2363 = vshrl.u32 %v2362, 7
    %v2364 = vsub.s32 4, %v2363
    %v2365 = vrot.slane %v110, %v2364
    %v2366 = vlaneseq
    %v2367 = vshrl.u32 %v2366, 7
    %v2368 = vsub.s32 5, %v2367
    %v2369 = vrot.slane %v110, %v2368
    %v2376 = vmul.f32 %v2339, %v2349
    %v2377 = vmul.f32 %v2340, %v2353
    %v2378 = vmul.f32 %v2341, %v2357
    %v2379 = vmul.f32 %v2342, %v2361
    %v2380 = vmul.f32 %v2343, %v2365
    %v2381 = vmul.f32 %v2344, %v2369
    %v2383 = vlaneseq
    %v2384 = vshrl.u32 %v2383, 7
    %v2385 = vsub.s32 0, %v2384
    %v2386 = vrot.slane %v112, %v2385
    %v2387 = vlaneseq
    %v2388 = vshrl.u32 %v2387, 7
    %v2389 = vsub.s32 1, %v2388
    %v2390 = vrot.slane %v112, %v2389
    %v2391 = vlaneseq
    %v2392 = vshrl.u32 %v2391, 7
    %v2393 = vsub.s32 2, %v2392
    %v2394 = vrot.slane %v112, %v2393
    %v2395 = vlaneseq
    %v2396 = vshrl.u32 %v2395, 7
    %v2397 = vsub.s32 3, %v2396
    %v2398 = vrot.slane %v112, %v2397
    %v2399 = vlaneseq
    %v2400 = vshrl.u32 %v2399, 7
    %v2401 = vsub.s32 4, %v2400
    %v2402 = vrot.slane %v112, %v2401
    %v2403 = vlaneseq
    %v2404 = vshrl.u32 %v2403, 7
    %v2405 = vsub.s32 5, %v2404
    %v2406 = vrot.slane %v112, %v2405
    %v2413 = vadd.f32 %v2376, %v2386
    %v2414 = vadd.f32 %v2377, %v2390
    %v2415 = vadd.f32 %v2378, %v2394
    %v2416 = vadd.f32 %v2379, %v2398
    %v2417 = vadd.f32 %v2380, %v2402
    %v2418 = vadd.f32 %v2381, %v2406
    %v2419 = vmul.f32 %v2413, 0.5
    %v2420 = vmul.f32 %v2414, 0.5
    %v2421 = vmul.f32 %v2415, 0.5
    %v2422 = vmul.f32 %v2416, 0.5
    %v2423 = vmul.f32 %v2417, 0.5
    %v2424 = vmul.f32 %v2418, 0.5
    %v2425 = vtanh.pop %v2419
    %v2426 = vtanh.pop %v2420
    %v2427 = vtanh.pop %v2421
    %v2428 = vtanh.pop %v2422
    %v2429 = vtanh.pop %v2423
    %v2430 = vtanh.pop %v2424
    %v2431 = vmul.f32 %v2425, 0.5
    %v2432 = vmul.f32 %v2426, 0.5
    %v2433 = vmul.f32 %v2427, 0.5
    %v2434 = vmul.f32 %v2428, 0.5
    %v2435 = vmul.f32 %v2429, 0.5
    %v2436 = vmul.f32 %v2430, 0.5
    %v2437 = vadd.f32 %v2431, 0.5
    %v2438 = vadd.f32 %v2432, 0.5
    %v2439 = vadd.f32 %v2433, 0.5
    %v2440 = vadd.f32 %v2434, 0.5
    %v2441 = vadd.f32 %v2435, 0.5
    %v2442 = vadd.f32 %v2436, 0.5
    %v2443 = vpack.c.bf16 %v2437, %v2437
    %v2444 = vpack.c.bf16 %v2438, %v2438
    %v2445 = vpack.c.bf16 %v2439, %v2439
    %v2446 = vpack.c.bf16 %v2440, %v2440
    %v2447 = vpack.c.bf16 %v2441, %v2441
    %v2448 = vpack.c.bf16 %v2442, %v2442
    %v2449 = vld [vmem:[#allocation8] ss:$8 sm:$0x3]
    %s2450 = scalar_lea.vmem [#allocation8], 1
    %v2451 = vld [vmem:[%s2450] ss:$8 sm:$0x3]
    %s2452 = scalar_lea.vmem [#allocation8], 2
    %v2453 = vld [vmem:[%s2452] ss:$8 sm:$0x3]
    %v2454 = vld [vmem:[%s2] sm:$0xff]
    %v2455 = vld [vmem:[%s2 + $0x8] sm:$0xff]
    %v2456 = vld [vmem:[%s2 + $0x10] sm:$0xff]
    %v2457 = vld [vmem:[%s2 + $0x18] sm:$0xff]
    %v2458 = vld [vmem:[%s2 + $0x20] sm:$0xff]
    %v2459 = vld [vmem:[%s2 + $0x28] sm:$0xff]
    %v2460 = vld [vmem:[%s2 + $0x30] sm:$0xff]
    %v2461 = vld [vmem:[%s2 + $0x38] sm:$0xff]
    %v2462 = vld [vmem:[%s2 + $0x40] sm:$0xff]
    %v2463 = vld [vmem:[%s2 + $0x48] sm:$0xff]
    %v2464 = vld [vmem:[%s2 + $0x50] sm:$0xff]
    %v2465 = vld [vmem:[%s2 + $0x58] sm:$0xff]
    %v2466 = vld [vmem:[%s2 + $0x60] sm:$0xff]
    %v2467 = vld [vmem:[%s2 + $0x68] sm:$0xff]
    %v2468 = vld [vmem:[%s2 + $0x70] sm:$0xff]
    %v2469 = vld [vmem:[%s2 + $0x78] sm:$0xff]
    %v2470 = vld [vmem:[%s2 + $0x80] sm:$0xff]
    %v2471 = vld [vmem:[%s2 + $0x88] sm:$0xff]
    %v2472 = vld [vmem:[%s2 + $0x90] sm:$0xff]
    %v2473 = vld [vmem:[%s2 + $0x98] sm:$0xff]
    %v2474 = vld [vmem:[%s2 + $0xa0] sm:$0xff]
    %v2475 = vld [vmem:[%s2 + $0xa8] sm:$0xff]
    %v2476 = vld [vmem:[%s2 + $0xb0] sm:$0xff]
    %v2477 = vld [vmem:[%s2 + $0xb8] sm:$0xff]
    %v2478 = vld [vmem:[%s2 + $0xc0] sm:$0xff]
    %v2479 = vld [vmem:[%s2 + $0xc8] sm:$0xff]
    %v2480 = vld [vmem:[%s2 + $0xd0] sm:$0xff]
    %v2481 = vld [vmem:[%s2 + $0xd8] sm:$0xff]
    %v2482 = vld [vmem:[%s2 + $0xe0] sm:$0xff]
    %v2483 = vld [vmem:[%s2 + $0xe8] sm:$0xff]
    %v2484 = vld [vmem:[%s2 + $0xf0] sm:$0xff]
    %v2485 = vld [vmem:[%s2 + $0xf8] sm:$0xff]
    %v2486 = vld [vmem:[%s2 + $0x100] sm:$0xff]
    %v2487 = vld [vmem:[%s2 + $0x108] sm:$0xff]
    %v2488 = vld [vmem:[%s2 + $0x110] sm:$0xff]
    %v2489 = vld [vmem:[%s2 + $0x118] sm:$0xff]
    %v2490 = vld [vmem:[%s2 + $0x120] sm:$0xff]
    %v2491 = vld [vmem:[%s2 + $0x128] sm:$0xff]
    %v2492 = vld [vmem:[%s2 + $0x130] sm:$0xff]
    %v2493 = vld [vmem:[%s2 + $0x138] sm:$0xff]
    %v2494 = vld [vmem:[%s2 + $0x140] sm:$0xff]
    %v2495 = vld [vmem:[%s2 + $0x148] sm:$0xff]
    %v2496 = vld [vmem:[%s2 + $0x150] sm:$0xff]
    %v2497 = vld [vmem:[%s2 + $0x158] sm:$0xff]
    %v2498 = vld [vmem:[%s2 + $0x160] sm:$0xff]
    %v2499 = vld [vmem:[%s2 + $0x168] sm:$0xff]
    %v2500 = vld [vmem:[%s2 + $0x170] sm:$0xff]
    %v2501 = vld [vmem:[%s2 + $0x178] sm:$0xff]
    %v2502 = vld [vmem:[%s2 + $0x180] sm:$0xff]
    %v2503 = vld [vmem:[%s2 + $0x188] sm:$0xff]
    %v2504 = vld [vmem:[%s2 + $0x190] sm:$0xff]
    %v2505 = vld [vmem:[%s2 + $0x198] sm:$0xff]
    %v2506 = vld [vmem:[%s2 + $0x1a0] sm:$0xff]
    %v2507 = vld [vmem:[%s2 + $0x1a8] sm:$0xff]
    %v2508 = vld [vmem:[%s2 + $0x1b0] sm:$0xff]
    %v2509 = vld [vmem:[%s2 + $0x1b8] sm:$0xff]
    %v2510 = vld [vmem:[%s2 + $0x1c0] sm:$0xff]
    %v2511 = vld [vmem:[%s2 + $0x1c8] sm:$0xff]
    %v2512 = vld [vmem:[%s2 + $0x1d0] sm:$0xff]
    %v2513 = vld [vmem:[%s2 + $0x1d8] sm:$0xff]
    %v2514 = vld [vmem:[%s2 + $0x1e0] sm:$0xff]
    %v2515 = vld [vmem:[%s2 + $0x1e8] sm:$0xff]
    %v2516 = vld [vmem:[%s2 + $0x1f0] sm:$0xff]
    %v2517 = vld [vmem:[%s2 + $0x1f8] sm:$0xff]
    %v2518 = vld [vmem:[%s2 + $0x200] sm:$0xff]
    %v2519 = vld [vmem:[%s2 + $0x208] sm:$0xff]
    %v2520 = vld [vmem:[%s2 + $0x210] sm:$0xff]
    %v2521 = vld [vmem:[%s2 + $0x218] sm:$0xff]
    %v2522 = vld [vmem:[%s2 + $0x220] sm:$0xff]
    %v2523 = vld [vmem:[%s2 + $0x228] sm:$0xff]
    %v2524 = vld [vmem:[%s2 + $0x230] sm:$0xff]
    %v2525 = vld [vmem:[%s2 + $0x238] sm:$0xff]
    %v2526 = vld [vmem:[%s2 + $0x240] sm:$0xff]
    %v2527 = vld [vmem:[%s2 + $0x248] sm:$0xff]
    %v2528 = vld [vmem:[%s2 + $0x250] sm:$0xff]
    %v2529 = vld [vmem:[%s2 + $0x258] sm:$0xff]
    %v2530 = vld [vmem:[%s2 + $0x260] sm:$0xff]
    %v2531 = vld [vmem:[%s2 + $0x268] sm:$0xff]
    %v2532 = vld [vmem:[%s2 + $0x270] sm:$0xff]
    %v2533 = vld [vmem:[%s2 + $0x278] sm:$0xff]
    %v2534 = vld [vmem:[%s2 + $0x280] sm:$0xff]
    %v2535 = vld [vmem:[%s2 + $0x288] sm:$0xff]
    %v2536 = vld [vmem:[%s2 + $0x290] sm:$0xff]
    %v2537 = vld [vmem:[%s2 + $0x298] sm:$0xff]
    %v2538 = vld [vmem:[%s2 + $0x2a0] sm:$0xff]
    %v2539 = vld [vmem:[%s2 + $0x2a8] sm:$0xff]
    %v2540 = vld [vmem:[%s2 + $0x2b0] sm:$0xff]
    %v2541 = vld [vmem:[%s2 + $0x2b8] sm:$0xff]
    %v2542 = vld [vmem:[%s2 + $0x2c0] sm:$0xff]
    %v2543 = vld [vmem:[%s2 + $0x2c8] sm:$0xff]
    %v2544 = vld [vmem:[%s2 + $0x2d0] sm:$0xff]
    %v2545 = vld [vmem:[%s2 + $0x2d8] sm:$0xff]
    %v2546 = vld [vmem:[%s2 + $0x2e0] sm:$0xff]
    %v2547 = vld [vmem:[%s2 + $0x2e8] sm:$0xff]
    %v2548 = vld [vmem:[%s2 + $0x2f0] sm:$0xff]
    %v2549 = vld [vmem:[%s2 + $0x2f8] sm:$0xff]
    %v2551 = vlaneseq
    %v2552 = vshrl.u32 %v2551, 7
    %v2553 = vsub.s32 0, %v2552
    %v2554 = vrot.slane %v2449, %v2553
    %v2555 = vlaneseq
    %v2556 = vshrl.u32 %v2555, 7
    %v2557 = vsub.s32 1, %v2556
    %v2558 = vrot.slane %v2449, %v2557
    %v2657 = vunpack.c.l.b16 %v2454
    %v2658 = vunpack.c.h.b16 %v2454
    %v2659 = vunpack.c.l.b16 %v2455
    %v2660 = vunpack.c.h.b16 %v2455
    %v2661 = vunpack.c.l.b16 %v2456
    %v2662 = vunpack.c.h.b16 %v2456
    %v2663 = vunpack.c.l.b16 %v2457
    %v2664 = vunpack.c.h.b16 %v2457
    %v2665 = vunpack.c.l.b16 %v2458
    %v2666 = vunpack.c.h.b16 %v2458
    %v2667 = vunpack.c.l.b16 %v2459
    %v2668 = vunpack.c.h.b16 %v2459
    %v2669 = vunpack.c.l.b16 %v2460
    %v2670 = vunpack.c.h.b16 %v2460
    %v2671 = vunpack.c.l.b16 %v2461
    %v2672 = vunpack.c.h.b16 %v2461
    %v2673 = vunpack.c.l.b16 %v2462
    %v2674 = vunpack.c.h.b16 %v2462
    %v2675 = vunpack.c.l.b16 %v2463
    %v2676 = vunpack.c.h.b16 %v2463
    %v2677 = vunpack.c.l.b16 %v2464
    %v2678 = vunpack.c.h.b16 %v2464
    %v2679 = vunpack.c.l.b16 %v2465
    %v2680 = vunpack.c.h.b16 %v2465
    %v2681 = vunpack.c.l.b16 %v2466
    %v2682 = vunpack.c.h.b16 %v2466
    %v2683 = vunpack.c.l.b16 %v2467
    %v2684 = vunpack.c.h.b16 %v2467
    %v2685 = vunpack.c.l.b16 %v2468
    %v2686 = vunpack.c.h.b16 %v2468
    %v2687 = vunpack.c.l.b16 %v2469
    %v2688 = vunpack.c.h.b16 %v2469
    %v2689 = vunpack.c.l.b16 %v2470
    %v2690 = vunpack.c.h.b16 %v2470
    %v2691 = vunpack.c.l.b16 %v2471
    %v2692 = vunpack.c.h.b16 %v2471
    %v2693 = vunpack.c.l.b16 %v2472
    %v2694 = vunpack.c.h.b16 %v2472
    %v2695 = vunpack.c.l.b16 %v2473
    %v2696 = vunpack.c.h.b16 %v2473
    %v2697 = vunpack.c.l.b16 %v2474
    %v2698 = vunpack.c.h.b16 %v2474
    %v2699 = vunpack.c.l.b16 %v2475
    %v2700 = vunpack.c.h.b16 %v2475
    %v2701 = vunpack.c.l.b16 %v2476
    %v2702 = vunpack.c.h.b16 %v2476
    %v2703 = vunpack.c.l.b16 %v2477
    %v2704 = vunpack.c.h.b16 %v2477
    %v2705 = vunpack.c.l.b16 %v2478
    %v2706 = vunpack.c.h.b16 %v2478
    %v2707 = vunpack.c.l.b16 %v2479
    %v2708 = vunpack.c.h.b16 %v2479
    %v2709 = vunpack.c.l.b16 %v2480
    %v2710 = vunpack.c.h.b16 %v2480
    %v2711 = vunpack.c.l.b16 %v2481
    %v2712 = vunpack.c.h.b16 %v2481
    %v2713 = vunpack.c.l.b16 %v2482
    %v2714 = vunpack.c.h.b16 %v2482
    %v2715 = vunpack.c.l.b16 %v2483
    %v2716 = vunpack.c.h.b16 %v2483
    %v2717 = vunpack.c.l.b16 %v2484
    %v2718 = vunpack.c.h.b16 %v2484
    %v2719 = vunpack.c.l.b16 %v2485
    %v2720 = vunpack.c.h.b16 %v2485
    %v2721 = vunpack.c.l.b16 %v2486
    %v2722 = vunpack.c.h.b16 %v2486
    %v2723 = vunpack.c.l.b16 %v2487
    %v2724 = vunpack.c.h.b16 %v2487
    %v2725 = vunpack.c.l.b16 %v2488
    %v2726 = vunpack.c.h.b16 %v2488
    %v2727 = vunpack.c.l.b16 %v2489
    %v2728 = vunpack.c.h.b16 %v2489
    %v2729 = vunpack.c.l.b16 %v2490
    %v2730 = vunpack.c.h.b16 %v2490
    %v2731 = vunpack.c.l.b16 %v2491
    %v2732 = vunpack.c.h.b16 %v2491
    %v2733 = vunpack.c.l.b16 %v2492
    %v2734 = vunpack.c.h.b16 %v2492
    %v2735 = vunpack.c.l.b16 %v2493
    %v2736 = vunpack.c.h.b16 %v2493
    %v2737 = vunpack.c.l.b16 %v2494
    %v2738 = vunpack.c.h.b16 %v2494
    %v2739 = vunpack.c.l.b16 %v2495
    %v2740 = vunpack.c.h.b16 %v2495
    %v2741 = vunpack.c.l.b16 %v2496
    %v2742 = vunpack.c.h.b16 %v2496
    %v2743 = vunpack.c.l.b16 %v2497
    %v2744 = vunpack.c.h.b16 %v2497
    %v2745 = vunpack.c.l.b16 %v2498
    %v2746 = vunpack.c.h.b16 %v2498
    %v2747 = vunpack.c.l.b16 %v2499
    %v2748 = vunpack.c.h.b16 %v2499
    %v2749 = vunpack.c.l.b16 %v2500
    %v2750 = vunpack.c.h.b16 %v2500
    %v2751 = vunpack.c.l.b16 %v2501
    %v2752 = vunpack.c.h.b16 %v2501
    %v2753 = vunpack.c.l.b16 %v2502
    %v2754 = vunpack.c.h.b16 %v2502
    %v2755 = vunpack.c.l.b16 %v2503
    %v2756 = vunpack.c.h.b16 %v2503
    %v2757 = vunpack.c.l.b16 %v2504
    %v2758 = vunpack.c.h.b16 %v2504
    %v2759 = vunpack.c.l.b16 %v2505
    %v2760 = vunpack.c.h.b16 %v2505
    %v2761 = vunpack.c.l.b16 %v2506
    %v2762 = vunpack.c.h.b16 %v2506
    %v2763 = vunpack.c.l.b16 %v2507
    %v2764 = vunpack.c.h.b16 %v2507
    %v2765 = vunpack.c.l.b16 %v2508
    %v2766 = vunpack.c.h.b16 %v2508
    %v2767 = vunpack.c.l.b16 %v2509
    %v2768 = vunpack.c.h.b16 %v2509
    %v2769 = vunpack.c.l.b16 %v2510
    %v2770 = vunpack.c.h.b16 %v2510
    %v2771 = vunpack.c.l.b16 %v2511
    %v2772 = vunpack.c.h.b16 %v2511
    %v2773 = vunpack.c.l.b16 %v2512
    %v2774 = vunpack.c.h.b16 %v2512
    %v2775 = vunpack.c.l.b16 %v2513
    %v2776 = vunpack.c.h.b16 %v2513
    %v2777 = vunpack.c.l.b16 %v2514
    %v2778 = vunpack.c.h.b16 %v2514
    %v2779 = vunpack.c.l.b16 %v2515
    %v2780 = vunpack.c.h.b16 %v2515
    %v2781 = vunpack.c.l.b16 %v2516
    %v2782 = vunpack.c.h.b16 %v2516
    %v2783 = vunpack.c.l.b16 %v2517
    %v2784 = vunpack.c.h.b16 %v2517
    %v2785 = vunpack.c.l.b16 %v2518
    %v2786 = vunpack.c.h.b16 %v2518
    %v2787 = vunpack.c.l.b16 %v2519
    %v2788 = vunpack.c.h.b16 %v2519
    %v2789 = vunpack.c.l.b16 %v2520
    %v2790 = vunpack.c.h.b16 %v2520
    %v2791 = vunpack.c.l.b16 %v2521
    %v2792 = vunpack.c.h.b16 %v2521
    %v2793 = vunpack.c.l.b16 %v2522
    %v2794 = vunpack.c.h.b16 %v2522
    %v2795 = vunpack.c.l.b16 %v2523
    %v2796 = vunpack.c.h.b16 %v2523
    %v2797 = vunpack.c.l.b16 %v2524
    %v2798 = vunpack.c.h.b16 %v2524
    %v2799 = vunpack.c.l.b16 %v2525
    %v2800 = vunpack.c.h.b16 %v2525
    %v2801 = vunpack.c.l.b16 %v2526
    %v2802 = vunpack.c.h.b16 %v2526
    %v2803 = vunpack.c.l.b16 %v2527
    %v2804 = vunpack.c.h.b16 %v2527
    %v2805 = vunpack.c.l.b16 %v2528
    %v2806 = vunpack.c.h.b16 %v2528
    %v2807 = vunpack.c.l.b16 %v2529
    %v2808 = vunpack.c.h.b16 %v2529
    %v2809 = vunpack.c.l.b16 %v2530
    %v2810 = vunpack.c.h.b16 %v2530
    %v2811 = vunpack.c.l.b16 %v2531
    %v2812 = vunpack.c.h.b16 %v2531
    %v2813 = vunpack.c.l.b16 %v2532
    %v2814 = vunpack.c.h.b16 %v2532
    %v2815 = vunpack.c.l.b16 %v2533
    %v2816 = vunpack.c.h.b16 %v2533
    %v2817 = vunpack.c.l.b16 %v2534
    %v2818 = vunpack.c.h.b16 %v2534
    %v2819 = vunpack.c.l.b16 %v2535
    %v2820 = vunpack.c.h.b16 %v2535
    %v2821 = vunpack.c.l.b16 %v2536
    %v2822 = vunpack.c.h.b16 %v2536
    %v2823 = vunpack.c.l.b16 %v2537
    %v2824 = vunpack.c.h.b16 %v2537
    %v2825 = vunpack.c.l.b16 %v2538
    %v2826 = vunpack.c.h.b16 %v2538
    %v2827 = vunpack.c.l.b16 %v2539
    %v2828 = vunpack.c.h.b16 %v2539
    %v2829 = vunpack.c.l.b16 %v2540
    %v2830 = vunpack.c.h.b16 %v2540
    %v2831 = vunpack.c.l.b16 %v2541
    %v2832 = vunpack.c.h.b16 %v2541
    %v2833 = vunpack.c.l.b16 %v2542
    %v2834 = vunpack.c.h.b16 %v2542
    %v2835 = vunpack.c.l.b16 %v2543
    %v2836 = vunpack.c.h.b16 %v2543
    %v2837 = vunpack.c.l.b16 %v2544
    %v2838 = vunpack.c.h.b16 %v2544
    %v2839 = vunpack.c.l.b16 %v2545
    %v2840 = vunpack.c.h.b16 %v2545
    %v2841 = vunpack.c.l.b16 %v2546
    %v2842 = vunpack.c.h.b16 %v2546
    %v2843 = vunpack.c.l.b16 %v2547
    %v2844 = vunpack.c.h.b16 %v2547
    %v2845 = vunpack.c.l.b16 %v2548
    %v2846 = vunpack.c.h.b16 %v2548
    %v2847 = vunpack.c.l.b16 %v2549
    %v2848 = vunpack.c.h.b16 %v2549
    %v2849 = vpack.c.b16 %v2659, %v2657
    %v2850 = vpack.c.b16 %v2660, %v2658
    %v2851 = vpack.c.b16 %v2663, %v2661
    %v2852 = vpack.c.b16 %v2664, %v2662
    %v2853 = vpack.c.b16 %v2667, %v2665
    %v2854 = vpack.c.b16 %v2668, %v2666
    %v2855 = vpack.c.b16 %v2671, %v2669
    %v2856 = vpack.c.b16 %v2672, %v2670
    %v2857 = vpack.c.b16 %v2675, %v2673
    %v2858 = vpack.c.b16 %v2676, %v2674
    %v2859 = vpack.c.b16 %v2679, %v2677
    %v2860 = vpack.c.b16 %v2680, %v2678
    %v2861 = vpack.c.b16 %v2683, %v2681
    %v2862 = vpack.c.b16 %v2684, %v2682
    %v2863 = vpack.c.b16 %v2687, %v2685
    %v2864 = vpack.c.b16 %v2688, %v2686
    %v2865 = vpack.c.b16 %v2691, %v2689
    %v2866 = vpack.c.b16 %v2692, %v2690
    %v2867 = vpack.c.b16 %v2695, %v2693
    %v2868 = vpack.c.b16 %v2696, %v2694
    %v2869 = vpack.c.b16 %v2699, %v2697
    %v2870 = vpack.c.b16 %v2700, %v2698
    %v2871 = vpack.c.b16 %v2703, %v2701
    %v2872 = vpack.c.b16 %v2704, %v2702
    %v2873 = vpack.c.b16 %v2707, %v2705
    %v2874 = vpack.c.b16 %v2708, %v2706
    %v2875 = vpack.c.b16 %v2711, %v2709
    %v2876 = vpack.c.b16 %v2712, %v2710
    %v2877 = vpack.c.b16 %v2715, %v2713
    %v2878 = vpack.c.b16 %v2716, %v2714
    %v2879 = vpack.c.b16 %v2719, %v2717
    %v2880 = vpack.c.b16 %v2720, %v2718
    %v2881 = vpack.c.b16 %v2723, %v2721
    %v2882 = vpack.c.b16 %v2724, %v2722
    %v2883 = vpack.c.b16 %v2727, %v2725
    %v2884 = vpack.c.b16 %v2728, %v2726
    %v2885 = vpack.c.b16 %v2731, %v2729
    %v2886 = vpack.c.b16 %v2732, %v2730
    %v2887 = vpack.c.b16 %v2735, %v2733
    %v2888 = vpack.c.b16 %v2736, %v2734
    %v2889 = vpack.c.b16 %v2739, %v2737
    %v2890 = vpack.c.b16 %v2740, %v2738
    %v2891 = vpack.c.b16 %v2743, %v2741
    %v2892 = vpack.c.b16 %v2744, %v2742
    %v2893 = vpack.c.b16 %v2747, %v2745
    %v2894 = vpack.c.b16 %v2748, %v2746
    %v2895 = vpack.c.b16 %v2751, %v2749
    %v2896 = vpack.c.b16 %v2752, %v2750
    %v2897 = vpack.c.b16 %v2755, %v2753
    %v2898 = vpack.c.b16 %v2756, %v2754
    %v2899 = vpack.c.b16 %v2759, %v2757
    %v2900 = vpack.c.b16 %v2760, %v2758
    %v2901 = vpack.c.b16 %v2763, %v2761
    %v2902 = vpack.c.b16 %v2764, %v2762
    %v2903 = vpack.c.b16 %v2767, %v2765
    %v2904 = vpack.c.b16 %v2768, %v2766
    %v2905 = vpack.c.b16 %v2771, %v2769
    %v2906 = vpack.c.b16 %v2772, %v2770
    %v2907 = vpack.c.b16 %v2775, %v2773
    %v2908 = vpack.c.b16 %v2776, %v2774
    %v2909 = vpack.c.b16 %v2779, %v2777
    %v2910 = vpack.c.b16 %v2780, %v2778
    %v2911 = vpack.c.b16 %v2783, %v2781
    %v2912 = vpack.c.b16 %v2784, %v2782
    %v2913 = vpack.c.b16 %v2787, %v2785
    %v2914 = vpack.c.b16 %v2788, %v2786
    %v2915 = vpack.c.b16 %v2791, %v2789
    %v2916 = vpack.c.b16 %v2792, %v2790
    %v2917 = vpack.c.b16 %v2795, %v2793
    %v2918 = vpack.c.b16 %v2796, %v2794
    %v2919 = vpack.c.b16 %v2799, %v2797
    %v2920 = vpack.c.b16 %v2800, %v2798
    %v2921 = vpack.c.b16 %v2803, %v2801
    %v2922 = vpack.c.b16 %v2804, %v2802
    %v2923 = vpack.c.b16 %v2807, %v2805
    %v2924 = vpack.c.b16 %v2808, %v2806
    %v2925 = vpack.c.b16 %v2811, %v2809
    %v2926 = vpack.c.b16 %v2812, %v2810
    %v2927 = vpack.c.b16 %v2815, %v2813
    %v2928 = vpack.c.b16 %v2816, %v2814
    %v2929 = vpack.c.b16 %v2819, %v2817
    %v2930 = vpack.c.b16 %v2820, %v2818
    %v2931 = vpack.c.b16 %v2823, %v2821
    %v2932 = vpack.c.b16 %v2824, %v2822
    %v2933 = vpack.c.b16 %v2827, %v2825
    %v2934 = vpack.c.b16 %v2828, %v2826
    %v2935 = vpack.c.b16 %v2831, %v2829
    %v2936 = vpack.c.b16 %v2832, %v2830
    %v2937 = vpack.c.b16 %v2835, %v2833
    %v2938 = vpack.c.b16 %v2836, %v2834
    %v2939 = vpack.c.b16 %v2839, %v2837
    %v2940 = vpack.c.b16 %v2840, %v2838
    %v2941 = vpack.c.b16 %v2843, %v2841
    %v2942 = vpack.c.b16 %v2844, %v2842
    %v2943 = vpack.c.b16 %v2847, %v2845
    %v2944 = vpack.c.b16 %v2848, %v2846
    %3041 = vmatprep.subr.bf16.mxu0 %v2864
    %3042 = vmatpush1.bf16.msra.mxu0 %v2863
    %3043 = vmatprep.subr.bf16.mxu0 %v2862
    %3044 = vmatpush1.bf16.msra.mxu0 %v2861
    %3045 = vmatprep.subr.bf16.mxu0 %v2860
    %3046 = vmatpush1.bf16.msra.mxu0 %v2859
    %3047 = vmatprep.subr.bf16.mxu0 %v2858
    %3048 = vmatpush1.bf16.msra.mxu0 %v2857
    %3049 = vmatprep.subr.bf16.mxu0 %v2856
    %3050 = vmatpush1.bf16.msra.mxu0 %v2855
    %3051 = vmatprep.subr.bf16.mxu0 %v2854
    %3052 = vmatpush1.bf16.msra.mxu0 %v2853
    %3053 = vmatprep.subr.bf16.mxu0 %v2852
    %3054 = vmatpush1.bf16.msra.mxu0 %v2851
    %3055 = vmatprep.subr.bf16.mxu0 %v2850
    %3056 = vmatpush1.bf16.msra.mxu0 %v2849
    %3057 = vmatprep.subr.bf16.mxu0 %v2880
    %3058 = vmatpush2.bf16.msra.mxu0 %v2879
    %3059 = vmatprep.subr.bf16.mxu0 %v2878
    %3060 = vmatpush2.bf16.msra.mxu0 %v2877
    %3061 = vmatprep.subr.bf16.mxu0 %v2876
    %3062 = vmatpush2.bf16.msra.mxu0 %v2875
    %3063 = vmatprep.subr.bf16.mxu0 %v2874
    %3064 = vmatpush2.bf16.msra.mxu0 %v2873
    %3065 = vmatprep.subr.bf16.mxu0 %v2872
    %3066 = vmatpush2.bf16.msra.mxu0 %v2871
    %3067 = vmatprep.subr.bf16.mxu0 %v2870
    %3068 = vmatpush2.bf16.msra.mxu0 %v2869
    %3069 = vmatprep.subr.bf16.mxu0 %v2868
    %3070 = vmatpush2.bf16.msra.mxu0 %v2867
    %3071 = vmatprep.subr.bf16.mxu0 %v2866
    %3072 = vmatpush2.bf16.msra.mxu0 %v2865
    %3073 = vmatprep.mubr.bf16.mxu0 %v2444
    %3074 = vmatmul.mubr.bf16.gmra.mxu0 %v2443
    %v3075 = vpop.f32.mrf.mxu0
    %v3076 = vadd.f32 %v2554, %v3075
    %v3077 = vpop.f32.mrf.mxu0
    %v3078 = vadd.f32 %v2558, %v3077
    %v3079 = vpop.f32.mrf.mxu0
    %v3080 = vpop.f32.mrf.mxu0
    %3081 = vdwg.mxu0
    %3082 = vmatprep.subr.bf16.mxu0 %v2896
    %3083 = vmatpush1.bf16.msra.mxu0 %v2895
    %3084 = vmatprep.subr.bf16.mxu0 %v2894
    %3085 = vmatpush1.bf16.msra.mxu0 %v2893
    %3086 = vmatprep.subr.bf16.mxu0 %v2892
    %3087 = vmatpush1.bf16.msra.mxu0 %v2891
    %3088 = vmatprep.subr.bf16.mxu0 %v2890
    %3089 = vmatpush1.bf16.msra.mxu0 %v2889
    %3090 = vmatprep.subr.bf16.mxu0 %v2888
    %3091 = vmatpush1.bf16.msra.mxu0 %v2887
    %3092 = vmatprep.subr.bf16.mxu0 %v2886
    %3093 = vmatpush1.bf16.msra.mxu0 %v2885
    %3094 = vmatprep.subr.bf16.mxu0 %v2884
    %3095 = vmatpush1.bf16.msra.mxu0 %v2883
    %3096 = vmatprep.subr.bf16.mxu0 %v2882
    %3097 = vmatpush1.bf16.msra.mxu0 %v2881
    %3098 = vmatprep.subr.bf16.mxu0 %v2912
    %3099 = vmatpush2.bf16.msra.mxu0 %v2911
    %3100 = vmatprep.subr.bf16.mxu0 %v2910
    %3101 = vmatpush2.bf16.msra.mxu0 %v2909
    %3102 = vmatprep.subr.bf16.mxu0 %v2908
    %3103 = vmatpush2.bf16.msra.mxu0 %v2907
    %3104 = vmatprep.subr.bf16.mxu0 %v2906
    %3105 = vmatpush2.bf16.msra.mxu0 %v2905
    %3106 = vmatprep.subr.bf16.mxu0 %v2904
    %3107 = vmatpush2.bf16.msra.mxu0 %v2903
    %3108 = vmatprep.subr.bf16.mxu0 %v2902
    %3109 = vmatpush2.bf16.msra.mxu0 %v2901
    %3110 = vmatprep.subr.bf16.mxu0 %v2900
    %3111 = vmatpush2.bf16.msra.mxu0 %v2899
    %3112 = vmatprep.subr.bf16.mxu0 %v2898
    %3113 = vmatpush2.bf16.msra.mxu0 %v2897
    %3114 = vmatprep.mubr.bf16.mxu0 %v2446
    %3115 = vmatmul.mubr.bf16.gmra.mxu0 %v2445
    %v3116 = vpop.f32.mrf.mxu0
    %v3117 = vadd.f32 %v3076, %v3116
    %v3118 = vpop.f32.mrf.mxu0
    %v3119 = vadd.f32 %v3078, %v3118
    %v3120 = vpop.f32.mrf.mxu0
    %v3121 = vpop.f32.mrf.mxu0
    %3122 = vdwg.mxu0
    %3123 = vmatprep.subr.bf16.mxu0 %v2928
    %3124 = vmatpush1.bf16.msra.mxu0 %v2927
    %3125 = vmatprep.subr.bf16.mxu0 %v2926
    %3126 = vmatpush1.bf16.msra.mxu0 %v2925
    %3127 = vmatprep.subr.bf16.mxu0 %v2924
    %3128 = vmatpush1.bf16.msra.mxu0 %v2923
    %3129 = vmatprep.subr.bf16.mxu0 %v2922
    %3130 = vmatpush1.bf16.msra.mxu0 %v2921
    %3131 = vmatprep.subr.bf16.mxu0 %v2920
    %3132 = vmatpush1.bf16.msra.mxu0 %v2919
    %3133 = vmatprep.subr.bf16.mxu0 %v2918
    %3134 = vmatpush1.bf16.msra.mxu0 %v2917
    %3135 = vmatprep.subr.bf16.mxu0 %v2916
    %3136 = vmatpush1.bf16.msra.mxu0 %v2915
    %3137 = vmatprep.subr.bf16.mxu0 %v2914
    %3138 = vmatpush1.bf16.msra.mxu0 %v2913
    %3139 = vmatprep.subr.bf16.mxu0 %v2944
    %3140 = vmatpush2.bf16.msra.mxu0 %v2943
    %3141 = vmatprep.subr.bf16.mxu0 %v2942
    %3142 = vmatpush2.bf16.msra.mxu0 %v2941
    %3143 = vmatprep.subr.bf16.mxu0 %v2940
    %3144 = vmatpush2.bf16.msra.mxu0 %v2939
    %3145 = vmatprep.subr.bf16.mxu0 %v2938
    %3146 = vmatpush2.bf16.msra.mxu0 %v2937
    %3147 = vmatprep.subr.bf16.mxu0 %v2936
    %3148 = vmatpush2.bf16.msra.mxu0 %v2935
    %3149 = vmatprep.subr.bf16.mxu0 %v2934
    %3150 = vmatpush2.bf16.msra.mxu0 %v2933
    %3151 = vmatprep.subr.bf16.mxu0 %v2932
    %3152 = vmatpush2.bf16.msra.mxu0 %v2931
    %3153 = vmatprep.subr.bf16.mxu0 %v2930
    %3154 = vmatpush2.bf16.msra.mxu0 %v2929
    %3155 = vmatprep.mubr.bf16.mxu0 %v2448
    %3156 = vmatmul.mubr.bf16.gmra.mxu0 %v2447
    %v3157 = vpop.f32.mrf.mxu0
    %v3158 = vadd.f32 %v3117, %v3157
    %v3159 = vpop.f32.mrf.mxu0
    %v3160 = vadd.f32 %v3119, %v3159
    %v3161 = vpop.f32.mrf.mxu0
    %v3162 = vpop.f32.mrf.mxu0
    %3163 = vdwg.mxu0
    %v3164 = vsel %vm2295, %v3158, 0.0
    %vm3165 = vcmask 517120
    %v3166 = vsel %vm3165, %v3160, 0.0
    %v3167 = vadd.f32 %v3164, %v3166
    %3168 = vadd.xlane.f32.xlu0 %v3167
    %v3169 = vpop.xlane.xlu0 %3168
    %v3170 = vrcp.pop 192.0
    %v3171 = vmul.f32 %v3169, %v3170
    %v3172 = vsub.f32 %v3158, %v3171
    %v3173 = vsub.f32 %v3160, %v3171
    %v3174 = vmul.f32 %v3172, %v3172
    %v3175 = vmul.f32 %v3173, %v3173
    %v3176 = vsel %vm2295, %v3174, 0.0
    %v3177 = vsel %vm3165, %v3175, 0.0
    %v3178 = vadd.f32 %v3176, %v3177
    %3179 = vadd.xlane.f32.xlu0 %v3178
    %v3180 = vpop.xlane.xlu0 %3179
    %v3181 = vmul.f32 %v3180, %v3170
    %v3182 = vadd.f32 %v3181, 1e-05
    %v3183 = vrsqrt.pop %v3182
    %v3184 = vmul.f32 %v3172, %v3183
    %v3185 = vmul.f32 %v3173, %v3183
    %v3187 = vlaneseq
    %v3188 = vshrl.u32 %v3187, 7
    %v3189 = vsub.s32 0, %v3188
    %v3190 = vrot.slane %v2451, %v3189
    %v3191 = vlaneseq
    %v3192 = vshrl.u32 %v3191, 7
    %v3193 = vsub.s32 1, %v3192
    %v3194 = vrot.slane %v2451, %v3193
    %v3197 = vmul.f32 %v3184, %v3190
    %v3198 = vmul.f32 %v3185, %v3194
    %v3200 = vlaneseq
    %v3201 = vshrl.u32 %v3200, 7
    %v3202 = vsub.s32 0, %v3201
    %v3203 = vrot.slane %v2453, %v3202
    %v3204 = vlaneseq
    %v3205 = vshrl.u32 %v3204, 7
    %v3206 = vsub.s32 1, %v3205
    %v3207 = vrot.slane %v2453, %v3206
    %v3210 = vadd.f32 %v3197, %v3203
    %v3211 = vadd.f32 %v3198, %v3207
    %v3212 = vmul.f32 %v3210, 0.5
    %v3213 = vmul.f32 %v3211, 0.5
    %v3214 = vtanh.pop %v3212
    %v3215 = vtanh.pop %v3213
    %v3216 = vmul.f32 %v3214, 0.5
    %v3217 = vmul.f32 %v3215, 0.5
    %v3218 = vadd.f32 %v3216, 0.5
    %v3219 = vadd.f32 %v3217, 0.5
    %v3220 = vpack.c.bf16 %v3218, %v3218
    %v3221 = vpack.c.bf16 %v3219, %v3219
    %s3222 = scalar_lea.vmem [#allocation8], 3
    %v3223 = vld [vmem:[%s3222] ss:$8 sm:$0x3]
    %s3224 = scalar_lea.vmem [#allocation8], 4
    %v3225 = vld [vmem:[%s3224] ss:$8 sm:$0x3]
    %s3226 = scalar_lea.vmem [#allocation8], 5
    %v3227 = vld [vmem:[%s3226] ss:$8 sm:$0x3]
    %v3228 = vld [vmem:[#allocation5] sm:$0xff]
    %v3229 = vld [vmem:[#allocation5 + $0x8] sm:$0xff]
    %v3230 = vld [vmem:[#allocation5 + $0x10] sm:$0xff]
    %v3231 = vld [vmem:[#allocation5 + $0x18] sm:$0xff]
    %v3232 = vld [vmem:[#allocation5 + $0x20] sm:$0xff]
    %v3233 = vld [vmem:[#allocation5 + $0x28] sm:$0xff]
    %v3234 = vld [vmem:[#allocation5 + $0x30] sm:$0xff]
    %v3235 = vld [vmem:[#allocation5 + $0x38] sm:$0xff]
    %v3236 = vld [vmem:[#allocation5 + $0x40] sm:$0xff]
    %v3237 = vld [vmem:[#allocation5 + $0x48] sm:$0xff]
    %v3238 = vld [vmem:[#allocation5 + $0x50] sm:$0xff]
    %v3239 = vld [vmem:[#allocation5 + $0x58] sm:$0xff]
    %v3240 = vld [vmem:[#allocation5 + $0x60] sm:$0xff]
    %v3241 = vld [vmem:[#allocation5 + $0x68] sm:$0xff]
    %v3242 = vld [vmem:[#allocation5 + $0x70] sm:$0xff]
    %v3243 = vld [vmem:[#allocation5 + $0x78] sm:$0xff]
    %v3244 = vld [vmem:[#allocation5 + $0x80] sm:$0xff]
    %v3245 = vld [vmem:[#allocation5 + $0x88] sm:$0xff]
    %v3246 = vld [vmem:[#allocation5 + $0x90] sm:$0xff]
    %v3247 = vld [vmem:[#allocation5 + $0x98] sm:$0xff]
    %v3248 = vld [vmem:[#allocation5 + $0xa0] sm:$0xff]
    %v3249 = vld [vmem:[#allocation5 + $0xa8] sm:$0xff]
    %v3250 = vld [vmem:[#allocation5 + $0xb0] sm:$0xff]
    %v3251 = vld [vmem:[#allocation5 + $0xb8] sm:$0xff]
    %v3253 = vlaneseq
    %v3254 = vshrl.u32 %v3253, 7
    %v3255 = vsub.s32 0, %v3254
    %v3256 = vrot.slane %v3223, %v3255
    %v3257 = vlaneseq
    %v3258 = vshrl.u32 %v3257, 7
    %v3259 = vsub.s32 1, %v3258
    %v3260 = vrot.slane %v3223, %v3259
    %v3287 = vunpack.c.l.b16 %v3228
    %v3288 = vunpack.c.h.b16 %v3228
    %v3289 = vunpack.c.l.b16 %v3229
    %v3290 = vunpack.c.h.b16 %v3229
    %v3291 = vunpack.c.l.b16 %v3230
    %v3292 = vunpack.c.h.b16 %v3230
    %v3293 = vunpack.c.l.b16 %v3231
    %v3294 = vunpack.c.h.b16 %v3231
    %v3295 = vunpack.c.l.b16 %v3232
    %v3296 = vunpack.c.h.b16 %v3232
    %v3297 = vunpack.c.l.b16 %v3233
    %v3298 = vunpack.c.h.b16 %v3233
    %v3299 = vunpack.c.l.b16 %v3234
    %v3300 = vunpack.c.h.b16 %v3234
    %v3301 = vunpack.c.l.b16 %v3235
    %v3302 = vunpack.c.h.b16 %v3235
    %v3303 = vunpack.c.l.b16 %v3236
    %v3304 = vunpack.c.h.b16 %v3236
    %v3305 = vunpack.c.l.b16 %v3237
    %v3306 = vunpack.c.h.b16 %v3237
    %v3307 = vunpack.c.l.b16 %v3238
    %v3308 = vunpack.c.h.b16 %v3238
    %v3309 = vunpack.c.l.b16 %v3239
    %v3310 = vunpack.c.h.b16 %v3239
    %v3311 = vunpack.c.l.b16 %v3240
    %v3312 = vunpack.c.h.b16 %v3240
    %v3313 = vunpack.c.l.b16 %v3241
    %v3314 = vunpack.c.h.b16 %v3241
    %v3315 = vunpack.c.l.b16 %v3242
    %v3316 = vunpack.c.h.b16 %v3242
    %v3317 = vunpack.c.l.b16 %v3243
    %v3318 = vunpack.c.h.b16 %v3243
    %v3319 = vunpack.c.l.b16 %v3244
    %v3320 = vunpack.c.h.b16 %v3244
    %v3321 = vunpack.c.l.b16 %v3245
    %v3322 = vunpack.c.h.b16 %v3245
    %v3323 = vunpack.c.l.b16 %v3246
    %v3324 = vunpack.c.h.b16 %v3246
    %v3325 = vunpack.c.l.b16 %v3247
    %v3326 = vunpack.c.h.b16 %v3247
    %v3327 = vunpack.c.l.b16 %v3248
    %v3328 = vunpack.c.h.b16 %v3248
    %v3329 = vunpack.c.l.b16 %v3249
    %v3330 = vunpack.c.h.b16 %v3249
    %v3331 = vunpack.c.l.b16 %v3250
    %v3332 = vunpack.c.h.b16 %v3250
    %v3333 = vunpack.c.l.b16 %v3251
    %v3334 = vunpack.c.h.b16 %v3251
    %v3335 = vpack.c.b16 %v3289, %v3287
    %v3336 = vpack.c.b16 %v3290, %v3288
    %v3337 = vpack.c.b16 %v3293, %v3291
    %v3338 = vpack.c.b16 %v3294, %v3292
    %v3339 = vpack.c.b16 %v3297, %v3295
    %v3340 = vpack.c.b16 %v3298, %v3296
    %v3341 = vpack.c.b16 %v3301, %v3299
    %v3342 = vpack.c.b16 %v3302, %v3300
    %v3343 = vpack.c.b16 %v3305, %v3303
    %v3344 = vpack.c.b16 %v3306, %v3304
    %v3345 = vpack.c.b16 %v3309, %v3307
    %v3346 = vpack.c.b16 %v3310, %v3308
    %v3347 = vpack.c.b16 %v3313, %v3311
    %v3348 = vpack.c.b16 %v3314, %v3312
    %v3349 = vpack.c.b16 %v3317, %v3315
    %v3350 = vpack.c.b16 %v3318, %v3316
    %v3351 = vpack.c.b16 %v3321, %v3319
    %v3352 = vpack.c.b16 %v3322, %v3320
    %v3353 = vpack.c.b16 %v3325, %v3323
    %v3354 = vpack.c.b16 %v3326, %v3324
    %v3355 = vpack.c.b16 %v3329, %v3327
    %v3356 = vpack.c.b16 %v3330, %v3328
    %v3357 = vpack.c.b16 %v3333, %v3331
    %v3358 = vpack.c.b16 %v3334, %v3332
    %vm3383 = vcmask 523264
    %v3385 = vsel %vm3383, %v3221, 0
    %3387 = vmatprep.subr.bf16.mxu0 %v3350
    %3388 = vmatpush1.bf16.msra.mxu0 %v3349
    %3389 = vmatprep.subr.bf16.mxu0 %v3348
    %3390 = vmatpush1.bf16.msra.mxu0 %v3347
    %3391 = vmatprep.subr.bf16.mxu0 %v3346
    %3392 = vmatpush1.bf16.msra.mxu0 %v3345
    %3393 = vmatprep.subr.bf16.mxu0 %v3344
    %3394 = vmatpush1.bf16.msra.mxu0 %v3343
    %3395 = vmatprep.subr.bf16.mxu0 %v3342
    %3396 = vmatpush1.bf16.msra.mxu0 %v3341
    %3397 = vmatprep.subr.bf16.mxu0 %v3340
    %3398 = vmatpush1.bf16.msra.mxu0 %v3339
    %3399 = vmatprep.subr.bf16.mxu0 %v3338
    %3400 = vmatpush1.bf16.msra.mxu0 %v3337
    %3401 = vmatprep.subr.bf16.mxu0 %v3336
    %3402 = vmatpush1.bf16.msra.mxu0 %v3335
    %3403 = vmatprep.subr.bf16.mxu0 0
    %3404 = vmatpush2.bf16.msra.mxu0 0
    %3405 = vmatprep.subr.bf16.mxu0 0
    %3406 = vmatpush2.bf16.msra.mxu0 0
    %3407 = vmatprep.subr.bf16.mxu0 0
    %3408 = vmatpush2.bf16.msra.mxu0 0
    %3409 = vmatprep.subr.bf16.mxu0 0
    %3410 = vmatpush2.bf16.msra.mxu0 0
    %3411 = vmatprep.subr.bf16.mxu0 %v3358
    %3412 = vmatpush2.bf16.msra.mxu0 %v3357
    %3413 = vmatprep.subr.bf16.mxu0 %v3356
    %3414 = vmatpush2.bf16.msra.mxu0 %v3355
    %3415 = vmatprep.subr.bf16.mxu0 %v3354
    %3416 = vmatpush2.bf16.msra.mxu0 %v3353
    %3417 = vmatprep.subr.bf16.mxu0 %v3352
    %3418 = vmatpush2.bf16.msra.mxu0 %v3351
    %3419 = vmatprep.mubr.bf16.mxu0 %v3385
    %3420 = vmatmul.mubr.bf16.gmra.mxu0 %v3220
    %v3421 = vpop.f32.mrf.mxu0
    %v3422 = vadd.f32 %v3256, %v3421
    %v3423 = vpop.f32.mrf.mxu0
    %v3424 = vadd.f32 %v3260, %v3423
    %v3425 = vpop.f32.mrf.mxu0
    %v3426 = vpop.f32.mrf.mxu0
    %3427 = vdwg.mxu0
    %v3428 = vsel %vm2295, %v3422, 0.0
    %v3429 = vsel %vm3165, %v3424, 0.0
    %v3430 = vadd.f32 %v3428, %v3429
    %3431 = vadd.xlane.f32.xlu0 %v3430
    %v3432 = vpop.xlane.xlu0 %3431
    %v3433 = vmul.f32 %v3432, %v3170
    %v3434 = vsub.f32 %v3422, %v3433
    %v3435 = vsub.f32 %v3424, %v3433
    %v3436 = vmul.f32 %v3434, %v3434
    %v3437 = vmul.f32 %v3435, %v3435
    %v3438 = vsel %vm2295, %v3436, 0.0
    %v3439 = vsel %vm3165, %v3437, 0.0
    %v3440 = vadd.f32 %v3438, %v3439
    %3441 = vadd.xlane.f32.xlu0 %v3440
    %v3442 = vpop.xlane.xlu0 %3441
    %v3443 = vmul.f32 %v3442, %v3170
    %v3444 = vadd.f32 %v3443, 1e-05
    %v3445 = vrsqrt.pop %v3444
    %v3446 = vmul.f32 %v3434, %v3445
    %v3447 = vmul.f32 %v3435, %v3445
    %v3449 = vlaneseq
    %v3450 = vshrl.u32 %v3449, 7
    %v3451 = vsub.s32 0, %v3450
    %v3452 = vrot.slane %v3225, %v3451
    %v3453 = vlaneseq
    %v3454 = vshrl.u32 %v3453, 7
    %v3455 = vsub.s32 1, %v3454
    %v3456 = vrot.slane %v3225, %v3455
    %v3459 = vmul.f32 %v3446, %v3452
    %v3460 = vmul.f32 %v3447, %v3456
    %v3462 = vlaneseq
    %v3463 = vshrl.u32 %v3462, 7
    %v3464 = vsub.s32 0, %v3463
    %v3465 = vrot.slane %v3227, %v3464
    %v3466 = vlaneseq
    %v3467 = vshrl.u32 %v3466, 7
    %v3468 = vsub.s32 1, %v3467
    %v3469 = vrot.slane %v3227, %v3468
    %v3472 = vadd.f32 %v3459, %v3465
    %v3473 = vadd.f32 %v3460, %v3469
    %v3474 = vmul.f32 %v3472, 0.5
    %v3475 = vmul.f32 %v3473, 0.5
    %v3476 = vtanh.pop %v3474
    %v3477 = vtanh.pop %v3475
    %v3478 = vmul.f32 %v3476, 0.5
    %v3479 = vmul.f32 %v3477, 0.5
    %v3480 = vadd.f32 %v3478, 0.5
    %v3481 = vadd.f32 %v3479, 0.5
    %v3482 = vpack.c.bf16 %v3480, %v3480
    %v3483 = vpack.c.bf16 %v3481, %v3481
    %v3484 = vld [vmem:[#allocation10] sm:$0xf]
    %v3485 = vld [vmem:[#allocation10 + $0x4] sm:$0xf]
    %v3486 = vld [vmem:[#allocation10 + $0x8] sm:$0xf]
    %v3487 = vld [vmem:[#allocation10 + $0xc] sm:$0xf]
    %v3488 = vld [vmem:[#allocation10 + $0x10] sm:$0xf]
    %v3489 = vld [vmem:[#allocation10 + $0x14] sm:$0xf]
    %v3490 = vld [vmem:[#allocation10 + $0x18] sm:$0xf]
    %v3491 = vld [vmem:[#allocation10 + $0x1c] sm:$0xf]
    %v3492 = vld [vmem:[#allocation10 + $0x20] sm:$0xf]
    %v3493 = vld [vmem:[#allocation10 + $0x24] sm:$0xf]
    %v3494 = vld [vmem:[#allocation10 + $0x28] sm:$0xf]
    %v3495 = vld [vmem:[#allocation10 + $0x2c] sm:$0xf]
    %v3496 = vld [vmem:[#allocation10 + $0x30] sm:$0xf]
    %v3497 = vld [vmem:[#allocation10 + $0x34] sm:$0xf]
    %v3498 = vld [vmem:[#allocation10 + $0x38] sm:$0xf]
    %v3499 = vld [vmem:[#allocation10 + $0x3c] sm:$0xf]
    %v3500 = vld [vmem:[#allocation10 + $0x40] sm:$0xf]
    %v3501 = vld [vmem:[#allocation10 + $0x44] sm:$0xf]
    %v3502 = vld [vmem:[#allocation10 + $0x48] sm:$0xf]
    %v3503 = vld [vmem:[#allocation10 + $0x4c] sm:$0xf]
    %v3504 = vld [vmem:[#allocation10 + $0x50] sm:$0xf]
    %v3505 = vld [vmem:[#allocation10 + $0x54] sm:$0xf]
    %v3506 = vld [vmem:[#allocation10 + $0x58] sm:$0xf]
    %v3507 = vld [vmem:[#allocation10 + $0x5c] sm:$0xf]
    %v3508 = vld [vmem:[#allocation11] sm:$0x1]
    %v3510 = vlaneseq
    %v3511 = vshrl.u32 %v3510, 7
    %v3512 = vsub.s32 0, %v3511
    %v3513 = vrot.slane %v3508, %v3512
    %v3539 = vunpack.c.l.b16 %v3484
    %v3540 = vunpack.c.l.b16 %v3485
    %v3541 = vunpack.c.l.b16 %v3486
    %v3542 = vunpack.c.l.b16 %v3487
    %v3543 = vunpack.c.l.b16 %v3488
    %v3544 = vunpack.c.l.b16 %v3489
    %v3545 = vunpack.c.l.b16 %v3490
    %v3546 = vunpack.c.l.b16 %v3491
    %v3547 = vunpack.c.l.b16 %v3492
    %v3548 = vunpack.c.l.b16 %v3493
    %v3549 = vunpack.c.l.b16 %v3494
    %v3550 = vunpack.c.l.b16 %v3495
    %v3551 = vunpack.c.l.b16 %v3496
    %v3552 = vunpack.c.l.b16 %v3497
    %v3553 = vunpack.c.l.b16 %v3498
    %v3554 = vunpack.c.l.b16 %v3499
    %v3555 = vunpack.c.l.b16 %v3500
    %v3556 = vunpack.c.l.b16 %v3501
    %v3557 = vunpack.c.l.b16 %v3502
    %v3558 = vunpack.c.l.b16 %v3503
    %v3559 = vunpack.c.l.b16 %v3504
    %v3560 = vunpack.c.l.b16 %v3505
    %v3561 = vunpack.c.l.b16 %v3506
    %v3562 = vunpack.c.l.b16 %v3507
    %v3563 = vpack.c.b16 %v3540, %v3539
    %v3564 = vpack.c.b16 %v3542, %v3541
    %v3565 = vpack.c.b16 %v3544, %v3543
    %v3566 = vpack.c.b16 %v3546, %v3545
    %v3567 = vpack.c.b16 %v3548, %v3547
    %v3568 = vpack.c.b16 %v3550, %v3549
    %v3569 = vpack.c.b16 %v3552, %v3551
    %v3570 = vpack.c.b16 %v3554, %v3553
    %v3571 = vpack.c.b16 %v3556, %v3555
    %v3572 = vpack.c.b16 %v3558, %v3557
    %v3573 = vpack.c.b16 %v3560, %v3559
    %v3574 = vpack.c.b16 %v3562, %v3561
    %v3588 = vsel %vm3383, %v3483, 0
    %3590 = vmatprep.subr.bf16.mxu0 0
    %3591 = vmatpush1.bf16.msra.mxu0 %v3570
    %3592 = vmatprep.subr.bf16.mxu0 0
    %3593 = vmatpush1.bf16.msra.mxu0 %v3569
    %3594 = vmatprep.subr.bf16.mxu0 0
    %3595 = vmatpush1.bf16.msra.mxu0 %v3568
    %3596 = vmatprep.subr.bf16.mxu0 0
    %3597 = vmatpush1.bf16.msra.mxu0 %v3567
    %3598 = vmatprep.subr.bf16.mxu0 0
    %3599 = vmatpush1.bf16.msra.mxu0 %v3566
    %3600 = vmatprep.subr.bf16.mxu0 0
    %3601 = vmatpush1.bf16.msra.mxu0 %v3565
    %3602 = vmatprep.subr.bf16.mxu0 0
    %3603 = vmatpush1.bf16.msra.mxu0 %v3564
    %3604 = vmatprep.subr.bf16.mxu0 0
    %3605 = vmatpush1.bf16.msra.mxu0 %v3563
    %3606 = vmatprep.subr.bf16.mxu0 0
    %3607 = vmatpush2.bf16.msra.mxu0 0
    %3608 = vmatprep.subr.bf16.mxu0 0
    %3609 = vmatpush2.bf16.msra.mxu0 0
    %3610 = vmatprep.subr.bf16.mxu0 0
    %3611 = vmatpush2.bf16.msra.mxu0 0
    %3612 = vmatprep.subr.bf16.mxu0 0
    %3613 = vmatpush2.bf16.msra.mxu0 0
    %3614 = vmatprep.subr.bf16.mxu0 0
    %3615 = vmatpush2.bf16.msra.mxu0 %v3574
    %3616 = vmatprep.subr.bf16.mxu0 0
    %3617 = vmatpush2.bf16.msra.mxu0 %v3573
    %3618 = vmatprep.subr.bf16.mxu0 0
    %3619 = vmatpush2.bf16.msra.mxu0 %v3572
    %3620 = vmatprep.subr.bf16.mxu0 0
    %3621 = vmatpush2.bf16.msra.mxu0 %v3571
    %3622 = vmatprep.mubr.bf16.mxu0 %v3588
    %3623 = vmatmul.mubr.bf16.gmra.mxu0 %v3482
    %v3624 = vpop.f32.mrf.mxu0
    %v3625 = vadd.f32 %v3513, %v3624
    %v3626 = vpop.f32.mrf.mxu0
    %v3627 = vpop.f32.mrf.mxu0
    %v3628 = vpop.f32.mrf.mxu0
    %3629 = vdwg.mxu0
    %3630 = vst [vmem:[#allocation13] sm:$0x3] %v3625
    // Predicated region
    $region58: #{lenet_mnist_forward.1} parent=1 // pred_check
      _
    $region59: #{lenet_mnist_forward.1} parent=1 // pred_check_branch
      %3632 = sbr.rel (0) target = $region61
    $region60: #{lenet_mnist_forward.1} parent=1 // pred_region
      %s3634 = ssub.s32 32, 32
      %3635 = vsyncadd [#allocation4], %s3634
      %s3637 = sshll.u32 [#allocation13], 4
      %s3638 = int_to_ptr.vmem [resolvable:$true] %s3637
      %3640 = dma.vmem_to_hbm [thread:$0]  %s3638, 32, %s8, [#allocation4]
    $region61: #{lenet_mnist_forward.1} parent=1 // pred_fallthru
      _
    // Predicated region
    $region62: #{lenet_mnist_forward.1} parent=1 // pred_check
      _
    $region63: #{lenet_mnist_forward.1} parent=1 // pred_check_branch
      %3642 = sbr.rel (0) target = $region65
    $region64: #{lenet_mnist_forward.1} parent=1 // pred_region
      %3643 = dma.done [#allocation4], 32
    $region65: #{lenet_mnist_forward.1} parent=1 // pred_fallthru
      _
    %3644 = vsyncpa [#allocation3], 1
    %3645 = vsyncpa [#allocation6], 1
    %3646 = vsyncpa [#allocation9], 1
    %3647 = vsyncpa [#allocation12], 1
    %3648 = vsyncpa [#allocation4], 1

</llo_original>
